<compile_context>
chip_gen: v7x
topology: tpu7x:2x2x1
jax: 0.10.0
libtpu: 0.0.40
codegen_flags: <defaults>
</compile_context>

<pallas_src>
import math

import jax
import jax.numpy as jnp
from jax.experimental import pallas as pl
from jax.experimental.pallas import tpu as pltpu

# ----------------------------- configuration --------------------------------
N_NODES = 8          # nodes (both src and dst of the single node type)
IN_DIM = 32
OUT_DIM = 32
N_HEADS = 4
D_K = OUT_DIM // N_HEADS
NUM_TYPES = 2
NUM_RELATIONS = 6
ETYPE_ID = 5         # relation id of the (only) edge type -> s_img is defined
NODE_TYPE = 0
SQRT_DK = math.sqrt(D_K)
N_MODAL = 3          # text / img / transh(s)

_VMEM = pl.BlockSpec(memory_space=pltpu.MemorySpace.VMEM)
_SMEM = pl.BlockSpec(memory_space=pltpu.MemorySpace.SMEM)


# ------------------------------ in-kernel helpers ----------------------------
def _softmax_last(x):
    m = jnp.max(x, axis=-1, keepdims=True)
    e = jnp.exp(x - m)
    return e * pl.reciprocal(jnp.sum(e, axis=-1, keepdims=True), approx=True)


def _mm(a, b):
    # bf16 MXU operands, f32 accumulation; elementwise math stays f32.
    return jnp.dot(a.astype(jnp.bfloat16), b.astype(jnp.bfloat16),
                   preferred_element_type=jnp.float32)


# ------------------------------ fused HGT kernel -----------------------------
def _hgt_fused_kernel(alpha_ref,                     # SMEM (1,)  sigmoid(skip)
                      x_ref,                         # [N, 3*IN]  text|img|s on lanes
                      wk_ref, bk_ref,                # [3*IN, 3*OUT], [1, 3*OUT]
                      wq_ref, bq_ref,
                      wv_ref, bv_ref,
                      ratt_ref, rmsg_ref, wm_ref,    # [3*OUT, 3*OUT] block-diag
                      wa_ref, ba_ref,                # output projection
                      out_ref,                       # [N, 3*OUT]
                      simg_ref):                     # [1, 1]
    x = x_ref[...]
    n = x.shape[0]
    B = N_MODAL * N_HEADS                            # 12 (modality, head) pairs

    # ---- k/q/v projections, all modalities at once (shared per-type linear) --
    k = _mm(x, wk_ref[...]) + bk_ref[...]            # [N, 96]
    q = _mm(x, wq_ref[...]) + bq_ref[...]
    v = _mm(x, wv_ref[...]) + bv_ref[...]

    # ---- relation / cross-modal transforms (block-diag, shared over src) -----
    ek = _mm(k, ratt_ref[...])                       # pri*10/sqrt(dk) folded in
    ev = _mm(v, rmsg_ref[...])
    ck = _mm(k, wm_ref[...])                         # modality-specific w_m

    def to_bdk(t):                                   # [N, 96] -> [B, N, dk]
        return jnp.transpose(t.reshape(n, B, D_K), (1, 0, 2))

    qb, ekb, ckb, evb = to_bdk(q), to_bdk(ek), to_bdk(ck), to_bdk(ev)

    # ---- per-(modality, head) scores over the dense dst x src edge grid ------
    att = jnp.einsum('bdk,bsk->bds', qb, ekb,
                     preferred_element_type=jnp.float32)
    cms = jnp.einsum('bdk,bsk->bds', qb, ckb,
                     preferred_element_type=jnp.float32)
    att = att.reshape(N_MODAL, N_HEADS, n, n)        # [3, H, D, S]
    cms = cms.reshape(N_MODAL, N_HEADS, n, n)

    # ---- CrossModalLayer: softmax over the 3 modalities ----------------------
    cmax = jnp.max(cms, axis=0)
    ce = jnp.exp(cms - cmax)
    lam = ce * pl.reciprocal(jnp.sum(ce, axis=0), approx=True)   # [3, H, D, S]

    # ---- reduce_func: per-destination softmaxes over the neighbour axis ------
    a_t, a_i, a_s = att[0], att[1], att[2]
    align = -(jnp.abs(a_t - a_i) + jnp.abs(a_t - a_s)
              + jnp.abs(a_i - a_s)) * (1.0 / 3.0)
    beta2 = _softmax_last(align)                                 # [H, D, S]
    sa = _softmax_last(att)                                      # [3, H, D, S]
    beta1 = jnp.sum(sa * lam, axis=0)                            # [H, D, S]
    beta = _softmax_last(beta1 * beta2)                          # [H, D, S]

    # ---- s_img = mean(lambda_img) + mean(lambda_s) over all edges & heads ----
    lam_is = lam[1] + lam[2]                                     # [H, D, S]
    r = jnp.sum(lam_is, axis=0)                                  # [D, S]
    r = jnp.sum(r, axis=1, keepdims=True)                        # [D, 1]
    r = jnp.sum(r, axis=0, keepdims=True)                        # [1, 1]
    simg_ref[...] = r * (1.0 / float(n * n * N_HEADS))

    # ---- aggregation: beta is shared across modalities -----------------------
    beta_b = jnp.concatenate([beta, beta, beta], axis=0)         # [B, D, S]
    hb = jnp.einsum('bds,bsk->bdk', beta_b, evb,
                    preferred_element_type=jnp.float32)          # [B, D, dk]
    h = jnp.transpose(hb, (1, 0, 2)).reshape(n, N_MODAL * OUT_DIM)

    # ---- output projection + gated skip connection ---------------------------
    a = alpha_ref[0]
    trans = _mm(h, wa_ref[...]) + ba_ref[...]
    out_ref[...] = trans * a + x * (1.0 - a)
    # TODO(synk): nn.Dropout(0.2) treated as eval-mode identity; use_norm=False.


# --------------------------- wrapper-side weight prep -------------------------
def _head_block_diag(w):
    # w: [H, dk, dk] -> [H*dk, H*dk] with head h's block on the diagonal.
    eye = jnp.eye(N_HEADS, dtype=w.dtype)
    return jnp.einsum('hg,hij->higj', eye, w).reshape(N_HEADS * D_K, N_HEADS * D_K)


def _modal_block_diag(blocks):
    # blocks: list of 3 [r, c] -> [3r, 3c] block diagonal.
    r, c = blocks[0].shape
    z = jnp.zeros((r, c), blocks[0].dtype)
    rows = [jnp.concatenate([blocks[m] if g == m else z for g in range(N_MODAL)],
                            axis=1) for m in range(N_MODAL)]
    return jnp.concatenate(rows, axis=0)


# ------------------------------- full forward --------------------------------
def hgt_layer_forward(params, x_text, x_img, x_s):
    n = x_text.shape[0]
    # modalities stacked on the lane axis: [N, 3*IN]
    x_lane = jnp.concatenate([x_text, x_img, x_s], axis=1)

    # per-node-type linears replicated per modality (block diagonal)
    wk3 = _modal_block_diag([params["k_w"]] * 3)
    wq3 = _modal_block_diag([params["q_w"]] * 3)
    wv3 = _modal_block_diag([params["v_w"]] * 3)
    wa3 = _modal_block_diag([params["a_w"]] * 3)
    bk3 = jnp.tile(params["k_b"], (1, 3))
    bq3 = jnp.tile(params["q_b"], (1, 3))
    bv3 = jnp.tile(params["v_b"], (1, 3))
    ba3 = jnp.tile(params["a_b"], (1, 3))

    # relation weights for the (single) edge type; fold pri * 10 / sqrt(dk)
    # (linear in the attention scores) into relation_att.
    pri = params["relation_pri"][ETYPE_ID]                        # (H,)
    scale = (pri * (10.0 / SQRT_DK)).reshape(N_HEADS, 1, 1)
    ratt_bd = _head_block_diag(params["relation_att"][ETYPE_ID] * scale)
    rmsg_bd = _head_block_diag(params["relation_msg"][ETYPE_ID])
    ratt3 = _modal_block_diag([ratt_bd] * 3)
    rmsg3 = _modal_block_diag([rmsg_bd] * 3)
    wm3 = _modal_block_diag([_head_block_diag(params["w_modal_0"][ETYPE_ID]),
                             _head_block_diag(params["w_modal_1"][ETYPE_ID]),
                             _head_block_diag(params["w_modal_2"][ETYPE_ID])])

    alpha = jax.nn.sigmoid(params["skip"][NODE_TYPE]).reshape(1).astype(jnp.float32)

    io_alias = {1: 0} if IN_DIM == OUT_DIM else {}
    out_all, s_arr = pl.pallas_call(
        _hgt_fused_kernel,
        out_shape=(jax.ShapeDtypeStruct((n, N_MODAL * OUT_DIM), jnp.float32),
                   jax.ShapeDtypeStruct((1, 1), jnp.float32)),
        in_specs=[_SMEM] + [_VMEM] * 12,
        out_specs=(_VMEM, _VMEM),
        input_output_aliases=io_alias,
        cost_estimate=pl.CostEstimate(flops=1_200_000,
                                      transcendentals=3_000,
                                      bytes_accessed=280_000),
    )(alpha, x_lane, wk3, bk3, wq3, bq3, wv3, bv3, ratt3, rmsg3, wm3, wa3, ba3)
    # TODO(synk): cross_reducer='mean' over multiple edge types collapses to
    # identity here because a single edge type feeds each node type.

    out_t = out_all[:, :OUT_DIM]
    out_i = out_all[:, OUT_DIM:2 * OUT_DIM]
    out_s = out_all[:, 2 * OUT_DIM:]
    return out_t, out_i, out_s, s_arr[0, 0]


# ------------------------------ parameter init -------------------------------
def init_params(key):
    ks = jax.random.split(key, 13)

    def uniform(k, shape, bound):
        return jax.random.uniform(k, shape, jnp.float32, -bound, bound)

    def xavier(k, shape):
        bound = math.sqrt(6.0 / (shape[-2] + shape[-1]))
        return jax.random.uniform(k, shape, jnp.float32, -bound, bound)

    lin_in = 1.0 / math.sqrt(IN_DIM)
    lin_out = 1.0 / math.sqrt(OUT_DIM)
    return {
        # per-node-type linears (only node type 0 is exercised)
        "k_w": uniform(ks[0], (IN_DIM, OUT_DIM), lin_in),
        "k_b": uniform(ks[1], (1, OUT_DIM), lin_in),
        "q_w": uniform(ks[2], (IN_DIM, OUT_DIM), lin_in),
        "q_b": uniform(ks[3], (1, OUT_DIM), lin_in),
        "v_w": uniform(ks[4], (IN_DIM, OUT_DIM), lin_in),
        "v_b": uniform(ks[5], (1, OUT_DIM), lin_in),
        "a_w": uniform(ks[6], (OUT_DIM, OUT_DIM), lin_out),
        "a_b": uniform(ks[7], (1, OUT_DIM), lin_out),
        "relation_pri": jnp.ones((NUM_RELATIONS, N_HEADS), jnp.float32),
        "relation_att": xavier(ks[8], (NUM_RELATIONS, N_HEADS, D_K, D_K)),
        "relation_msg": xavier(ks[9], (NUM_RELATIONS, N_HEADS, D_K, D_K)),
        "skip": jnp.ones((NUM_TYPES,), jnp.float32),
        # CrossModalLayer.w_m['modal_{0,1,2}'] : randn(R, H, dk, dk)
        "w_modal_0": jax.random.normal(ks[10], (NUM_RELATIONS, N_HEADS, D_K, D_K), jnp.float32),
        "w_modal_1": jax.random.normal(ks[11], (NUM_RELATIONS, N_HEADS, D_K, D_K), jnp.float32),
        "w_modal_2": jax.random.normal(ks[12], (NUM_RELATIONS, N_HEADS, D_K, D_K), jnp.float32),
    }


# ------------------------------------ main -----------------------------------
if __name__ == "__main__":
    key = jax.random.PRNGKey(0)
    kp, kt, ki, ks_ = jax.random.split(key, 4)
    params = init_params(kp)

    x_text = jax.random.normal(kt, (N_NODES, IN_DIM), jnp.float32)
    x_img = jax.random.normal(ki, (N_NODES, IN_DIM), jnp.float32)
    x_s = jax.random.normal(ks_, (N_NODES, IN_DIM), jnp.float32)

    fwd = jax.jit(hgt_layer_forward)
    out_t, out_i, out_s, s_img = jax.block_until_ready(
        fwd(params, x_text, x_img, x_s)
    )

    ok = (
        bool(jnp.all(jnp.isfinite(out_t)))
        and bool(jnp.all(jnp.isfinite(out_i)))
        and bool(jnp.all(jnp.isfinite(out_s)))
        and bool(jnp.isfinite(s_img))
        and out_t.shape == (N_NODES, OUT_DIM)
        and out_i.shape == (N_NODES, OUT_DIM)
        and out_s.shape == (N_NODES, OUT_DIM)
    )
    if ok:
        print("KERNEL_OK")
    else:
        raise SystemExit("kernel produced non-finite values")
</pallas_src>

<mosaic_0001>
module attributes {stable_mosaic.version = 11 : i64} {
  func.func @_hgt_fused_kernel(%arg0: memref<1xf32, #tpu.memory_space<smem>>, %arg1: memref<8x96xf32, #tpu.memory_space<vmem>>, %arg2: memref<96x96xf32, #tpu.memory_space<vmem>>, %arg3: memref<1x96xf32, #tpu.memory_space<vmem>>, %arg4: memref<96x96xf32, #tpu.memory_space<vmem>>, %arg5: memref<1x96xf32, #tpu.memory_space<vmem>>, %arg6: memref<96x96xf32, #tpu.memory_space<vmem>>, %arg7: memref<1x96xf32, #tpu.memory_space<vmem>>, %arg8: memref<96x96xf32, #tpu.memory_space<vmem>>, %arg9: memref<96x96xf32, #tpu.memory_space<vmem>>, %arg10: memref<96x96xf32, #tpu.memory_space<vmem>>, %arg11: memref<96x96xf32, #tpu.memory_space<vmem>>, %arg12: memref<1x96xf32, #tpu.memory_space<vmem>>, %arg13: memref<8x96xf32, #tpu.memory_space<vmem>>, %arg14: memref<1x1xf32, #tpu.memory_space<vmem>>) attributes {dimension_semantics = [], scalar_prefetch = 0 : i64, scratch_operands = 0 : i64, tpu.core_type = #tpu.core_type<tc>} {
    %c0 = arith.constant 0 : index
    %c0_0 = arith.constant 0 : index
    %0 = vector.load %arg1[%c0, %c0_0] : memref<8x96xf32, #tpu.memory_space<vmem>>, vector<8x96xf32>
    %c0_1 = arith.constant 0 : index
    %c0_2 = arith.constant 0 : index
    %1 = vector.load %arg2[%c0_1, %c0_2] : memref<96x96xf32, #tpu.memory_space<vmem>>, vector<96x96xf32>
    %2 = arith.truncf %0 : vector<8x96xf32> to vector<8x96xbf16>
    %3 = arith.truncf %1 : vector<96x96xf32> to vector<96x96xbf16>
    %cst = arith.constant dense<0.000000e+00> : vector<8x96xf32>
    %4 = tpu.matmul %2, %3, %cst {dimension_numbers = #tpu.dot_dimension_numbers<[1], [0], [0], [1], [0, 0, 1, 1], [], []>} : vector<8x96xbf16>, vector<96x96xbf16>, vector<8x96xf32> -> vector<8x96xf32>
    %c0_3 = arith.constant 0 : index
    %c0_4 = arith.constant 0 : index
    %5 = vector.load %arg3[%c0_3, %c0_4] : memref<1x96xf32, #tpu.memory_space<vmem>>, vector<1x96xf32>
    %6 = vector.broadcast %5 : vector<1x96xf32> to vector<8x96xf32>
    %7 = arith.addf %4, %6 : vector<8x96xf32>
    %c0_5 = arith.constant 0 : index
    %c0_6 = arith.constant 0 : index
    %8 = vector.load %arg4[%c0_5, %c0_6] : memref<96x96xf32, #tpu.memory_space<vmem>>, vector<96x96xf32>
    %9 = arith.truncf %0 : vector<8x96xf32> to vector<8x96xbf16>
    %10 = arith.truncf %8 : vector<96x96xf32> to vector<96x96xbf16>
    %cst_7 = arith.constant dense<0.000000e+00> : vector<8x96xf32>
    %11 = tpu.matmul %9, %10, %cst_7 {dimension_numbers = #tpu.dot_dimension_numbers<[1], [0], [0], [1], [0, 0, 1, 1], [], []>} : vector<8x96xbf16>, vector<96x96xbf16>, vector<8x96xf32> -> vector<8x96xf32>
    %c0_8 = arith.constant 0 : index
    %c0_9 = arith.constant 0 : index
    %12 = vector.load %arg5[%c0_8, %c0_9] : memref<1x96xf32, #tpu.memory_space<vmem>>, vector<1x96xf32>
    %13 = vector.broadcast %12 : vector<1x96xf32> to vector<8x96xf32>
    %14 = arith.addf %11, %13 : vector<8x96xf32>
    %c0_10 = arith.constant 0 : index
    %c0_11 = arith.constant 0 : index
    %15 = vector.load %arg6[%c0_10, %c0_11] : memref<96x96xf32, #tpu.memory_space<vmem>>, vector<96x96xf32>
    %16 = arith.truncf %0 : vector<8x96xf32> to vector<8x96xbf16>
    %17 = arith.truncf %15 : vector<96x96xf32> to vector<96x96xbf16>
    %cst_12 = arith.constant dense<0.000000e+00> : vector<8x96xf32>
    %18 = tpu.matmul %16, %17, %cst_12 {dimension_numbers = #tpu.dot_dimension_numbers<[1], [0], [0], [1], [0, 0, 1, 1], [], []>} : vector<8x96xbf16>, vector<96x96xbf16>, vector<8x96xf32> -> vector<8x96xf32>
    %c0_13 = arith.constant 0 : index
    %c0_14 = arith.constant 0 : index
    %19 = vector.load %arg7[%c0_13, %c0_14] : memref<1x96xf32, #tpu.memory_space<vmem>>, vector<1x96xf32>
    %20 = vector.broadcast %19 : vector<1x96xf32> to vector<8x96xf32>
    %21 = arith.addf %18, %20 : vector<8x96xf32>
    %c0_15 = arith.constant 0 : index
    %c0_16 = arith.constant 0 : index
    %22 = vector.load %arg8[%c0_15, %c0_16] : memref<96x96xf32, #tpu.memory_space<vmem>>, vector<96x96xf32>
    %23 = arith.truncf %7 : vector<8x96xf32> to vector<8x96xbf16>
    %24 = arith.truncf %22 : vector<96x96xf32> to vector<96x96xbf16>
    %cst_17 = arith.constant dense<0.000000e+00> : vector<8x96xf32>
    %25 = tpu.matmul %23, %24, %cst_17 {dimension_numbers = #tpu.dot_dimension_numbers<[1], [0], [0], [1], [0, 0, 1, 1], [], []>} : vector<8x96xbf16>, vector<96x96xbf16>, vector<8x96xf32> -> vector<8x96xf32>
    %c0_18 = arith.constant 0 : index
    %c0_19 = arith.constant 0 : index
    %26 = vector.load %arg9[%c0_18, %c0_19] : memref<96x96xf32, #tpu.memory_space<vmem>>, vector<96x96xf32>
    %27 = arith.truncf %21 : vector<8x96xf32> to vector<8x96xbf16>
    %28 = arith.truncf %26 : vector<96x96xf32> to vector<96x96xbf16>
    %cst_20 = arith.constant dense<0.000000e+00> : vector<8x96xf32>
    %29 = tpu.matmul %27, %28, %cst_20 {dimension_numbers = #tpu.dot_dimension_numbers<[1], [0], [0], [1], [0, 0, 1, 1], [], []>} : vector<8x96xbf16>, vector<96x96xbf16>, vector<8x96xf32> -> vector<8x96xf32>
    %c0_21 = arith.constant 0 : index
    %c0_22 = arith.constant 0 : index
    %30 = vector.load %arg10[%c0_21, %c0_22] : memref<96x96xf32, #tpu.memory_space<vmem>>, vector<96x96xf32>
    %31 = arith.truncf %7 : vector<8x96xf32> to vector<8x96xbf16>
    %32 = arith.truncf %30 : vector<96x96xf32> to vector<96x96xbf16>
    %cst_23 = arith.constant dense<0.000000e+00> : vector<8x96xf32>
    %33 = tpu.matmul %31, %32, %cst_23 {dimension_numbers = #tpu.dot_dimension_numbers<[1], [0], [0], [1], [0, 0, 1, 1], [], []>} : vector<8x96xbf16>, vector<96x96xbf16>, vector<8x96xf32> -> vector<8x96xf32>
    %34 = vector.shape_cast %14 : vector<8x96xf32> to vector<8x12x8xf32>
    %35 = tpu.transpose %34, [1, 0, 2] : vector<8x12x8xf32> -> vector<12x8x8xf32>
    %36 = vector.shape_cast %25 : vector<8x96xf32> to vector<8x12x8xf32>
    %37 = tpu.transpose %36, [1, 0, 2] : vector<8x12x8xf32> -> vector<12x8x8xf32>
    %38 = vector.shape_cast %33 : vector<8x96xf32> to vector<8x12x8xf32>
    %39 = tpu.transpose %38, [1, 0, 2] : vector<8x12x8xf32> -> vector<12x8x8xf32>
    %40 = vector.shape_cast %29 : vector<8x96xf32> to vector<8x12x8xf32>
    %41 = tpu.transpose %40, [1, 0, 2] : vector<8x12x8xf32> -> vector<12x8x8xf32>
    "tpu.trace_start"() <{level = 10 : i32, message = "bdk,bsk->bds"}> : () -> ()
    %cst_24 = arith.constant dense<0.000000e+00> : vector<12x8x8xf32>
    %42 = tpu.matmul %35, %37, %cst_24 {dimension_numbers = #tpu.dot_dimension_numbers<[2], [2], [1], [1], [0, 0, 0, 1, 1, 1], [0], [0]>} : vector<12x8x8xf32>, vector<12x8x8xf32>, vector<12x8x8xf32> -> vector<12x8x8xf32>
    %cst_25 = arith.constant dense<0.000000e+00> : vector<12x8x8xf32>
    %43 = tpu.matmul %35, %39, %cst_25 {dimension_numbers = #tpu.dot_dimension_numbers<[2], [2], [1], [1], [0, 0, 0, 1, 1, 1], [0], [0]>} : vector<12x8x8xf32>, vector<12x8x8xf32>, vector<12x8x8xf32> -> vector<12x8x8xf32>
    "tpu.trace_stop"() : () -> ()
    %44 = vector.shape_cast %42 : vector<12x8x8xf32> to vector<3x4x8x8xf32>
    %45 = vector.shape_cast %43 : vector<12x8x8xf32> to vector<3x4x8x8xf32>
    %cst_26 = arith.constant dense<0xFF800000> : vector<4x8x8xf32>
    %46 = vector.multi_reduction <maximumf>, %45, %cst_26 [0] : vector<3x4x8x8xf32> to vector<4x8x8xf32>
    %47 = vector.shape_cast %46 : vector<4x8x8xf32> to vector<1x4x8x8xf32>
    %48 = vector.broadcast %47 : vector<1x4x8x8xf32> to vector<3x4x8x8xf32>
    %49 = arith.subf %45, %48 : vector<3x4x8x8xf32>
    %50 = math.exp %49 : vector<3x4x8x8xf32>
    %cst_27 = arith.constant dense<0.000000e+00> : vector<4x8x8xf32>
    %51 = vector.multi_reduction <add>, %50, %cst_27 [0] : vector<3x4x8x8xf32> to vector<4x8x8xf32>
    %52 = tpu.reciprocal %51 {approx = true} : vector<4x8x8xf32> -> vector<4x8x8xf32>
    %53 = vector.shape_cast %52 : vector<4x8x8xf32> to vector<1x4x8x8xf32>
    %54 = vector.broadcast %53 : vector<1x4x8x8xf32> to vector<3x4x8x8xf32>
    %55 = arith.mulf %50, %54 : vector<3x4x8x8xf32>
    %56 = vector.extract_strided_slice %44 {offsets = [0, 0, 0, 0], sizes = [1, 4, 8, 8], strides = [1, 1, 1, 1]} : vector<3x4x8x8xf32> to vector<1x4x8x8xf32>
    %57 = vector.shape_cast %56 : vector<1x4x8x8xf32> to vector<4x8x8xf32>
    %58 = vector.extract_strided_slice %44 {offsets = [1, 0, 0, 0], sizes = [1, 4, 8, 8], strides = [1, 1, 1, 1]} : vector<3x4x8x8xf32> to vector<1x4x8x8xf32>
    %59 = vector.shape_cast %58 : vector<1x4x8x8xf32> to vector<4x8x8xf32>
    %60 = vector.extract_strided_slice %44 {offsets = [2, 0, 0, 0], sizes = [1, 4, 8, 8], strides = [1, 1, 1, 1]} : vector<3x4x8x8xf32> to vector<1x4x8x8xf32>
    %61 = vector.shape_cast %60 : vector<1x4x8x8xf32> to vector<4x8x8xf32>
    %62 = arith.subf %57, %59 : vector<4x8x8xf32>
    %63 = math.absf %62 : vector<4x8x8xf32>
    %64 = arith.subf %57, %61 : vector<4x8x8xf32>
    %65 = math.absf %64 : vector<4x8x8xf32>
    %66 = arith.addf %63, %65 : vector<4x8x8xf32>
    %67 = arith.subf %59, %61 : vector<4x8x8xf32>
    %68 = math.absf %67 : vector<4x8x8xf32>
    %69 = arith.addf %66, %68 : vector<4x8x8xf32>
    %cst_28 = arith.constant 0.000000e+00 : f32
    %70 = vector.broadcast %cst_28 : f32 to vector<4x8x8xf32>
    %71 = arith.subf %70, %69 : vector<4x8x8xf32>
    %cst_29 = arith.constant 0.333333343 : f32
    %72 = vector.broadcast %cst_29 : f32 to vector<4x8x8xf32>
    %73 = arith.mulf %71, %72 : vector<4x8x8xf32>
    %cst_30 = arith.constant dense<0xFF800000> : vector<4x8xf32>
    %74 = vector.multi_reduction <maximumf>, %73, %cst_30 [2] : vector<4x8x8xf32> to vector<4x8xf32>
    %75 = vector.shape_cast %74 : vector<4x8xf32> to vector<4x8x1xf32>
    %76 = vector.broadcast %75 : vector<4x8x1xf32> to vector<4x8x8xf32>
    %77 = arith.subf %73, %76 : vector<4x8x8xf32>
    %78 = math.exp %77 : vector<4x8x8xf32>
    %cst_31 = arith.constant dense<0.000000e+00> : vector<4x8xf32>
    %79 = vector.multi_reduction <add>, %78, %cst_31 [2] : vector<4x8x8xf32> to vector<4x8xf32>
    %80 = vector.shape_cast %79 : vector<4x8xf32> to vector<4x8x1xf32>
    %81 = tpu.reciprocal %80 {approx = true} : vector<4x8x1xf32> -> vector<4x8x1xf32>
    %82 = vector.broadcast %81 : vector<4x8x1xf32> to vector<4x8x8xf32>
    %83 = arith.mulf %78, %82 : vector<4x8x8xf32>
    %cst_32 = arith.constant dense<0xFF800000> : vector<3x4x8xf32>
    %84 = vector.multi_reduction <maximumf>, %44, %cst_32 [3] : vector<3x4x8x8xf32> to vector<3x4x8xf32>
    %85 = vector.shape_cast %84 : vector<3x4x8xf32> to vector<3x4x8x1xf32>
    %86 = vector.broadcast %85 : vector<3x4x8x1xf32> to vector<3x4x8x8xf32>
    %87 = arith.subf %44, %86 : vector<3x4x8x8xf32>
    %88 = math.exp %87 : vector<3x4x8x8xf32>
    %cst_33 = arith.constant dense<0.000000e+00> : vector<3x4x8xf32>
    %89 = vector.multi_reduction <add>, %88, %cst_33 [3] : vector<3x4x8x8xf32> to vector<3x4x8xf32>
    %90 = vector.shape_cast %89 : vector<3x4x8xf32> to vector<3x4x8x1xf32>
    %91 = tpu.reciprocal %90 {approx = true} : vector<3x4x8x1xf32> -> vector<3x4x8x1xf32>
    %92 = vector.broadcast %91 : vector<3x4x8x1xf32> to vector<3x4x8x8xf32>
    %93 = arith.mulf %88, %92 : vector<3x4x8x8xf32>
    %94 = arith.mulf %93, %55 : vector<3x4x8x8xf32>
    %cst_34 = arith.constant dense<0.000000e+00> : vector<4x8x8xf32>
    %95 = vector.multi_reduction <add>, %94, %cst_34 [0] : vector<3x4x8x8xf32> to vector<4x8x8xf32>
    %96 = arith.mulf %95, %83 : vector<4x8x8xf32>
    %cst_35 = arith.constant dense<0xFF800000> : vector<4x8xf32>
    %97 = vector.multi_reduction <maximumf>, %96, %cst_35 [2] : vector<4x8x8xf32> to vector<4x8xf32>
    %98 = vector.shape_cast %97 : vector<4x8xf32> to vector<4x8x1xf32>
    %99 = vector.broadcast %98 : vector<4x8x1xf32> to vector<4x8x8xf32>
    %100 = arith.subf %96, %99 : vector<4x8x8xf32>
    %101 = math.exp %100 : vector<4x8x8xf32>
    %cst_36 = arith.constant dense<0.000000e+00> : vector<4x8xf32>
    %102 = vector.multi_reduction <add>, %101, %cst_36 [2] : vector<4x8x8xf32> to vector<4x8xf32>
    %103 = vector.shape_cast %102 : vector<4x8xf32> to vector<4x8x1xf32>
    %104 = tpu.reciprocal %103 {approx = true} : vector<4x8x1xf32> -> vector<4x8x1xf32>
    %105 = vector.broadcast %104 : vector<4x8x1xf32> to vector<4x8x8xf32>
    %106 = arith.mulf %101, %105 : vector<4x8x8xf32>
    %107 = vector.extract_strided_slice %55 {offsets = [1, 0, 0, 0], sizes = [1, 4, 8, 8], strides = [1, 1, 1, 1]} : vector<3x4x8x8xf32> to vector<1x4x8x8xf32>
    %108 = vector.shape_cast %107 : vector<1x4x8x8xf32> to vector<4x8x8xf32>
    %109 = vector.extract_strided_slice %55 {offsets = [2, 0, 0, 0], sizes = [1, 4, 8, 8], strides = [1, 1, 1, 1]} : vector<3x4x8x8xf32> to vector<1x4x8x8xf32>
    %110 = vector.shape_cast %109 : vector<1x4x8x8xf32> to vector<4x8x8xf32>
    %111 = arith.addf %108, %110 : vector<4x8x8xf32>
    %cst_37 = arith.constant dense<0.000000e+00> : vector<8x8xf32>
    %112 = vector.multi_reduction <add>, %111, %cst_37 [0] : vector<4x8x8xf32> to vector<8x8xf32>
    %cst_38 = arith.constant dense<0.000000e+00> : vector<8xf32>
    %113 = vector.multi_reduction <add>, %112, %cst_38 [1] : vector<8x8xf32> to vector<8xf32>
    %114 = vector.shape_cast %113 : vector<8xf32> to vector<8x1xf32>
    %cst_39 = arith.constant dense<0.000000e+00> : vector<1xf32>
    %115 = vector.multi_reduction <add>, %114, %cst_39 [0] : vector<8x1xf32> to vector<1xf32>
    %116 = vector.shape_cast %115 : vector<1xf32> to vector<1x1xf32>
    %cst_40 = arith.constant 3.906250e-03 : f32
    %117 = vector.broadcast %cst_40 : f32 to vector<1x1xf32>
    %118 = arith.mulf %116, %117 : vector<1x1xf32>
    %c0_41 = arith.constant 0 : index
    %c0_42 = arith.constant 0 : index
    %119 = vector.load %arg14[%c0_41, %c0_42] : memref<1x1xf32, #tpu.memory_space<vmem>>, vector<1x1xf32>
    tpu.vector_store %arg14[%c0_41, %c0_42], %118 {strides = array<i32>} : memref<1x1xf32, #tpu.memory_space<vmem>>, vector<1x1xf32>,
    %120 = tpu.concatenate %106, %106, %106 in 0 : vector<4x8x8xf32>, vector<4x8x8xf32>, vector<4x8x8xf32> -> vector<12x8x8xf32>
    "tpu.trace_start"() <{level = 10 : i32, message = "bds,bsk->bdk"}> : () -> ()
    %cst_43 = arith.constant dense<0.000000e+00> : vector<12x8x8xf32>
    %121 = tpu.matmul %120, %41, %cst_43 {dimension_numbers = #tpu.dot_dimension_numbers<[2], [1], [1], [2], [0, 0, 0, 1, 1, 2], [0], [0]>} : vector<12x8x8xf32>, vector<12x8x8xf32>, vector<12x8x8xf32> -> vector<12x8x8xf32>
    "tpu.trace_stop"() : () -> ()
    %122 = tpu.transpose %121, [1, 0, 2] : vector<12x8x8xf32> -> vector<8x12x8xf32>
    %123 = vector.shape_cast %122 : vector<8x12x8xf32> to vector<8x96xf32>
    %c0_44 = arith.constant 0 : index
    %124 = memref.load %arg0[%c0_44] : memref<1xf32, #tpu.memory_space<smem>>
    %c0_45 = arith.constant 0 : index
    %c0_46 = arith.constant 0 : index
    %125 = vector.load %arg11[%c0_45, %c0_46] : memref<96x96xf32, #tpu.memory_space<vmem>>, vector<96x96xf32>
    %126 = arith.truncf %123 : vector<8x96xf32> to vector<8x96xbf16>
    %127 = arith.truncf %125 : vector<96x96xf32> to vector<96x96xbf16>
    %cst_47 = arith.constant dense<0.000000e+00> : vector<8x96xf32>
    %128 = tpu.matmul %126, %127, %cst_47 {dimension_numbers = #tpu.dot_dimension_numbers<[1], [0], [0], [1], [0, 0, 1, 1], [], []>} : vector<8x96xbf16>, vector<96x96xbf16>, vector<8x96xf32> -> vector<8x96xf32>
    %c0_48 = arith.constant 0 : index
    %c0_49 = arith.constant 0 : index
    %129 = vector.load %arg12[%c0_48, %c0_49] : memref<1x96xf32, #tpu.memory_space<vmem>>, vector<1x96xf32>
    %130 = vector.broadcast %129 : vector<1x96xf32> to vector<8x96xf32>
    %131 = arith.addf %128, %130 : vector<8x96xf32>
    %132 = vector.broadcast %124 : f32 to vector<8x96xf32>
    %133 = arith.mulf %131, %132 : vector<8x96xf32>
    %cst_50 = arith.constant 1.000000e+00 : f32
    %134 = arith.subf %cst_50, %124 : f32
    %135 = vector.broadcast %134 : f32 to vector<8x96xf32>
    %136 = arith.mulf %0, %135 : vector<8x96xf32>
    %137 = arith.addf %133, %136 : vector<8x96xf32>
    %c0_51 = arith.constant 0 : index
    %c0_52 = arith.constant 0 : index
    %138 = vector.load %arg13[%c0_51, %c0_52] : memref<8x96xf32, #tpu.memory_space<vmem>>, vector<8x96xf32>
    tpu.vector_store %arg13[%c0_51, %c0_52], %137 {strides = array<i32>} : memref<8x96xf32, #tpu.memory_space<vmem>>, vector<8x96xf32>,
    return
  }
}

</mosaic_0001>

<llo_original>
// kernel: hgt_layer_forward.1
$region0: #{hgt_layer_forward.1}
  #allocation0 [shape = 'u32[]', space=smem, size = 0x4, offset = 0x4, fixed_abs, tag = 'smem constant byte address 0x4 - core index']
  #allocation1 [shape = 'u32[144,128]{1,0:T(1,128)}', space=vmem, size = 0x12000, scoped, tag = 'internal scratch']
  #allocation2 [shape = 'f32[1]{0:T(128)S(6)}', space=smem, size = 0x200, scoped, tag = 'scoped memory for hgt_layer_forward.1']
  %s0 = inlined_call_operand.<no memory space> [shape: f32[1], index: 0, kind: input, shape index: {}]
  %s1 = inlined_call_operand.vmem [shape: f32[8,96], index: 1, kind: input, shape index: {}, may-alias: {1,13}]
  %s2 = inlined_call_operand.vmem [shape: f32[96,96], index: 2, kind: input, shape index: {}]
  %s3 = inlined_call_operand.vmem [shape: f32[1,96], index: 3, kind: input, shape index: {}]
  %s4 = inlined_call_operand.vmem [shape: f32[96,96], index: 4, kind: input, shape index: {}]
  %s5 = inlined_call_operand.vmem [shape: f32[1,96], index: 5, kind: input, shape index: {}]
  %s6 = inlined_call_operand.vmem [shape: f32[96,96], index: 6, kind: input, shape index: {}]
  %s7 = inlined_call_operand.vmem [shape: f32[1,96], index: 7, kind: input, shape index: {}]
  %s8 = inlined_call_operand.vmem [shape: f32[96,96], index: 8, kind: input, shape index: {}]
  %s9 = inlined_call_operand.vmem [shape: f32[96,96], index: 9, kind: input, shape index: {}]
  %s10 = inlined_call_operand.vmem [shape: f32[96,96], index: 10, kind: input, shape index: {}]
  %s11 = inlined_call_operand.vmem [shape: f32[96,96], index: 11, kind: input, shape index: {}]
  %s12 = inlined_call_operand.vmem [shape: f32[1,96], index: 12, kind: input, shape index: {}]
  %s13 = inlined_call_operand.vmem [shape: f32[8,96], index: 13, kind: output, shape index: {0}, may-alias: {1,13}]
  %s14 = inlined_call_operand.hbm [shape: f32[1,1], index: 14, kind: output, shape index: {1}]
  %15 = xla_tuple %s13, %s14
  %s16 = sld [smem:[#allocation0]]
  $region70: #{hgt_layer_forward.1} parent=0
    _
  %s18 = ssub.s32 1, %s16
  %s19 = scalar_select 0, %s18, %s16
  %20 = sst [smem:[#allocation2]] %s0
  $region1: #{hgt_layer_forward.1} parent=0
    #allocation3 [shape = 'u8[512]{0}', space=vmem, size = 0x400, scoped, tag = 'output window, operand 1, single buffered']
    #allocation4 [shape = 's32[1]{0}', space=sflag, size = 0x4, scoped, tag = 'scoped memory for hgt_layer_forward.1']
    %21 = vsyncpa [#allocation4], 0
    // Predicated region
    $region2: #{hgt_layer_forward.1} parent=1 // pred_check
      _
    $region3: #{hgt_layer_forward.1} parent=1 // pred_check_branch
      %23 = sbr.rel (0) target = $region5
    $region4: #{hgt_layer_forward.1} parent=1 // pred_region
      _
    $region5: #{hgt_layer_forward.1} parent=1 // pred_fallthru
      _
    // Predicated region
    $region6: #{hgt_layer_forward.1} parent=1 // pred_check
      _
    $region7: #{hgt_layer_forward.1} parent=1 // pred_check_branch
      %25 = sbr.rel (0) target = $region9
    $region8: #{hgt_layer_forward.1} parent=1 // pred_region
      _
    $region9: #{hgt_layer_forward.1} parent=1 // pred_fallthru
      _
    // Predicated region
    $region10: #{hgt_layer_forward.1} parent=1 // pred_check
      _
    $region11: #{hgt_layer_forward.1} parent=1 // pred_check_branch
      %27 = sbr.rel (0) target = $region13
    $region12: #{hgt_layer_forward.1} parent=1 // pred_region
      _
    $region13: #{hgt_layer_forward.1} parent=1 // pred_fallthru
      _
    // Predicated region
    $region14: #{hgt_layer_forward.1} parent=1 // pred_check
      _
    $region15: #{hgt_layer_forward.1} parent=1 // pred_check_branch
      %29 = sbr.rel (0) target = $region17
    $region16: #{hgt_layer_forward.1} parent=1 // pred_region
      _
    $region17: #{hgt_layer_forward.1} parent=1 // pred_fallthru
      _
    // Predicated region
    $region18: #{hgt_layer_forward.1} parent=1 // pred_check
      _
    $region19: #{hgt_layer_forward.1} parent=1 // pred_check_branch
      %31 = sbr.rel (0) target = $region21
    $region20: #{hgt_layer_forward.1} parent=1 // pred_region
      _
    $region21: #{hgt_layer_forward.1} parent=1 // pred_fallthru
      _
    // Predicated region
    $region22: #{hgt_layer_forward.1} parent=1 // pred_check
      _
    $region23: #{hgt_layer_forward.1} parent=1 // pred_check_branch
      %33 = sbr.rel (0) target = $region25
    $region24: #{hgt_layer_forward.1} parent=1 // pred_region
      _
    $region25: #{hgt_layer_forward.1} parent=1 // pred_fallthru
      _
    // Predicated region
    $region26: #{hgt_layer_forward.1} parent=1 // pred_check
      _
    $region27: #{hgt_layer_forward.1} parent=1 // pred_check_branch
      %35 = sbr.rel (0) target = $region29
    $region28: #{hgt_layer_forward.1} parent=1 // pred_region
      _
    $region29: #{hgt_layer_forward.1} parent=1 // pred_fallthru
      _
    // Predicated region
    $region30: #{hgt_layer_forward.1} parent=1 // pred_check
      _
    $region31: #{hgt_layer_forward.1} parent=1 // pred_check_branch
      %37 = sbr.rel (0) target = $region33
    $region32: #{hgt_layer_forward.1} parent=1 // pred_region
      _
    $region33: #{hgt_layer_forward.1} parent=1 // pred_fallthru
      _
    // Predicated region
    $region34: #{hgt_layer_forward.1} parent=1 // pred_check
      _
    $region35: #{hgt_layer_forward.1} parent=1 // pred_check_branch
      %39 = sbr.rel (0) target = $region37
    $region36: #{hgt_layer_forward.1} parent=1 // pred_region
      _
    $region37: #{hgt_layer_forward.1} parent=1 // pred_fallthru
      _
    // Predicated region
    $region38: #{hgt_layer_forward.1} parent=1 // pred_check
      _
    $region39: #{hgt_layer_forward.1} parent=1 // pred_check_branch
      %41 = sbr.rel (0) target = $region41
    $region40: #{hgt_layer_forward.1} parent=1 // pred_region
      _
    $region41: #{hgt_layer_forward.1} parent=1 // pred_fallthru
      _
    // Predicated region
    $region42: #{hgt_layer_forward.1} parent=1 // pred_check
      _
    $region43: #{hgt_layer_forward.1} parent=1 // pred_check_branch
      %43 = sbr.rel (0) target = $region45
    $region44: #{hgt_layer_forward.1} parent=1 // pred_region
      _
    $region45: #{hgt_layer_forward.1} parent=1 // pred_fallthru
      _
    // Predicated region
    $region46: #{hgt_layer_forward.1} parent=1 // pred_check
      _
    $region47: #{hgt_layer_forward.1} parent=1 // pred_check_branch
      %45 = sbr.rel (0) target = $region49
    $region48: #{hgt_layer_forward.1} parent=1 // pred_region
      _
    $region49: #{hgt_layer_forward.1} parent=1 // pred_fallthru
      _
    // Predicated region
    $region50: #{hgt_layer_forward.1} parent=1 // pred_check
      _
    $region51: #{hgt_layer_forward.1} parent=1 // pred_check_branch
      %47 = sbr.rel (0) target = $region53
    $region52: #{hgt_layer_forward.1} parent=1 // pred_region
      _
    $region53: #{hgt_layer_forward.1} parent=1 // pred_fallthru
      _
    %v49 = vld [vmem:[%s1] sm:$0xff]
    %v50 = vld [vmem:[%s2] sm:$0xff]
    %v51 = vld [vmem:[%s2 + $0x8] sm:$0xff]
    %v52 = vld [vmem:[%s2 + $0x10] sm:$0xff]
    %v53 = vld [vmem:[%s2 + $0x18] sm:$0xff]
    %v54 = vld [vmem:[%s2 + $0x20] sm:$0xff]
    %v55 = vld [vmem:[%s2 + $0x28] sm:$0xff]
    %v56 = vld [vmem:[%s2 + $0x30] sm:$0xff]
    %v57 = vld [vmem:[%s2 + $0x38] sm:$0xff]
    %v58 = vld [vmem:[%s2 + $0x40] sm:$0xff]
    %v59 = vld [vmem:[%s2 + $0x48] sm:$0xff]
    %v60 = vld [vmem:[%s2 + $0x50] sm:$0xff]
    %v61 = vld [vmem:[%s2 + $0x58] sm:$0xff]
    %v62 = vpack.c.bf16 %v49, %v49
    %v63 = vpack.c.bf16 %v51, %v50
    %v64 = vpack.c.bf16 %v53, %v52
    %v65 = vpack.c.bf16 %v55, %v54
    %v66 = vpack.c.bf16 %v57, %v56
    %v67 = vpack.c.bf16 %v59, %v58
    %v68 = vpack.c.bf16 %v61, %v60
    %v69 = vld [vmem:[%s3] sm:$0x1]
    %v71 = vlaneseq
    %v72 = vshrl.u32 %v71, 7
    %v73 = vsub.s32 0, %v72
    %v74 = vrot.slane %v69, %v73
    %vm76 = vcmask 785408
    %v78 = vsel %vm76, %v62, 0
    %80 = vmatprep.subr.bf16.mxu0 0
    %81 = vmatpush1.bf16.msra.mxu0 %v63
    %82 = vmatprep.subr.bf16.mxu0 0
    %83 = vmatpush1.bf16.msra.mxu0 %v64
    %84 = vmatprep.subr.bf16.mxu0 0
    %85 = vmatpush1.bf16.msra.mxu0 %v65
    %86 = vmatprep.subr.bf16.mxu0 0
    %87 = vmatpush1.bf16.msra.mxu0 %v66
    %88 = vmatprep.subr.bf16.mxu0 0
    %89 = vmatpush1.bf16.msra.mxu0 %v67
    %90 = vmatprep.subr.bf16.mxu0 0
    %91 = vmatpush1.bf16.msra.mxu0 %v68
    %92 = vmatprep.subr.bf16.mxu0 0
    %93 = vmatpush1.bf16.msra.mxu0 0
    %94 = vmatprep.subr.bf16.mxu0 0
    %95 = vmatpush1.bf16.msra.mxu0 0
    %96 = vmatprep.subr.bf16.mxu0 0
    %97 = vmatpush1.bf16.msra.mxu0 0
    %98 = vmatprep.subr.bf16.mxu0 0
    %99 = vmatpush1.bf16.msra.mxu0 0
    %100 = vmatprep.subr.bf16.mxu0 0
    %101 = vmatpush1.bf16.msra.mxu0 0
    %102 = vmatprep.subr.bf16.mxu0 0
    %103 = vmatpush1.bf16.msra.mxu0 0
    %104 = vmatprep.subr.bf16.mxu0 0
    %105 = vmatpush1.bf16.msra.mxu0 0
    %106 = vmatprep.subr.bf16.mxu0 0
    %107 = vmatpush1.bf16.msra.mxu0 0
    %108 = vmatprep.subr.bf16.mxu0 0
    %109 = vmatpush1.bf16.msra.mxu0 0
    %110 = vmatprep.subr.bf16.mxu0 0
    %111 = vmatpush1.bf16.msra.mxu0 0
    %112 = vmatprep.mubr.bf16.mxu0 0
    %113 = vmatmul.mubr.bf16.gmra.mrb[0].mxu0 %v78
    %v114 = vpop.f32.mrb[0].mxu0
    %v115 = vadd.f32 %v74, %v114
    %v116 = vpop.f32.mrb[0].mxu0
    %v117 = vpop.f32.mrb[0].mxu0
    %v118 = vpop.f32.mrb[0].mxu0
    %119 = vdwg.mxu0
    %v120 = vld [vmem:[%s4] sm:$0xff]
    %v121 = vld [vmem:[%s4 + $0x8] sm:$0xff]
    %v122 = vld [vmem:[%s4 + $0x10] sm:$0xff]
    %v123 = vld [vmem:[%s4 + $0x18] sm:$0xff]
    %v124 = vld [vmem:[%s4 + $0x20] sm:$0xff]
    %v125 = vld [vmem:[%s4 + $0x28] sm:$0xff]
    %v126 = vld [vmem:[%s4 + $0x30] sm:$0xff]
    %v127 = vld [vmem:[%s4 + $0x38] sm:$0xff]
    %v128 = vld [vmem:[%s4 + $0x40] sm:$0xff]
    %v129 = vld [vmem:[%s4 + $0x48] sm:$0xff]
    %v130 = vld [vmem:[%s4 + $0x50] sm:$0xff]
    %v131 = vld [vmem:[%s4 + $0x58] sm:$0xff]
    %v132 = vpack.c.bf16 %v121, %v120
    %v133 = vpack.c.bf16 %v123, %v122
    %v134 = vpack.c.bf16 %v125, %v124
    %v135 = vpack.c.bf16 %v127, %v126
    %v136 = vpack.c.bf16 %v129, %v128
    %v137 = vpack.c.bf16 %v131, %v130
    %v138 = vld [vmem:[%s5] sm:$0x1]
    %v140 = vlaneseq
    %v141 = vshrl.u32 %v140, 7
    %v142 = vsub.s32 0, %v141
    %v143 = vrot.slane %v138, %v142
    %145 = vmatprep.subr.bf16.mxu0 0
    %146 = vmatpush1.bf16.msra.mxu0 %v132
    %147 = vmatprep.subr.bf16.mxu0 0
    %148 = vmatpush1.bf16.msra.mxu0 %v133
    %149 = vmatprep.subr.bf16.mxu0 0
    %150 = vmatpush1.bf16.msra.mxu0 %v134
    %151 = vmatprep.subr.bf16.mxu0 0
    %152 = vmatpush1.bf16.msra.mxu0 %v135
    %153 = vmatprep.subr.bf16.mxu0 0
    %154 = vmatpush1.bf16.msra.mxu0 %v136
    %155 = vmatprep.subr.bf16.mxu0 0
    %156 = vmatpush1.bf16.msra.mxu0 %v137
    %157 = vmatprep.subr.bf16.mxu0 0
    %158 = vmatpush1.bf16.msra.mxu0 0
    %159 = vmatprep.subr.bf16.mxu0 0
    %160 = vmatpush1.bf16.msra.mxu0 0
    %161 = vmatprep.subr.bf16.mxu0 0
    %162 = vmatpush1.bf16.msra.mxu0 0
    %163 = vmatprep.subr.bf16.mxu0 0
    %164 = vmatpush1.bf16.msra.mxu0 0
    %165 = vmatprep.subr.bf16.mxu0 0
    %166 = vmatpush1.bf16.msra.mxu0 0
    %167 = vmatprep.subr.bf16.mxu0 0
    %168 = vmatpush1.bf16.msra.mxu0 0
    %169 = vmatprep.subr.bf16.mxu0 0
    %170 = vmatpush1.bf16.msra.mxu0 0
    %171 = vmatprep.subr.bf16.mxu0 0
    %172 = vmatpush1.bf16.msra.mxu0 0
    %173 = vmatprep.subr.bf16.mxu0 0
    %174 = vmatpush1.bf16.msra.mxu0 0
    %175 = vmatprep.subr.bf16.mxu0 0
    %176 = vmatpush1.bf16.msra.mxu0 0
    %177 = vmatprep.mubr.bf16.mxu0 0
    %178 = vmatmul.mubr.bf16.gmra.mrb[0].mxu0 %v78
    %v179 = vpop.f32.mrb[0].mxu0
    %v180 = vadd.f32 %v143, %v179
    %v181 = vpop.f32.mrb[0].mxu0
    %v182 = vpop.f32.mrb[0].mxu0
    %v183 = vpop.f32.mrb[0].mxu0
    %184 = vdwg.mxu0
    %v185 = vld [vmem:[%s6] sm:$0xff]
    %v186 = vld [vmem:[%s6 + $0x8] sm:$0xff]
    %v187 = vld [vmem:[%s6 + $0x10] sm:$0xff]
    %v188 = vld [vmem:[%s6 + $0x18] sm:$0xff]
    %v189 = vld [vmem:[%s6 + $0x20] sm:$0xff]
    %v190 = vld [vmem:[%s6 + $0x28] sm:$0xff]
    %v191 = vld [vmem:[%s6 + $0x30] sm:$0xff]
    %v192 = vld [vmem:[%s6 + $0x38] sm:$0xff]
    %v193 = vld [vmem:[%s6 + $0x40] sm:$0xff]
    %v194 = vld [vmem:[%s6 + $0x48] sm:$0xff]
    %v195 = vld [vmem:[%s6 + $0x50] sm:$0xff]
    %v196 = vld [vmem:[%s6 + $0x58] sm:$0xff]
    %v197 = vpack.c.bf16 %v186, %v185
    %v198 = vpack.c.bf16 %v188, %v187
    %v199 = vpack.c.bf16 %v190, %v189
    %v200 = vpack.c.bf16 %v192, %v191
    %v201 = vpack.c.bf16 %v194, %v193
    %v202 = vpack.c.bf16 %v196, %v195
    %v203 = vld [vmem:[%s7] sm:$0x1]
    %v205 = vlaneseq
    %v206 = vshrl.u32 %v205, 7
    %v207 = vsub.s32 0, %v206
    %v208 = vrot.slane %v203, %v207
    %210 = vmatprep.subr.bf16.mxu0 0
    %211 = vmatpush1.bf16.msra.mxu0 %v197
    %212 = vmatprep.subr.bf16.mxu0 0
    %213 = vmatpush1.bf16.msra.mxu0 %v198
    %214 = vmatprep.subr.bf16.mxu0 0
    %215 = vmatpush1.bf16.msra.mxu0 %v199
    %216 = vmatprep.subr.bf16.mxu0 0
    %217 = vmatpush1.bf16.msra.mxu0 %v200
    %218 = vmatprep.subr.bf16.mxu0 0
    %219 = vmatpush1.bf16.msra.mxu0 %v201
    %220 = vmatprep.subr.bf16.mxu0 0
    %221 = vmatpush1.bf16.msra.mxu0 %v202
    %222 = vmatprep.subr.bf16.mxu0 0
    %223 = vmatpush1.bf16.msra.mxu0 0
    %224 = vmatprep.subr.bf16.mxu0 0
    %225 = vmatpush1.bf16.msra.mxu0 0
    %226 = vmatprep.subr.bf16.mxu0 0
    %227 = vmatpush1.bf16.msra.mxu0 0
    %228 = vmatprep.subr.bf16.mxu0 0
    %229 = vmatpush1.bf16.msra.mxu0 0
    %230 = vmatprep.subr.bf16.mxu0 0
    %231 = vmatpush1.bf16.msra.mxu0 0
    %232 = vmatprep.subr.bf16.mxu0 0
    %233 = vmatpush1.bf16.msra.mxu0 0
    %234 = vmatprep.subr.bf16.mxu0 0
    %235 = vmatpush1.bf16.msra.mxu0 0
    %236 = vmatprep.subr.bf16.mxu0 0
    %237 = vmatpush1.bf16.msra.mxu0 0
    %238 = vmatprep.subr.bf16.mxu0 0
    %239 = vmatpush1.bf16.msra.mxu0 0
    %240 = vmatprep.subr.bf16.mxu0 0
    %241 = vmatpush1.bf16.msra.mxu0 0
    %242 = vmatprep.mubr.bf16.mxu0 0
    %243 = vmatmul.mubr.bf16.gmra.mrb[0].mxu0 %v78
    %v244 = vpop.f32.mrb[0].mxu0
    %v245 = vadd.f32 %v208, %v244
    %v246 = vpop.f32.mrb[0].mxu0
    %v247 = vpop.f32.mrb[0].mxu0
    %v248 = vpop.f32.mrb[0].mxu0
    %249 = vdwg.mxu0
    %v250 = vld [vmem:[%s8] sm:$0xff]
    %v251 = vld [vmem:[%s8 + $0x8] sm:$0xff]
    %v252 = vld [vmem:[%s8 + $0x10] sm:$0xff]
    %v253 = vld [vmem:[%s8 + $0x18] sm:$0xff]
    %v254 = vld [vmem:[%s8 + $0x20] sm:$0xff]
    %v255 = vld [vmem:[%s8 + $0x28] sm:$0xff]
    %v256 = vld [vmem:[%s8 + $0x30] sm:$0xff]
    %v257 = vld [vmem:[%s8 + $0x38] sm:$0xff]
    %v258 = vld [vmem:[%s8 + $0x40] sm:$0xff]
    %v259 = vld [vmem:[%s8 + $0x48] sm:$0xff]
    %v260 = vld [vmem:[%s8 + $0x50] sm:$0xff]
    %v261 = vld [vmem:[%s8 + $0x58] sm:$0xff]
    %v262 = vpack.c.bf16 %v115, %v115
    %v263 = vpack.c.bf16 %v251, %v250
    %v264 = vpack.c.bf16 %v253, %v252
    %v265 = vpack.c.bf16 %v255, %v254
    %v266 = vpack.c.bf16 %v257, %v256
    %v267 = vpack.c.bf16 %v259, %v258
    %v268 = vpack.c.bf16 %v261, %v260
    %v270 = vsel %vm76, %v262, 0
    %272 = vmatprep.subr.bf16.mxu0 0
    %273 = vmatpush1.bf16.msra.mxu0 %v263
    %274 = vmatprep.subr.bf16.mxu0 0
    %275 = vmatpush1.bf16.msra.mxu0 %v264
    %276 = vmatprep.subr.bf16.mxu0 0
    %277 = vmatpush1.bf16.msra.mxu0 %v265
    %278 = vmatprep.subr.bf16.mxu0 0
    %279 = vmatpush1.bf16.msra.mxu0 %v266
    %280 = vmatprep.subr.bf16.mxu0 0
    %281 = vmatpush1.bf16.msra.mxu0 %v267
    %282 = vmatprep.subr.bf16.mxu0 0
    %283 = vmatpush1.bf16.msra.mxu0 %v268
    %284 = vmatprep.subr.bf16.mxu0 0
    %285 = vmatpush1.bf16.msra.mxu0 0
    %286 = vmatprep.subr.bf16.mxu0 0
    %287 = vmatpush1.bf16.msra.mxu0 0
    %288 = vmatprep.subr.bf16.mxu0 0
    %289 = vmatpush1.bf16.msra.mxu0 0
    %290 = vmatprep.subr.bf16.mxu0 0
    %291 = vmatpush1.bf16.msra.mxu0 0
    %292 = vmatprep.subr.bf16.mxu0 0
    %293 = vmatpush1.bf16.msra.mxu0 0
    %294 = vmatprep.subr.bf16.mxu0 0
    %295 = vmatpush1.bf16.msra.mxu0 0
    %296 = vmatprep.subr.bf16.mxu0 0
    %297 = vmatpush1.bf16.msra.mxu0 0
    %298 = vmatprep.subr.bf16.mxu0 0
    %299 = vmatpush1.bf16.msra.mxu0 0
    %300 = vmatprep.subr.bf16.mxu0 0
    %301 = vmatpush1.bf16.msra.mxu0 0
    %302 = vmatprep.subr.bf16.mxu0 0
    %303 = vmatpush1.bf16.msra.mxu0 0
    %304 = vmatprep.mubr.bf16.mxu0 0
    %305 = vmatmul.mubr.bf16.gmra.mrb[0].mxu0 %v270
    %v306 = vpop.f32.mrb[0].mxu0
    %v307 = vadd.f32 0.0, %v306
    %v308 = vpop.f32.mrb[0].mxu0
    %v309 = vpop.f32.mrb[0].mxu0
    %v310 = vpop.f32.mrb[0].mxu0
    %311 = vdwg.mxu0
    %v312 = vld [vmem:[%s9] sm:$0xff]
    %v313 = vld [vmem:[%s9 + $0x8] sm:$0xff]
    %v314 = vld [vmem:[%s9 + $0x10] sm:$0xff]
    %v315 = vld [vmem:[%s9 + $0x18] sm:$0xff]
    %v316 = vld [vmem:[%s9 + $0x20] sm:$0xff]
    %v317 = vld [vmem:[%s9 + $0x28] sm:$0xff]
    %v318 = vld [vmem:[%s9 + $0x30] sm:$0xff]
    %v319 = vld [vmem:[%s9 + $0x38] sm:$0xff]
    %v320 = vld [vmem:[%s9 + $0x40] sm:$0xff]
    %v321 = vld [vmem:[%s9 + $0x48] sm:$0xff]
    %v322 = vld [vmem:[%s9 + $0x50] sm:$0xff]
    %v323 = vld [vmem:[%s9 + $0x58] sm:$0xff]
    %v324 = vpack.c.bf16 %v245, %v245
    %v325 = vpack.c.bf16 %v313, %v312
    %v326 = vpack.c.bf16 %v315, %v314
    %v327 = vpack.c.bf16 %v317, %v316
    %v328 = vpack.c.bf16 %v319, %v318
    %v329 = vpack.c.bf16 %v321, %v320
    %v330 = vpack.c.bf16 %v323, %v322
    %v332 = vsel %vm76, %v324, 0
    %334 = vmatprep.subr.bf16.mxu0 0
    %335 = vmatpush1.bf16.msra.mxu0 %v325
    %336 = vmatprep.subr.bf16.mxu0 0
    %337 = vmatpush1.bf16.msra.mxu0 %v326
    %338 = vmatprep.subr.bf16.mxu0 0
    %339 = vmatpush1.bf16.msra.mxu0 %v327
    %340 = vmatprep.subr.bf16.mxu0 0
    %341 = vmatpush1.bf16.msra.mxu0 %v328
    %342 = vmatprep.subr.bf16.mxu0 0
    %343 = vmatpush1.bf16.msra.mxu0 %v329
    %344 = vmatprep.subr.bf16.mxu0 0
    %345 = vmatpush1.bf16.msra.mxu0 %v330
    %346 = vmatprep.subr.bf16.mxu0 0
    %347 = vmatpush1.bf16.msra.mxu0 0
    %348 = vmatprep.subr.bf16.mxu0 0
    %349 = vmatpush1.bf16.msra.mxu0 0
    %350 = vmatprep.subr.bf16.mxu0 0
    %351 = vmatpush1.bf16.msra.mxu0 0
    %352 = vmatprep.subr.bf16.mxu0 0
    %353 = vmatpush1.bf16.msra.mxu0 0
    %354 = vmatprep.subr.bf16.mxu0 0
    %355 = vmatpush1.bf16.msra.mxu0 0
    %356 = vmatprep.subr.bf16.mxu0 0
    %357 = vmatpush1.bf16.msra.mxu0 0
    %358 = vmatprep.subr.bf16.mxu0 0
    %359 = vmatpush1.bf16.msra.mxu0 0
    %360 = vmatprep.subr.bf16.mxu0 0
    %361 = vmatpush1.bf16.msra.mxu0 0
    %362 = vmatprep.subr.bf16.mxu0 0
    %363 = vmatpush1.bf16.msra.mxu0 0
    %364 = vmatprep.subr.bf16.mxu0 0
    %365 = vmatpush1.bf16.msra.mxu0 0
    %366 = vmatprep.mubr.bf16.mxu0 0
    %367 = vmatmul.mubr.bf16.gmra.mrb[0].mxu0 %v332
    %v368 = vpop.f32.mrb[0].mxu0
    %v369 = vadd.f32 0.0, %v368
    %v370 = vpop.f32.mrb[0].mxu0
    %v371 = vpop.f32.mrb[0].mxu0
    %v372 = vpop.f32.mrb[0].mxu0
    %373 = vdwg.mxu0
    %v374 = vld [vmem:[%s10] sm:$0xff]
    %v375 = vld [vmem:[%s10 + $0x8] sm:$0xff]
    %v376 = vld [vmem:[%s10 + $0x10] sm:$0xff]
    %v377 = vld [vmem:[%s10 + $0x18] sm:$0xff]
    %v378 = vld [vmem:[%s10 + $0x20] sm:$0xff]
    %v379 = vld [vmem:[%s10 + $0x28] sm:$0xff]
    %v380 = vld [vmem:[%s10 + $0x30] sm:$0xff]
    %v381 = vld [vmem:[%s10 + $0x38] sm:$0xff]
    %v382 = vld [vmem:[%s10 + $0x40] sm:$0xff]
    %v383 = vld [vmem:[%s10 + $0x48] sm:$0xff]
    %v384 = vld [vmem:[%s10 + $0x50] sm:$0xff]
    %v385 = vld [vmem:[%s10 + $0x58] sm:$0xff]
    %v386 = vpack.c.bf16 %v375, %v374
    %v387 = vpack.c.bf16 %v377, %v376
    %v388 = vpack.c.bf16 %v379, %v378
    %v389 = vpack.c.bf16 %v381, %v380
    %v390 = vpack.c.bf16 %v383, %v382
    %v391 = vpack.c.bf16 %v385, %v384
    %392 = vmatprep.subr.bf16.mxu0 0
    %393 = vmatpush1.bf16.msra.mxu0 %v386
    %394 = vmatprep.subr.bf16.mxu0 0
    %395 = vmatpush1.bf16.msra.mxu0 %v387
    %396 = vmatprep.subr.bf16.mxu0 0
    %397 = vmatpush1.bf16.msra.mxu0 %v388
    %398 = vmatprep.subr.bf16.mxu0 0
    %399 = vmatpush1.bf16.msra.mxu0 %v389
    %400 = vmatprep.subr.bf16.mxu0 0
    %401 = vmatpush1.bf16.msra.mxu0 %v390
    %402 = vmatprep.subr.bf16.mxu0 0
    %403 = vmatpush1.bf16.msra.mxu0 %v391
    %404 = vmatprep.subr.bf16.mxu0 0
    %405 = vmatpush1.bf16.msra.mxu0 0
    %406 = vmatprep.subr.bf16.mxu0 0
    %407 = vmatpush1.bf16.msra.mxu0 0
    %408 = vmatprep.subr.bf16.mxu0 0
    %409 = vmatpush1.bf16.msra.mxu0 0
    %410 = vmatprep.subr.bf16.mxu0 0
    %411 = vmatpush1.bf16.msra.mxu0 0
    %412 = vmatprep.subr.bf16.mxu0 0
    %413 = vmatpush1.bf16.msra.mxu0 0
    %414 = vmatprep.subr.bf16.mxu0 0
    %415 = vmatpush1.bf16.msra.mxu0 0
    %416 = vmatprep.subr.bf16.mxu0 0
    %417 = vmatpush1.bf16.msra.mxu0 0
    %418 = vmatprep.subr.bf16.mxu0 0
    %419 = vmatpush1.bf16.msra.mxu0 0
    %420 = vmatprep.subr.bf16.mxu0 0
    %421 = vmatpush1.bf16.msra.mxu0 0
    %422 = vmatprep.subr.bf16.mxu0 0
    %423 = vmatpush1.bf16.msra.mxu0 0
    %424 = vmatprep.mubr.bf16.mxu0 0
    %425 = vmatmul.mubr.bf16.gmra.mrb[0].mxu0 %v270
    %v426 = vpop.f32.mrb[0].mxu0
    %v427 = vadd.f32 0.0, %v426
    %v428 = vpop.f32.mrb[0].mxu0
    %v429 = vpop.f32.mrb[0].mxu0
    %v430 = vpop.f32.mrb[0].mxu0
    %431 = vdwg.mxu0
    %433 = vrot.lane.b32.xlu0 %v180, 120
    %v434 = vpop.permute.xlu0 %433
    %436 = vrot.lane.b32.xlu0 %v180, 112
    %v437 = vpop.permute.xlu0 %436
    %439 = vrot.lane.b32.xlu0 %v180, 104
    %v440 = vpop.permute.xlu0 %439
    %442 = vrot.lane.b32.xlu0 %v180, 96
    %v443 = vpop.permute.xlu0 %442
    %445 = vrot.lane.b32.xlu0 %v180, 88
    %v446 = vpop.permute.xlu0 %445
    %448 = vrot.lane.b32.xlu0 %v180, 80
    %v449 = vpop.permute.xlu0 %448
    %451 = vrot.lane.b32.xlu0 %v180, 72
    %v452 = vpop.permute.xlu0 %451
    %454 = vrot.lane.b32.xlu0 %v180, 64
    %v455 = vpop.permute.xlu0 %454
    %457 = vrot.lane.b32.xlu0 %v180, 56
    %v458 = vpop.permute.xlu0 %457
    %460 = vrot.lane.b32.xlu0 %v180, 48
    %v461 = vpop.permute.xlu0 %460
    %463 = vrot.lane.b32.xlu0 %v180, 40
    %v464 = vpop.permute.xlu0 %463
    %v466 = vcombine.low %v180, %v437
    %v467 = vcombine.high %v180, %v437
    %v469 = vunpack.c.l.s4 1983009808
    %v470 = vunpack.c.0.s8 %v469
    %v471 = vlaneseq
    %v472 = vshrl.u32 %v471, 7
    %v473 = vsub.s32 %v470, %v472
    %v474 = vrot.slane %v466, %v473
    %v476 = vunpack.c.l.s4 1983009808
    %v477 = vunpack.c.0.s8 %v476
    %v478 = vlaneseq
    %v479 = vshrl.u32 %v478, 7
    %v480 = vsub.s32 %v477, %v479
    %v481 = vrot.slane %v467, %v480
    %v482 = vcombine.low %v434, %v440
    %v483 = vcombine.high %v434, %v440
    %v485 = vunpack.c.l.s4 1983009808
    %v486 = vunpack.c.0.s8 %v485
    %v487 = vlaneseq
    %v488 = vshrl.u32 %v487, 7
    %v489 = vsub.s32 %v486, %v488
    %v490 = vrot.slane %v482, %v489
    %v492 = vunpack.c.l.s4 1983009808
    %v493 = vunpack.c.0.s8 %v492
    %v494 = vlaneseq
    %v495 = vshrl.u32 %v494, 7
    %v496 = vsub.s32 %v493, %v495
    %v497 = vrot.slane %v483, %v496
    %v498 = vcombine.low %v443, %v449
    %v499 = vcombine.high %v443, %v449
    %v501 = vunpack.c.l.s4 1983009808
    %v502 = vunpack.c.0.s8 %v501
    %v503 = vlaneseq
    %v504 = vshrl.u32 %v503, 7
    %v505 = vsub.s32 %v502, %v504
    %v506 = vrot.slane %v498, %v505
    %v508 = vunpack.c.l.s4 1983009808
    %v509 = vunpack.c.0.s8 %v508
    %v510 = vlaneseq
    %v511 = vshrl.u32 %v510, 7
    %v512 = vsub.s32 %v509, %v511
    %v513 = vrot.slane %v499, %v512
    %v514 = vcombine.low %v446, %v452
    %v515 = vcombine.high %v446, %v452
    %v517 = vunpack.c.l.s4 1983009808
    %v518 = vunpack.c.0.s8 %v517
    %v519 = vlaneseq
    %v520 = vshrl.u32 %v519, 7
    %v521 = vsub.s32 %v518, %v520
    %v522 = vrot.slane %v514, %v521
    %v524 = vunpack.c.l.s4 1983009808
    %v525 = vunpack.c.0.s8 %v524
    %v526 = vlaneseq
    %v527 = vshrl.u32 %v526, 7
    %v528 = vsub.s32 %v525, %v527
    %v529 = vrot.slane %v515, %v528
    %v530 = vcombine.low %v474, %v490
    %v531 = vcombine.high %v474, %v490
    %v533 = vunpack.c.l.s4 1934713408
    %v534 = vunpack.c.0.s8 %v533
    %v535 = vlaneseq
    %v536 = vshrl.u32 %v535, 7
    %v537 = vsub.s32 %v534, %v536
    %v538 = vrot.slane %v530, %v537
    %v540 = vunpack.c.l.s4 1934713408
    %v541 = vunpack.c.0.s8 %v540
    %v542 = vlaneseq
    %v543 = vshrl.u32 %v542, 7
    %v544 = vsub.s32 %v541, %v543
    %v545 = vrot.slane %v531, %v544
    %v546 = vcombine.low %v481, %v497
    %v547 = vcombine.high %v481, %v497
    %v549 = vunpack.c.l.s4 1934713408
    %v550 = vunpack.c.0.s8 %v549
    %v551 = vlaneseq
    %v552 = vshrl.u32 %v551, 7
    %v553 = vsub.s32 %v550, %v552
    %v554 = vrot.slane %v546, %v553
    %v556 = vunpack.c.l.s4 1934713408
    %v557 = vunpack.c.0.s8 %v556
    %v558 = vlaneseq
    %v559 = vshrl.u32 %v558, 7
    %v560 = vsub.s32 %v557, %v559
    %v561 = vrot.slane %v547, %v560
    %v562 = vcombine.low %v506, %v522
    %v563 = vcombine.high %v506, %v522
    %v565 = vunpack.c.l.s4 1934713408
    %v566 = vunpack.c.0.s8 %v565
    %v567 = vlaneseq
    %v568 = vshrl.u32 %v567, 7
    %v569 = vsub.s32 %v566, %v568
    %v570 = vrot.slane %v562, %v569
    %v572 = vunpack.c.l.s4 1934713408
    %v573 = vunpack.c.0.s8 %v572
    %v574 = vlaneseq
    %v575 = vshrl.u32 %v574, 7
    %v576 = vsub.s32 %v573, %v575
    %v577 = vrot.slane %v563, %v576
    %v578 = vcombine.low %v513, %v529
    %v579 = vcombine.high %v513, %v529
    %v581 = vunpack.c.l.s4 1934713408
    %v582 = vunpack.c.0.s8 %v581
    %v583 = vlaneseq
    %v584 = vshrl.u32 %v583, 7
    %v585 = vsub.s32 %v582, %v584
    %v586 = vrot.slane %v578, %v585
    %v588 = vunpack.c.l.s4 1934713408
    %v589 = vunpack.c.0.s8 %v588
    %v590 = vlaneseq
    %v591 = vshrl.u32 %v590, 7
    %v592 = vsub.s32 %v589, %v591
    %v593 = vrot.slane %v579, %v592
    %v594 = vcombine.low %v538, %v570
    %v595 = vcombine.high %v538, %v570
    %v596 = vcombine.low %v545, %v577
    %v597 = vcombine.high %v545, %v577
    %v598 = vcombine.low %v554, %v586
    %v599 = vcombine.high %v554, %v586
    %v600 = vcombine.low %v561, %v593
    %v601 = vcombine.high %v561, %v593
    %v602 = vcombine.low %v455, %v461
    %v603 = vcombine.high %v455, %v461
    %v605 = vunpack.c.l.s4 1983009808
    %v606 = vunpack.c.0.s8 %v605
    %v607 = vlaneseq
    %v608 = vshrl.u32 %v607, 7
    %v609 = vsub.s32 %v606, %v608
    %v610 = vrot.slane %v602, %v609
    %v612 = vunpack.c.l.s4 1983009808
    %v613 = vunpack.c.0.s8 %v612
    %v614 = vlaneseq
    %v615 = vshrl.u32 %v614, 7
    %v616 = vsub.s32 %v613, %v615
    %v617 = vrot.slane %v603, %v616
    %v618 = vcombine.low %v458, %v464
    %v619 = vcombine.high %v458, %v464
    %v621 = vunpack.c.l.s4 1983009808
    %v622 = vunpack.c.0.s8 %v621
    %v623 = vlaneseq
    %v624 = vshrl.u32 %v623, 7
    %v625 = vsub.s32 %v622, %v624
    %v626 = vrot.slane %v618, %v625
    %v628 = vunpack.c.l.s4 1983009808
    %v629 = vunpack.c.0.s8 %v628
    %v630 = vlaneseq
    %v631 = vshrl.u32 %v630, 7
    %v632 = vsub.s32 %v629, %v631
    %v633 = vrot.slane %v619, %v632
    %v634 = vcombine.low %v610, %v626
    %v635 = vcombine.high %v610, %v626
    %v637 = vunpack.c.l.s4 1934713408
    %v638 = vunpack.c.0.s8 %v637
    %v639 = vlaneseq
    %v640 = vshrl.u32 %v639, 7
    %v641 = vsub.s32 %v638, %v640
    %v642 = vrot.slane %v634, %v641
    %v644 = vunpack.c.l.s4 1934713408
    %v645 = vunpack.c.0.s8 %v644
    %v646 = vlaneseq
    %v647 = vshrl.u32 %v646, 7
    %v648 = vsub.s32 %v645, %v647
    %v649 = vrot.slane %v635, %v648
    %v650 = vcombine.low %v617, %v633
    %v651 = vcombine.high %v617, %v633
    %v653 = vunpack.c.l.s4 1934713408
    %v654 = vunpack.c.0.s8 %v653
    %v655 = vlaneseq
    %v656 = vshrl.u32 %v655, 7
    %v657 = vsub.s32 %v654, %v656
    %v658 = vrot.slane %v650, %v657
    %v660 = vunpack.c.l.s4 1934713408
    %v661 = vunpack.c.0.s8 %v660
    %v662 = vlaneseq
    %v663 = vshrl.u32 %v662, 7
    %v664 = vsub.s32 %v661, %v663
    %v665 = vrot.slane %v651, %v664
    %v666 = vcombine.high %v642, 0.0
    %v667 = vcombine.high %v649, 0.0
    %v668 = vcombine.high %v658, 0.0
    %v669 = vcombine.high %v665, 0.0
    %v670 = vcombine.low %v594, %v596
    %v671 = vcombine.high %v594, %v596
    %v673 = vunpack.c.l.s4 1983009808
    %v674 = vunpack.c.0.s8 %v673
    %v675 = vlaneseq
    %v676 = vshrl.u32 %v675, 7
    %v677 = vsub.s32 %v674, %v676
    %v678 = vrot.slane %v670, %v677
    %v680 = vunpack.c.l.s4 1983009808
    %v681 = vunpack.c.0.s8 %v680
    %v682 = vlaneseq
    %v683 = vshrl.u32 %v682, 7
    %v684 = vsub.s32 %v681, %v683
    %v685 = vrot.slane %v671, %v684
    %v686 = vcombine.low %v595, %v597
    %v687 = vcombine.high %v595, %v597
    %v689 = vunpack.c.l.s4 1983009808
    %v690 = vunpack.c.0.s8 %v689
    %v691 = vlaneseq
    %v692 = vshrl.u32 %v691, 7
    %v693 = vsub.s32 %v690, %v692
    %v694 = vrot.slane %v686, %v693
    %v696 = vunpack.c.l.s4 1983009808
    %v697 = vunpack.c.0.s8 %v696
    %v698 = vlaneseq
    %v699 = vshrl.u32 %v698, 7
    %v700 = vsub.s32 %v697, %v699
    %v701 = vrot.slane %v687, %v700
    %v702 = vcombine.low %v598, %v600
    %v703 = vcombine.high %v598, %v600
    %v705 = vunpack.c.l.s4 1983009808
    %v706 = vunpack.c.0.s8 %v705
    %v707 = vlaneseq
    %v708 = vshrl.u32 %v707, 7
    %v709 = vsub.s32 %v706, %v708
    %v710 = vrot.slane %v702, %v709
    %v712 = vunpack.c.l.s4 1983009808
    %v713 = vunpack.c.0.s8 %v712
    %v714 = vlaneseq
    %v715 = vshrl.u32 %v714, 7
    %v716 = vsub.s32 %v713, %v715
    %v717 = vrot.slane %v703, %v716
    %v718 = vcombine.low %v599, %v601
    %v719 = vcombine.high %v599, %v601
    %v721 = vunpack.c.l.s4 1983009808
    %v722 = vunpack.c.0.s8 %v721
    %v723 = vlaneseq
    %v724 = vshrl.u32 %v723, 7
    %v725 = vsub.s32 %v722, %v724
    %v726 = vrot.slane %v718, %v725
    %v728 = vunpack.c.l.s4 1983009808
    %v729 = vunpack.c.0.s8 %v728
    %v730 = vlaneseq
    %v731 = vshrl.u32 %v730, 7
    %v732 = vsub.s32 %v729, %v731
    %v733 = vrot.slane %v719, %v732
    %v734 = vcombine.low %v678, %v694
    %v735 = vcombine.high %v678, %v694
    %v737 = vunpack.c.l.s4 1934713408
    %v738 = vunpack.c.0.s8 %v737
    %v739 = vlaneseq
    %v740 = vshrl.u32 %v739, 7
    %v741 = vsub.s32 %v738, %v740
    %v742 = vrot.slane %v734, %v741
    %v744 = vunpack.c.l.s4 1934713408
    %v745 = vunpack.c.0.s8 %v744
    %v746 = vlaneseq
    %v747 = vshrl.u32 %v746, 7
    %v748 = vsub.s32 %v745, %v747
    %v749 = vrot.slane %v735, %v748
    %v750 = vcombine.low %v685, %v701
    %v751 = vcombine.high %v685, %v701
    %v753 = vunpack.c.l.s4 1934713408
    %v754 = vunpack.c.0.s8 %v753
    %v755 = vlaneseq
    %v756 = vshrl.u32 %v755, 7
    %v757 = vsub.s32 %v754, %v756
    %v758 = vrot.slane %v750, %v757
    %v760 = vunpack.c.l.s4 1934713408
    %v761 = vunpack.c.0.s8 %v760
    %v762 = vlaneseq
    %v763 = vshrl.u32 %v762, 7
    %v764 = vsub.s32 %v761, %v763
    %v765 = vrot.slane %v751, %v764
    %v766 = vcombine.low %v710, %v726
    %v767 = vcombine.high %v710, %v726
    %v769 = vunpack.c.l.s4 1934713408
    %v770 = vunpack.c.0.s8 %v769
    %v771 = vlaneseq
    %v772 = vshrl.u32 %v771, 7
    %v773 = vsub.s32 %v770, %v772
    %v774 = vrot.slane %v766, %v773
    %v776 = vunpack.c.l.s4 1934713408
    %v777 = vunpack.c.0.s8 %v776
    %v778 = vlaneseq
    %v779 = vshrl.u32 %v778, 7
    %v780 = vsub.s32 %v777, %v779
    %v781 = vrot.slane %v767, %v780
    %v782 = vcombine.low %v717, %v733
    %v783 = vcombine.high %v717, %v733
    %v785 = vunpack.c.l.s4 1934713408
    %v786 = vunpack.c.0.s8 %v785
    %v787 = vlaneseq
    %v788 = vshrl.u32 %v787, 7
    %v789 = vsub.s32 %v786, %v788
    %v790 = vrot.slane %v782, %v789
    %v792 = vunpack.c.l.s4 1934713408
    %v793 = vunpack.c.0.s8 %v792
    %v794 = vlaneseq
    %v795 = vshrl.u32 %v794, 7
    %v796 = vsub.s32 %v793, %v795
    %v797 = vrot.slane %v783, %v796
    %v798 = vcombine.low %v742, %v774
    %v799 = vcombine.high %v742, %v774
    %v800 = vcombine.low %v749, %v781
    %v801 = vcombine.high %v749, %v781
    %v802 = vcombine.low %v758, %v790
    %v803 = vcombine.high %v758, %v790
    %v804 = vcombine.low %v765, %v797
    %v805 = vcombine.high %v765, %v797
    %v806 = vcombine.low %v642, %v649
    %v808 = vunpack.c.l.s4 1983009808
    %v809 = vunpack.c.0.s8 %v808
    %v810 = vlaneseq
    %v811 = vshrl.u32 %v810, 7
    %v812 = vsub.s32 %v809, %v811
    %v813 = vrot.slane %v806, %v812
    %v814 = vcombine.low %v666, %v667
    %v816 = vunpack.c.l.s4 1983009808
    %v817 = vunpack.c.0.s8 %v816
    %v818 = vlaneseq
    %v819 = vshrl.u32 %v818, 7
    %v820 = vsub.s32 %v817, %v819
    %v821 = vrot.slane %v814, %v820
    %v822 = vcombine.low %v658, %v665
    %v824 = vunpack.c.l.s4 1983009808
    %v825 = vunpack.c.0.s8 %v824
    %v826 = vlaneseq
    %v827 = vshrl.u32 %v826, 7
    %v828 = vsub.s32 %v825, %v827
    %v829 = vrot.slane %v822, %v828
    %v830 = vcombine.low %v668, %v669
    %v832 = vunpack.c.l.s4 1983009808
    %v833 = vunpack.c.0.s8 %v832
    %v834 = vlaneseq
    %v835 = vshrl.u32 %v834, 7
    %v836 = vsub.s32 %v833, %v835
    %v837 = vrot.slane %v830, %v836
    %v838 = vcombine.low %v813, %v821
    %v839 = vcombine.high %v813, %v821
    %v841 = vunpack.c.l.s4 1934713408
    %v842 = vunpack.c.0.s8 %v841
    %v843 = vlaneseq
    %v844 = vshrl.u32 %v843, 7
    %v845 = vsub.s32 %v842, %v844
    %v846 = vrot.slane %v838, %v845
    %v848 = vunpack.c.l.s4 1934713408
    %v849 = vunpack.c.0.s8 %v848
    %v850 = vlaneseq
    %v851 = vshrl.u32 %v850, 7
    %v852 = vsub.s32 %v849, %v851
    %v853 = vrot.slane %v839, %v852
    %v854 = vcombine.low %v829, %v837
    %v855 = vcombine.high %v829, %v837
    %v857 = vunpack.c.l.s4 1934713408
    %v858 = vunpack.c.0.s8 %v857
    %v859 = vlaneseq
    %v860 = vshrl.u32 %v859, 7
    %v861 = vsub.s32 %v858, %v860
    %v862 = vrot.slane %v854, %v861
    %v864 = vunpack.c.l.s4 1934713408
    %v865 = vunpack.c.0.s8 %v864
    %v866 = vlaneseq
    %v867 = vshrl.u32 %v866, 7
    %v868 = vsub.s32 %v865, %v867
    %v869 = vrot.slane %v855, %v868
    %v870 = vcombine.low %v846, %v862
    %v871 = vcombine.high %v846, %v862
    %v872 = vcombine.low %v853, %v869
    %v873 = vcombine.high %v853, %v869
    %875 = vrot.lane.b32.xlu0 %v307, 120
    %v876 = vpop.permute.xlu0 %875
    %878 = vrot.lane.b32.xlu0 %v307, 112
    %v879 = vpop.permute.xlu0 %878
    %881 = vrot.lane.b32.xlu0 %v307, 104
    %v882 = vpop.permute.xlu0 %881
    %884 = vrot.lane.b32.xlu0 %v307, 96
    %v885 = vpop.permute.xlu0 %884
    %887 = vrot.lane.b32.xlu0 %v307, 88
    %v888 = vpop.permute.xlu0 %887
    %890 = vrot.lane.b32.xlu0 %v307, 80
    %v891 = vpop.permute.xlu0 %890
    %893 = vrot.lane.b32.xlu0 %v307, 72
    %v894 = vpop.permute.xlu0 %893
    %896 = vrot.lane.b32.xlu0 %v307, 64
    %v897 = vpop.permute.xlu0 %896
    %899 = vrot.lane.b32.xlu0 %v307, 56
    %v900 = vpop.permute.xlu0 %899
    %902 = vrot.lane.b32.xlu0 %v307, 48
    %v903 = vpop.permute.xlu0 %902
    %905 = vrot.lane.b32.xlu0 %v307, 40
    %v906 = vpop.permute.xlu0 %905
    %v908 = vcombine.low %v307, %v879
    %v909 = vcombine.high %v307, %v879
    %v911 = vunpack.c.l.s4 1983009808
    %v912 = vunpack.c.0.s8 %v911
    %v913 = vlaneseq
    %v914 = vshrl.u32 %v913, 7
    %v915 = vsub.s32 %v912, %v914
    %v916 = vrot.slane %v908, %v915
    %v918 = vunpack.c.l.s4 1983009808
    %v919 = vunpack.c.0.s8 %v918
    %v920 = vlaneseq
    %v921 = vshrl.u32 %v920, 7
    %v922 = vsub.s32 %v919, %v921
    %v923 = vrot.slane %v909, %v922
    %v924 = vcombine.low %v876, %v882
    %v925 = vcombine.high %v876, %v882
    %v927 = vunpack.c.l.s4 1983009808
    %v928 = vunpack.c.0.s8 %v927
    %v929 = vlaneseq
    %v930 = vshrl.u32 %v929, 7
    %v931 = vsub.s32 %v928, %v930
    %v932 = vrot.slane %v924, %v931
    %v934 = vunpack.c.l.s4 1983009808
    %v935 = vunpack.c.0.s8 %v934
    %v936 = vlaneseq
    %v937 = vshrl.u32 %v936, 7
    %v938 = vsub.s32 %v935, %v937
    %v939 = vrot.slane %v925, %v938
    %v940 = vcombine.low %v885, %v891
    %v941 = vcombine.high %v885, %v891
    %v943 = vunpack.c.l.s4 1983009808
    %v944 = vunpack.c.0.s8 %v943
    %v945 = vlaneseq
    %v946 = vshrl.u32 %v945, 7
    %v947 = vsub.s32 %v944, %v946
    %v948 = vrot.slane %v940, %v947
    %v950 = vunpack.c.l.s4 1983009808
    %v951 = vunpack.c.0.s8 %v950
    %v952 = vlaneseq
    %v953 = vshrl.u32 %v952, 7
    %v954 = vsub.s32 %v951, %v953
    %v955 = vrot.slane %v941, %v954
    %v956 = vcombine.low %v888, %v894
    %v957 = vcombine.high %v888, %v894
    %v959 = vunpack.c.l.s4 1983009808
    %v960 = vunpack.c.0.s8 %v959
    %v961 = vlaneseq
    %v962 = vshrl.u32 %v961, 7
    %v963 = vsub.s32 %v960, %v962
    %v964 = vrot.slane %v956, %v963
    %v966 = vunpack.c.l.s4 1983009808
    %v967 = vunpack.c.0.s8 %v966
    %v968 = vlaneseq
    %v969 = vshrl.u32 %v968, 7
    %v970 = vsub.s32 %v967, %v969
    %v971 = vrot.slane %v957, %v970
    %v972 = vcombine.low %v916, %v932
    %v973 = vcombine.high %v916, %v932
    %v975 = vunpack.c.l.s4 1934713408
    %v976 = vunpack.c.0.s8 %v975
    %v977 = vlaneseq
    %v978 = vshrl.u32 %v977, 7
    %v979 = vsub.s32 %v976, %v978
    %v980 = vrot.slane %v972, %v979
    %v982 = vunpack.c.l.s4 1934713408
    %v983 = vunpack.c.0.s8 %v982
    %v984 = vlaneseq
    %v985 = vshrl.u32 %v984, 7
    %v986 = vsub.s32 %v983, %v985
    %v987 = vrot.slane %v973, %v986
    %v988 = vcombine.low %v923, %v939
    %v989 = vcombine.high %v923, %v939
    %v991 = vunpack.c.l.s4 1934713408
    %v992 = vunpack.c.0.s8 %v991
    %v993 = vlaneseq
    %v994 = vshrl.u32 %v993, 7
    %v995 = vsub.s32 %v992, %v994
    %v996 = vrot.slane %v988, %v995
    %v998 = vunpack.c.l.s4 1934713408
    %v999 = vunpack.c.0.s8 %v998
    %v1000 = vlaneseq
    %v1001 = vshrl.u32 %v1000, 7
    %v1002 = vsub.s32 %v999, %v1001
    %v1003 = vrot.slane %v989, %v1002
    %v1004 = vcombine.low %v948, %v964
    %v1005 = vcombine.high %v948, %v964
    %v1007 = vunpack.c.l.s4 1934713408
    %v1008 = vunpack.c.0.s8 %v1007
    %v1009 = vlaneseq
    %v1010 = vshrl.u32 %v1009, 7
    %v1011 = vsub.s32 %v1008, %v1010
    %v1012 = vrot.slane %v1004, %v1011
    %v1014 = vunpack.c.l.s4 1934713408
    %v1015 = vunpack.c.0.s8 %v1014
    %v1016 = vlaneseq
    %v1017 = vshrl.u32 %v1016, 7
    %v1018 = vsub.s32 %v1015, %v1017
    %v1019 = vrot.slane %v1005, %v1018
    %v1020 = vcombine.low %v955, %v971
    %v1021 = vcombine.high %v955, %v971
    %v1023 = vunpack.c.l.s4 1934713408
    %v1024 = vunpack.c.0.s8 %v1023
    %v1025 = vlaneseq
    %v1026 = vshrl.u32 %v1025, 7
    %v1027 = vsub.s32 %v1024, %v1026
    %v1028 = vrot.slane %v1020, %v1027
    %v1030 = vunpack.c.l.s4 1934713408
    %v1031 = vunpack.c.0.s8 %v1030
    %v1032 = vlaneseq
    %v1033 = vshrl.u32 %v1032, 7
    %v1034 = vsub.s32 %v1031, %v1033
    %v1035 = vrot.slane %v1021, %v1034
    %v1036 = vcombine.low %v980, %v1012
    %v1037 = vcombine.high %v980, %v1012
    %v1038 = vcombine.low %v987, %v1019
    %v1039 = vcombine.high %v987, %v1019
    %v1040 = vcombine.low %v996, %v1028
    %v1041 = vcombine.high %v996, %v1028
    %v1042 = vcombine.low %v1003, %v1035
    %v1043 = vcombine.high %v1003, %v1035
    %v1044 = vcombine.low %v897, %v903
    %v1045 = vcombine.high %v897, %v903
    %v1047 = vunpack.c.l.s4 1983009808
    %v1048 = vunpack.c.0.s8 %v1047
    %v1049 = vlaneseq
    %v1050 = vshrl.u32 %v1049, 7
    %v1051 = vsub.s32 %v1048, %v1050
    %v1052 = vrot.slane %v1044, %v1051
    %v1054 = vunpack.c.l.s4 1983009808
    %v1055 = vunpack.c.0.s8 %v1054
    %v1056 = vlaneseq
    %v1057 = vshrl.u32 %v1056, 7
    %v1058 = vsub.s32 %v1055, %v1057
    %v1059 = vrot.slane %v1045, %v1058
    %v1060 = vcombine.low %v900, %v906
    %v1061 = vcombine.high %v900, %v906
    %v1063 = vunpack.c.l.s4 1983009808
    %v1064 = vunpack.c.0.s8 %v1063
    %v1065 = vlaneseq
    %v1066 = vshrl.u32 %v1065, 7
    %v1067 = vsub.s32 %v1064, %v1066
    %v1068 = vrot.slane %v1060, %v1067
    %v1070 = vunpack.c.l.s4 1983009808
    %v1071 = vunpack.c.0.s8 %v1070
    %v1072 = vlaneseq
    %v1073 = vshrl.u32 %v1072, 7
    %v1074 = vsub.s32 %v1071, %v1073
    %v1075 = vrot.slane %v1061, %v1074
    %v1076 = vcombine.low %v1052, %v1068
    %v1077 = vcombine.high %v1052, %v1068
    %v1079 = vunpack.c.l.s4 1934713408
    %v1080 = vunpack.c.0.s8 %v1079
    %v1081 = vlaneseq
    %v1082 = vshrl.u32 %v1081, 7
    %v1083 = vsub.s32 %v1080, %v1082
    %v1084 = vrot.slane %v1076, %v1083
    %v1086 = vunpack.c.l.s4 1934713408
    %v1087 = vunpack.c.0.s8 %v1086
    %v1088 = vlaneseq
    %v1089 = vshrl.u32 %v1088, 7
    %v1090 = vsub.s32 %v1087, %v1089
    %v1091 = vrot.slane %v1077, %v1090
    %v1092 = vcombine.low %v1059, %v1075
    %v1093 = vcombine.high %v1059, %v1075
    %v1095 = vunpack.c.l.s4 1934713408
    %v1096 = vunpack.c.0.s8 %v1095
    %v1097 = vlaneseq
    %v1098 = vshrl.u32 %v1097, 7
    %v1099 = vsub.s32 %v1096, %v1098
    %v1100 = vrot.slane %v1092, %v1099
    %v1102 = vunpack.c.l.s4 1934713408
    %v1103 = vunpack.c.0.s8 %v1102
    %v1104 = vlaneseq
    %v1105 = vshrl.u32 %v1104, 7
    %v1106 = vsub.s32 %v1103, %v1105
    %v1107 = vrot.slane %v1093, %v1106
    %v1108 = vcombine.high %v1084, 0.0
    %v1109 = vcombine.high %v1091, 0.0
    %v1110 = vcombine.high %v1100, 0.0
    %v1111 = vcombine.high %v1107, 0.0
    %v1112 = vcombine.low %v1036, %v1038
    %v1113 = vcombine.high %v1036, %v1038
    %v1115 = vunpack.c.l.s4 1983009808
    %v1116 = vunpack.c.0.s8 %v1115
    %v1117 = vlaneseq
    %v1118 = vshrl.u32 %v1117, 7
    %v1119 = vsub.s32 %v1116, %v1118
    %v1120 = vrot.slane %v1112, %v1119
    %v1122 = vunpack.c.l.s4 1983009808
    %v1123 = vunpack.c.0.s8 %v1122
    %v1124 = vlaneseq
    %v1125 = vshrl.u32 %v1124, 7
    %v1126 = vsub.s32 %v1123, %v1125
    %v1127 = vrot.slane %v1113, %v1126
    %v1128 = vcombine.low %v1037, %v1039
    %v1129 = vcombine.high %v1037, %v1039
    %v1131 = vunpack.c.l.s4 1983009808
    %v1132 = vunpack.c.0.s8 %v1131
    %v1133 = vlaneseq
    %v1134 = vshrl.u32 %v1133, 7
    %v1135 = vsub.s32 %v1132, %v1134
    %v1136 = vrot.slane %v1128, %v1135
    %v1138 = vunpack.c.l.s4 1983009808
    %v1139 = vunpack.c.0.s8 %v1138
    %v1140 = vlaneseq
    %v1141 = vshrl.u32 %v1140, 7
    %v1142 = vsub.s32 %v1139, %v1141
    %v1143 = vrot.slane %v1129, %v1142
    %v1144 = vcombine.low %v1040, %v1042
    %v1145 = vcombine.high %v1040, %v1042
    %v1147 = vunpack.c.l.s4 1983009808
    %v1148 = vunpack.c.0.s8 %v1147
    %v1149 = vlaneseq
    %v1150 = vshrl.u32 %v1149, 7
    %v1151 = vsub.s32 %v1148, %v1150
    %v1152 = vrot.slane %v1144, %v1151
    %v1154 = vunpack.c.l.s4 1983009808
    %v1155 = vunpack.c.0.s8 %v1154
    %v1156 = vlaneseq
    %v1157 = vshrl.u32 %v1156, 7
    %v1158 = vsub.s32 %v1155, %v1157
    %v1159 = vrot.slane %v1145, %v1158
    %v1160 = vcombine.low %v1041, %v1043
    %v1161 = vcombine.high %v1041, %v1043
    %v1163 = vunpack.c.l.s4 1983009808
    %v1164 = vunpack.c.0.s8 %v1163
    %v1165 = vlaneseq
    %v1166 = vshrl.u32 %v1165, 7
    %v1167 = vsub.s32 %v1164, %v1166
    %v1168 = vrot.slane %v1160, %v1167
    %v1170 = vunpack.c.l.s4 1983009808
    %v1171 = vunpack.c.0.s8 %v1170
    %v1172 = vlaneseq
    %v1173 = vshrl.u32 %v1172, 7
    %v1174 = vsub.s32 %v1171, %v1173
    %v1175 = vrot.slane %v1161, %v1174
    %v1176 = vcombine.low %v1120, %v1136
    %v1177 = vcombine.high %v1120, %v1136
    %v1179 = vunpack.c.l.s4 1934713408
    %v1180 = vunpack.c.0.s8 %v1179
    %v1181 = vlaneseq
    %v1182 = vshrl.u32 %v1181, 7
    %v1183 = vsub.s32 %v1180, %v1182
    %v1184 = vrot.slane %v1176, %v1183
    %v1186 = vunpack.c.l.s4 1934713408
    %v1187 = vunpack.c.0.s8 %v1186
    %v1188 = vlaneseq
    %v1189 = vshrl.u32 %v1188, 7
    %v1190 = vsub.s32 %v1187, %v1189
    %v1191 = vrot.slane %v1177, %v1190
    %v1192 = vcombine.low %v1127, %v1143
    %v1193 = vcombine.high %v1127, %v1143
    %v1195 = vunpack.c.l.s4 1934713408
    %v1196 = vunpack.c.0.s8 %v1195
    %v1197 = vlaneseq
    %v1198 = vshrl.u32 %v1197, 7
    %v1199 = vsub.s32 %v1196, %v1198
    %v1200 = vrot.slane %v1192, %v1199
    %v1202 = vunpack.c.l.s4 1934713408
    %v1203 = vunpack.c.0.s8 %v1202
    %v1204 = vlaneseq
    %v1205 = vshrl.u32 %v1204, 7
    %v1206 = vsub.s32 %v1203, %v1205
    %v1207 = vrot.slane %v1193, %v1206
    %v1208 = vcombine.low %v1152, %v1168
    %v1209 = vcombine.high %v1152, %v1168
    %v1211 = vunpack.c.l.s4 1934713408
    %v1212 = vunpack.c.0.s8 %v1211
    %v1213 = vlaneseq
    %v1214 = vshrl.u32 %v1213, 7
    %v1215 = vsub.s32 %v1212, %v1214
    %v1216 = vrot.slane %v1208, %v1215
    %v1218 = vunpack.c.l.s4 1934713408
    %v1219 = vunpack.c.0.s8 %v1218
    %v1220 = vlaneseq
    %v1221 = vshrl.u32 %v1220, 7
    %v1222 = vsub.s32 %v1219, %v1221
    %v1223 = vrot.slane %v1209, %v1222
    %v1224 = vcombine.low %v1159, %v1175
    %v1225 = vcombine.high %v1159, %v1175
    %v1227 = vunpack.c.l.s4 1934713408
    %v1228 = vunpack.c.0.s8 %v1227
    %v1229 = vlaneseq
    %v1230 = vshrl.u32 %v1229, 7
    %v1231 = vsub.s32 %v1228, %v1230
    %v1232 = vrot.slane %v1224, %v1231
    %v1234 = vunpack.c.l.s4 1934713408
    %v1235 = vunpack.c.0.s8 %v1234
    %v1236 = vlaneseq
    %v1237 = vshrl.u32 %v1236, 7
    %v1238 = vsub.s32 %v1235, %v1237
    %v1239 = vrot.slane %v1225, %v1238
    %v1240 = vcombine.low %v1184, %v1216
    %v1241 = vcombine.high %v1184, %v1216
    %v1242 = vcombine.low %v1191, %v1223
    %v1243 = vcombine.high %v1191, %v1223
    %v1244 = vcombine.low %v1200, %v1232
    %v1245 = vcombine.high %v1200, %v1232
    %v1246 = vcombine.low %v1207, %v1239
    %v1247 = vcombine.high %v1207, %v1239
    %v1248 = vcombine.low %v1084, %v1091
    %v1250 = vunpack.c.l.s4 1983009808
    %v1251 = vunpack.c.0.s8 %v1250
    %v1252 = vlaneseq
    %v1253 = vshrl.u32 %v1252, 7
    %v1254 = vsub.s32 %v1251, %v1253
    %v1255 = vrot.slane %v1248, %v1254
    %v1256 = vcombine.low %v1108, %v1109
    %v1258 = vunpack.c.l.s4 1983009808
    %v1259 = vunpack.c.0.s8 %v1258
    %v1260 = vlaneseq
    %v1261 = vshrl.u32 %v1260, 7
    %v1262 = vsub.s32 %v1259, %v1261
    %v1263 = vrot.slane %v1256, %v1262
    %v1264 = vcombine.low %v1100, %v1107
    %v1266 = vunpack.c.l.s4 1983009808
    %v1267 = vunpack.c.0.s8 %v1266
    %v1268 = vlaneseq
    %v1269 = vshrl.u32 %v1268, 7
    %v1270 = vsub.s32 %v1267, %v1269
    %v1271 = vrot.slane %v1264, %v1270
    %v1272 = vcombine.low %v1110, %v1111
    %v1274 = vunpack.c.l.s4 1983009808
    %v1275 = vunpack.c.0.s8 %v1274
    %v1276 = vlaneseq
    %v1277 = vshrl.u32 %v1276, 7
    %v1278 = vsub.s32 %v1275, %v1277
    %v1279 = vrot.slane %v1272, %v1278
    %v1280 = vcombine.low %v1255, %v1263
    %v1281 = vcombine.high %v1255, %v1263
    %v1283 = vunpack.c.l.s4 1934713408
    %v1284 = vunpack.c.0.s8 %v1283
    %v1285 = vlaneseq
    %v1286 = vshrl.u32 %v1285, 7
    %v1287 = vsub.s32 %v1284, %v1286
    %v1288 = vrot.slane %v1280, %v1287
    %v1290 = vunpack.c.l.s4 1934713408
    %v1291 = vunpack.c.0.s8 %v1290
    %v1292 = vlaneseq
    %v1293 = vshrl.u32 %v1292, 7
    %v1294 = vsub.s32 %v1291, %v1293
    %v1295 = vrot.slane %v1281, %v1294
    %v1296 = vcombine.low %v1271, %v1279
    %v1297 = vcombine.high %v1271, %v1279
    %v1299 = vunpack.c.l.s4 1934713408
    %v1300 = vunpack.c.0.s8 %v1299
    %v1301 = vlaneseq
    %v1302 = vshrl.u32 %v1301, 7
    %v1303 = vsub.s32 %v1300, %v1302
    %v1304 = vrot.slane %v1296, %v1303
    %v1306 = vunpack.c.l.s4 1934713408
    %v1307 = vunpack.c.0.s8 %v1306
    %v1308 = vlaneseq
    %v1309 = vshrl.u32 %v1308, 7
    %v1310 = vsub.s32 %v1307, %v1309
    %v1311 = vrot.slane %v1297, %v1310
    %v1312 = vcombine.low %v1288, %v1304
    %v1313 = vcombine.high %v1288, %v1304
    %v1314 = vcombine.low %v1295, %v1311
    %v1315 = vcombine.high %v1295, %v1311
    %1317 = vrot.lane.b32.xlu0 %v427, 120
    %v1318 = vpop.permute.xlu0 %1317
    %1320 = vrot.lane.b32.xlu0 %v427, 112
    %v1321 = vpop.permute.xlu0 %1320
    %1323 = vrot.lane.b32.xlu0 %v427, 104
    %v1324 = vpop.permute.xlu0 %1323
    %1326 = vrot.lane.b32.xlu0 %v427, 96
    %v1327 = vpop.permute.xlu0 %1326
    %1329 = vrot.lane.b32.xlu0 %v427, 88
    %v1330 = vpop.permute.xlu0 %1329
    %1332 = vrot.lane.b32.xlu0 %v427, 80
    %v1333 = vpop.permute.xlu0 %1332
    %1335 = vrot.lane.b32.xlu0 %v427, 72
    %v1336 = vpop.permute.xlu0 %1335
    %1338 = vrot.lane.b32.xlu0 %v427, 64
    %v1339 = vpop.permute.xlu0 %1338
    %1341 = vrot.lane.b32.xlu0 %v427, 56
    %v1342 = vpop.permute.xlu0 %1341
    %1344 = vrot.lane.b32.xlu0 %v427, 48
    %v1345 = vpop.permute.xlu0 %1344
    %1347 = vrot.lane.b32.xlu0 %v427, 40
    %v1348 = vpop.permute.xlu0 %1347
    %v1350 = vcombine.low %v427, %v1321
    %v1351 = vcombine.high %v427, %v1321
    %v1353 = vunpack.c.l.s4 1983009808
    %v1354 = vunpack.c.0.s8 %v1353
    %v1355 = vlaneseq
    %v1356 = vshrl.u32 %v1355, 7
    %v1357 = vsub.s32 %v1354, %v1356
    %v1358 = vrot.slane %v1350, %v1357
    %v1360 = vunpack.c.l.s4 1983009808
    %v1361 = vunpack.c.0.s8 %v1360
    %v1362 = vlaneseq
    %v1363 = vshrl.u32 %v1362, 7
    %v1364 = vsub.s32 %v1361, %v1363
    %v1365 = vrot.slane %v1351, %v1364
    %v1366 = vcombine.low %v1318, %v1324
    %v1367 = vcombine.high %v1318, %v1324
    %v1369 = vunpack.c.l.s4 1983009808
    %v1370 = vunpack.c.0.s8 %v1369
    %v1371 = vlaneseq
    %v1372 = vshrl.u32 %v1371, 7
    %v1373 = vsub.s32 %v1370, %v1372
    %v1374 = vrot.slane %v1366, %v1373
    %v1376 = vunpack.c.l.s4 1983009808
    %v1377 = vunpack.c.0.s8 %v1376
    %v1378 = vlaneseq
    %v1379 = vshrl.u32 %v1378, 7
    %v1380 = vsub.s32 %v1377, %v1379
    %v1381 = vrot.slane %v1367, %v1380
    %v1382 = vcombine.low %v1327, %v1333
    %v1383 = vcombine.high %v1327, %v1333
    %v1385 = vunpack.c.l.s4 1983009808
    %v1386 = vunpack.c.0.s8 %v1385
    %v1387 = vlaneseq
    %v1388 = vshrl.u32 %v1387, 7
    %v1389 = vsub.s32 %v1386, %v1388
    %v1390 = vrot.slane %v1382, %v1389
    %v1392 = vunpack.c.l.s4 1983009808
    %v1393 = vunpack.c.0.s8 %v1392
    %v1394 = vlaneseq
    %v1395 = vshrl.u32 %v1394, 7
    %v1396 = vsub.s32 %v1393, %v1395
    %v1397 = vrot.slane %v1383, %v1396
    %v1398 = vcombine.low %v1330, %v1336
    %v1399 = vcombine.high %v1330, %v1336
    %v1401 = vunpack.c.l.s4 1983009808
    %v1402 = vunpack.c.0.s8 %v1401
    %v1403 = vlaneseq
    %v1404 = vshrl.u32 %v1403, 7
    %v1405 = vsub.s32 %v1402, %v1404
    %v1406 = vrot.slane %v1398, %v1405
    %v1408 = vunpack.c.l.s4 1983009808
    %v1409 = vunpack.c.0.s8 %v1408
    %v1410 = vlaneseq
    %v1411 = vshrl.u32 %v1410, 7
    %v1412 = vsub.s32 %v1409, %v1411
    %v1413 = vrot.slane %v1399, %v1412
    %v1414 = vcombine.low %v1358, %v1374
    %v1415 = vcombine.high %v1358, %v1374
    %v1417 = vunpack.c.l.s4 1934713408
    %v1418 = vunpack.c.0.s8 %v1417
    %v1419 = vlaneseq
    %v1420 = vshrl.u32 %v1419, 7
    %v1421 = vsub.s32 %v1418, %v1420
    %v1422 = vrot.slane %v1414, %v1421
    %v1424 = vunpack.c.l.s4 1934713408
    %v1425 = vunpack.c.0.s8 %v1424
    %v1426 = vlaneseq
    %v1427 = vshrl.u32 %v1426, 7
    %v1428 = vsub.s32 %v1425, %v1427
    %v1429 = vrot.slane %v1415, %v1428
    %v1430 = vcombine.low %v1365, %v1381
    %v1431 = vcombine.high %v1365, %v1381
    %v1433 = vunpack.c.l.s4 1934713408
    %v1434 = vunpack.c.0.s8 %v1433
    %v1435 = vlaneseq
    %v1436 = vshrl.u32 %v1435, 7
    %v1437 = vsub.s32 %v1434, %v1436
    %v1438 = vrot.slane %v1430, %v1437
    %v1440 = vunpack.c.l.s4 1934713408
    %v1441 = vunpack.c.0.s8 %v1440
    %v1442 = vlaneseq
    %v1443 = vshrl.u32 %v1442, 7
    %v1444 = vsub.s32 %v1441, %v1443
    %v1445 = vrot.slane %v1431, %v1444
    %v1446 = vcombine.low %v1390, %v1406
    %v1447 = vcombine.high %v1390, %v1406
    %v1449 = vunpack.c.l.s4 1934713408
    %v1450 = vunpack.c.0.s8 %v1449
    %v1451 = vlaneseq
    %v1452 = vshrl.u32 %v1451, 7
    %v1453 = vsub.s32 %v1450, %v1452
    %v1454 = vrot.slane %v1446, %v1453
    %v1456 = vunpack.c.l.s4 1934713408
    %v1457 = vunpack.c.0.s8 %v1456
    %v1458 = vlaneseq
    %v1459 = vshrl.u32 %v1458, 7
    %v1460 = vsub.s32 %v1457, %v1459
    %v1461 = vrot.slane %v1447, %v1460
    %v1462 = vcombine.low %v1397, %v1413
    %v1463 = vcombine.high %v1397, %v1413
    %v1465 = vunpack.c.l.s4 1934713408
    %v1466 = vunpack.c.0.s8 %v1465
    %v1467 = vlaneseq
    %v1468 = vshrl.u32 %v1467, 7
    %v1469 = vsub.s32 %v1466, %v1468
    %v1470 = vrot.slane %v1462, %v1469
    %v1472 = vunpack.c.l.s4 1934713408
    %v1473 = vunpack.c.0.s8 %v1472
    %v1474 = vlaneseq
    %v1475 = vshrl.u32 %v1474, 7
    %v1476 = vsub.s32 %v1473, %v1475
    %v1477 = vrot.slane %v1463, %v1476
    %v1478 = vcombine.low %v1422, %v1454
    %v1479 = vcombine.high %v1422, %v1454
    %v1480 = vcombine.low %v1429, %v1461
    %v1481 = vcombine.high %v1429, %v1461
    %v1482 = vcombine.low %v1438, %v1470
    %v1483 = vcombine.high %v1438, %v1470
    %v1484 = vcombine.low %v1445, %v1477
    %v1485 = vcombine.high %v1445, %v1477
    %v1486 = vcombine.low %v1339, %v1345
    %v1487 = vcombine.high %v1339, %v1345
    %v1489 = vunpack.c.l.s4 1983009808
    %v1490 = vunpack.c.0.s8 %v1489
    %v1491 = vlaneseq
    %v1492 = vshrl.u32 %v1491, 7
    %v1493 = vsub.s32 %v1490, %v1492
    %v1494 = vrot.slane %v1486, %v1493
    %v1496 = vunpack.c.l.s4 1983009808
    %v1497 = vunpack.c.0.s8 %v1496
    %v1498 = vlaneseq
    %v1499 = vshrl.u32 %v1498, 7
    %v1500 = vsub.s32 %v1497, %v1499
    %v1501 = vrot.slane %v1487, %v1500
    %v1502 = vcombine.low %v1342, %v1348
    %v1503 = vcombine.high %v1342, %v1348
    %v1505 = vunpack.c.l.s4 1983009808
    %v1506 = vunpack.c.0.s8 %v1505
    %v1507 = vlaneseq
    %v1508 = vshrl.u32 %v1507, 7
    %v1509 = vsub.s32 %v1506, %v1508
    %v1510 = vrot.slane %v1502, %v1509
    %v1512 = vunpack.c.l.s4 1983009808
    %v1513 = vunpack.c.0.s8 %v1512
    %v1514 = vlaneseq
    %v1515 = vshrl.u32 %v1514, 7
    %v1516 = vsub.s32 %v1513, %v1515
    %v1517 = vrot.slane %v1503, %v1516
    %v1518 = vcombine.low %v1494, %v1510
    %v1519 = vcombine.high %v1494, %v1510
    %v1521 = vunpack.c.l.s4 1934713408
    %v1522 = vunpack.c.0.s8 %v1521
    %v1523 = vlaneseq
    %v1524 = vshrl.u32 %v1523, 7
    %v1525 = vsub.s32 %v1522, %v1524
    %v1526 = vrot.slane %v1518, %v1525
    %v1528 = vunpack.c.l.s4 1934713408
    %v1529 = vunpack.c.0.s8 %v1528
    %v1530 = vlaneseq
    %v1531 = vshrl.u32 %v1530, 7
    %v1532 = vsub.s32 %v1529, %v1531
    %v1533 = vrot.slane %v1519, %v1532
    %v1534 = vcombine.low %v1501, %v1517
    %v1535 = vcombine.high %v1501, %v1517
    %v1537 = vunpack.c.l.s4 1934713408
    %v1538 = vunpack.c.0.s8 %v1537
    %v1539 = vlaneseq
    %v1540 = vshrl.u32 %v1539, 7
    %v1541 = vsub.s32 %v1538, %v1540
    %v1542 = vrot.slane %v1534, %v1541
    %v1544 = vunpack.c.l.s4 1934713408
    %v1545 = vunpack.c.0.s8 %v1544
    %v1546 = vlaneseq
    %v1547 = vshrl.u32 %v1546, 7
    %v1548 = vsub.s32 %v1545, %v1547
    %v1549 = vrot.slane %v1535, %v1548
    %v1550 = vcombine.high %v1526, 0.0
    %v1551 = vcombine.high %v1533, 0.0
    %v1552 = vcombine.high %v1542, 0.0
    %v1553 = vcombine.high %v1549, 0.0
    %v1554 = vcombine.low %v1478, %v1480
    %v1555 = vcombine.high %v1478, %v1480
    %v1557 = vunpack.c.l.s4 1983009808
    %v1558 = vunpack.c.0.s8 %v1557
    %v1559 = vlaneseq
    %v1560 = vshrl.u32 %v1559, 7
    %v1561 = vsub.s32 %v1558, %v1560
    %v1562 = vrot.slane %v1554, %v1561
    %v1564 = vunpack.c.l.s4 1983009808
    %v1565 = vunpack.c.0.s8 %v1564
    %v1566 = vlaneseq
    %v1567 = vshrl.u32 %v1566, 7
    %v1568 = vsub.s32 %v1565, %v1567
    %v1569 = vrot.slane %v1555, %v1568
    %v1570 = vcombine.low %v1479, %v1481
    %v1571 = vcombine.high %v1479, %v1481
    %v1573 = vunpack.c.l.s4 1983009808
    %v1574 = vunpack.c.0.s8 %v1573
    %v1575 = vlaneseq
    %v1576 = vshrl.u32 %v1575, 7
    %v1577 = vsub.s32 %v1574, %v1576
    %v1578 = vrot.slane %v1570, %v1577
    %v1580 = vunpack.c.l.s4 1983009808
    %v1581 = vunpack.c.0.s8 %v1580
    %v1582 = vlaneseq
    %v1583 = vshrl.u32 %v1582, 7
    %v1584 = vsub.s32 %v1581, %v1583
    %v1585 = vrot.slane %v1571, %v1584
    %v1586 = vcombine.low %v1482, %v1484
    %v1587 = vcombine.high %v1482, %v1484
    %v1589 = vunpack.c.l.s4 1983009808
    %v1590 = vunpack.c.0.s8 %v1589
    %v1591 = vlaneseq
    %v1592 = vshrl.u32 %v1591, 7
    %v1593 = vsub.s32 %v1590, %v1592
    %v1594 = vrot.slane %v1586, %v1593
    %v1596 = vunpack.c.l.s4 1983009808
    %v1597 = vunpack.c.0.s8 %v1596
    %v1598 = vlaneseq
    %v1599 = vshrl.u32 %v1598, 7
    %v1600 = vsub.s32 %v1597, %v1599
    %v1601 = vrot.slane %v1587, %v1600
    %v1602 = vcombine.low %v1483, %v1485
    %v1603 = vcombine.high %v1483, %v1485
    %v1605 = vunpack.c.l.s4 1983009808
    %v1606 = vunpack.c.0.s8 %v1605
    %v1607 = vlaneseq
    %v1608 = vshrl.u32 %v1607, 7
    %v1609 = vsub.s32 %v1606, %v1608
    %v1610 = vrot.slane %v1602, %v1609
    %v1612 = vunpack.c.l.s4 1983009808
    %v1613 = vunpack.c.0.s8 %v1612
    %v1614 = vlaneseq
    %v1615 = vshrl.u32 %v1614, 7
    %v1616 = vsub.s32 %v1613, %v1615
    %v1617 = vrot.slane %v1603, %v1616
    %v1618 = vcombine.low %v1562, %v1578
    %v1619 = vcombine.high %v1562, %v1578
    %v1621 = vunpack.c.l.s4 1934713408
    %v1622 = vunpack.c.0.s8 %v1621
    %v1623 = vlaneseq
    %v1624 = vshrl.u32 %v1623, 7
    %v1625 = vsub.s32 %v1622, %v1624
    %v1626 = vrot.slane %v1618, %v1625
    %v1628 = vunpack.c.l.s4 1934713408
    %v1629 = vunpack.c.0.s8 %v1628
    %v1630 = vlaneseq
    %v1631 = vshrl.u32 %v1630, 7
    %v1632 = vsub.s32 %v1629, %v1631
    %v1633 = vrot.slane %v1619, %v1632
    %v1634 = vcombine.low %v1569, %v1585
    %v1635 = vcombine.high %v1569, %v1585
    %v1637 = vunpack.c.l.s4 1934713408
    %v1638 = vunpack.c.0.s8 %v1637
    %v1639 = vlaneseq
    %v1640 = vshrl.u32 %v1639, 7
    %v1641 = vsub.s32 %v1638, %v1640
    %v1642 = vrot.slane %v1634, %v1641
    %v1644 = vunpack.c.l.s4 1934713408
    %v1645 = vunpack.c.0.s8 %v1644
    %v1646 = vlaneseq
    %v1647 = vshrl.u32 %v1646, 7
    %v1648 = vsub.s32 %v1645, %v1647
    %v1649 = vrot.slane %v1635, %v1648
    %v1650 = vcombine.low %v1594, %v1610
    %v1651 = vcombine.high %v1594, %v1610
    %v1653 = vunpack.c.l.s4 1934713408
    %v1654 = vunpack.c.0.s8 %v1653
    %v1655 = vlaneseq
    %v1656 = vshrl.u32 %v1655, 7
    %v1657 = vsub.s32 %v1654, %v1656
    %v1658 = vrot.slane %v1650, %v1657
    %v1660 = vunpack.c.l.s4 1934713408
    %v1661 = vunpack.c.0.s8 %v1660
    %v1662 = vlaneseq
    %v1663 = vshrl.u32 %v1662, 7
    %v1664 = vsub.s32 %v1661, %v1663
    %v1665 = vrot.slane %v1651, %v1664
    %v1666 = vcombine.low %v1601, %v1617
    %v1667 = vcombine.high %v1601, %v1617
    %v1669 = vunpack.c.l.s4 1934713408
    %v1670 = vunpack.c.0.s8 %v1669
    %v1671 = vlaneseq
    %v1672 = vshrl.u32 %v1671, 7
    %v1673 = vsub.s32 %v1670, %v1672
    %v1674 = vrot.slane %v1666, %v1673
    %v1676 = vunpack.c.l.s4 1934713408
    %v1677 = vunpack.c.0.s8 %v1676
    %v1678 = vlaneseq
    %v1679 = vshrl.u32 %v1678, 7
    %v1680 = vsub.s32 %v1677, %v1679
    %v1681 = vrot.slane %v1667, %v1680
    %v1682 = vcombine.low %v1626, %v1658
    %v1683 = vcombine.high %v1626, %v1658
    %v1684 = vcombine.low %v1633, %v1665
    %v1685 = vcombine.high %v1633, %v1665
    %v1686 = vcombine.low %v1642, %v1674
    %v1687 = vcombine.high %v1642, %v1674
    %v1688 = vcombine.low %v1649, %v1681
    %v1689 = vcombine.high %v1649, %v1681
    %v1690 = vcombine.low %v1526, %v1533
    %v1692 = vunpack.c.l.s4 1983009808
    %v1693 = vunpack.c.0.s8 %v1692
    %v1694 = vlaneseq
    %v1695 = vshrl.u32 %v1694, 7
    %v1696 = vsub.s32 %v1693, %v1695
    %v1697 = vrot.slane %v1690, %v1696
    %v1698 = vcombine.low %v1550, %v1551
    %v1700 = vunpack.c.l.s4 1983009808
    %v1701 = vunpack.c.0.s8 %v1700
    %v1702 = vlaneseq
    %v1703 = vshrl.u32 %v1702, 7
    %v1704 = vsub.s32 %v1701, %v1703
    %v1705 = vrot.slane %v1698, %v1704
    %v1706 = vcombine.low %v1542, %v1549
    %v1708 = vunpack.c.l.s4 1983009808
    %v1709 = vunpack.c.0.s8 %v1708
    %v1710 = vlaneseq
    %v1711 = vshrl.u32 %v1710, 7
    %v1712 = vsub.s32 %v1709, %v1711
    %v1713 = vrot.slane %v1706, %v1712
    %v1714 = vcombine.low %v1552, %v1553
    %v1716 = vunpack.c.l.s4 1983009808
    %v1717 = vunpack.c.0.s8 %v1716
    %v1718 = vlaneseq
    %v1719 = vshrl.u32 %v1718, 7
    %v1720 = vsub.s32 %v1717, %v1719
    %v1721 = vrot.slane %v1714, %v1720
    %v1722 = vcombine.low %v1697, %v1705
    %v1723 = vcombine.high %v1697, %v1705
    %v1725 = vunpack.c.l.s4 1934713408
    %v1726 = vunpack.c.0.s8 %v1725
    %v1727 = vlaneseq
    %v1728 = vshrl.u32 %v1727, 7
    %v1729 = vsub.s32 %v1726, %v1728
    %v1730 = vrot.slane %v1722, %v1729
    %v1732 = vunpack.c.l.s4 1934713408
    %v1733 = vunpack.c.0.s8 %v1732
    %v1734 = vlaneseq
    %v1735 = vshrl.u32 %v1734, 7
    %v1736 = vsub.s32 %v1733, %v1735
    %v1737 = vrot.slane %v1723, %v1736
    %v1738 = vcombine.low %v1713, %v1721
    %v1739 = vcombine.high %v1713, %v1721
    %v1741 = vunpack.c.l.s4 1934713408
    %v1742 = vunpack.c.0.s8 %v1741
    %v1743 = vlaneseq
    %v1744 = vshrl.u32 %v1743, 7
    %v1745 = vsub.s32 %v1742, %v1744
    %v1746 = vrot.slane %v1738, %v1745
    %v1748 = vunpack.c.l.s4 1934713408
    %v1749 = vunpack.c.0.s8 %v1748
    %v1750 = vlaneseq
    %v1751 = vshrl.u32 %v1750, 7
    %v1752 = vsub.s32 %v1749, %v1751
    %v1753 = vrot.slane %v1739, %v1752
    %v1754 = vcombine.low %v1730, %v1746
    %v1755 = vcombine.high %v1730, %v1746
    %v1756 = vcombine.low %v1737, %v1753
    %v1757 = vcombine.high %v1737, %v1753
    %1759 = vrot.lane.b32.xlu0 %v369, 120
    %v1760 = vpop.permute.xlu0 %1759
    %1762 = vrot.lane.b32.xlu0 %v369, 112
    %v1763 = vpop.permute.xlu0 %1762
    %1765 = vrot.lane.b32.xlu0 %v369, 104
    %v1766 = vpop.permute.xlu0 %1765
    %1768 = vrot.lane.b32.xlu0 %v369, 96
    %v1769 = vpop.permute.xlu0 %1768
    %1771 = vrot.lane.b32.xlu0 %v369, 88
    %v1772 = vpop.permute.xlu0 %1771
    %1774 = vrot.lane.b32.xlu0 %v369, 80
    %v1775 = vpop.permute.xlu0 %1774
    %1777 = vrot.lane.b32.xlu0 %v369, 72
    %v1778 = vpop.permute.xlu0 %1777
    %1780 = vrot.lane.b32.xlu0 %v369, 64
    %v1781 = vpop.permute.xlu0 %1780
    %1783 = vrot.lane.b32.xlu0 %v369, 56
    %v1784 = vpop.permute.xlu0 %1783
    %1786 = vrot.lane.b32.xlu0 %v369, 48
    %v1787 = vpop.permute.xlu0 %1786
    %1789 = vrot.lane.b32.xlu0 %v369, 40
    %v1790 = vpop.permute.xlu0 %1789
    %v1792 = vcombine.low %v369, %v1763
    %v1793 = vcombine.high %v369, %v1763
    %v1795 = vunpack.c.l.s4 1983009808
    %v1796 = vunpack.c.0.s8 %v1795
    %v1797 = vlaneseq
    %v1798 = vshrl.u32 %v1797, 7
    %v1799 = vsub.s32 %v1796, %v1798
    %v1800 = vrot.slane %v1792, %v1799
    %v1802 = vunpack.c.l.s4 1983009808
    %v1803 = vunpack.c.0.s8 %v1802
    %v1804 = vlaneseq
    %v1805 = vshrl.u32 %v1804, 7
    %v1806 = vsub.s32 %v1803, %v1805
    %v1807 = vrot.slane %v1793, %v1806
    %v1808 = vcombine.low %v1760, %v1766
    %v1809 = vcombine.high %v1760, %v1766
    %v1811 = vunpack.c.l.s4 1983009808
    %v1812 = vunpack.c.0.s8 %v1811
    %v1813 = vlaneseq
    %v1814 = vshrl.u32 %v1813, 7
    %v1815 = vsub.s32 %v1812, %v1814
    %v1816 = vrot.slane %v1808, %v1815
    %v1818 = vunpack.c.l.s4 1983009808
    %v1819 = vunpack.c.0.s8 %v1818
    %v1820 = vlaneseq
    %v1821 = vshrl.u32 %v1820, 7
    %v1822 = vsub.s32 %v1819, %v1821
    %v1823 = vrot.slane %v1809, %v1822
    %v1824 = vcombine.low %v1769, %v1775
    %v1825 = vcombine.high %v1769, %v1775
    %v1827 = vunpack.c.l.s4 1983009808
    %v1828 = vunpack.c.0.s8 %v1827
    %v1829 = vlaneseq
    %v1830 = vshrl.u32 %v1829, 7
    %v1831 = vsub.s32 %v1828, %v1830
    %v1832 = vrot.slane %v1824, %v1831
    %v1834 = vunpack.c.l.s4 1983009808
    %v1835 = vunpack.c.0.s8 %v1834
    %v1836 = vlaneseq
    %v1837 = vshrl.u32 %v1836, 7
    %v1838 = vsub.s32 %v1835, %v1837
    %v1839 = vrot.slane %v1825, %v1838
    %v1840 = vcombine.low %v1772, %v1778
    %v1841 = vcombine.high %v1772, %v1778
    %v1843 = vunpack.c.l.s4 1983009808
    %v1844 = vunpack.c.0.s8 %v1843
    %v1845 = vlaneseq
    %v1846 = vshrl.u32 %v1845, 7
    %v1847 = vsub.s32 %v1844, %v1846
    %v1848 = vrot.slane %v1840, %v1847
    %v1850 = vunpack.c.l.s4 1983009808
    %v1851 = vunpack.c.0.s8 %v1850
    %v1852 = vlaneseq
    %v1853 = vshrl.u32 %v1852, 7
    %v1854 = vsub.s32 %v1851, %v1853
    %v1855 = vrot.slane %v1841, %v1854
    %v1856 = vcombine.low %v1800, %v1816
    %v1857 = vcombine.high %v1800, %v1816
    %v1859 = vunpack.c.l.s4 1934713408
    %v1860 = vunpack.c.0.s8 %v1859
    %v1861 = vlaneseq
    %v1862 = vshrl.u32 %v1861, 7
    %v1863 = vsub.s32 %v1860, %v1862
    %v1864 = vrot.slane %v1856, %v1863
    %v1866 = vunpack.c.l.s4 1934713408
    %v1867 = vunpack.c.0.s8 %v1866
    %v1868 = vlaneseq
    %v1869 = vshrl.u32 %v1868, 7
    %v1870 = vsub.s32 %v1867, %v1869
    %v1871 = vrot.slane %v1857, %v1870
    %v1872 = vcombine.low %v1807, %v1823
    %v1873 = vcombine.high %v1807, %v1823
    %v1875 = vunpack.c.l.s4 1934713408
    %v1876 = vunpack.c.0.s8 %v1875
    %v1877 = vlaneseq
    %v1878 = vshrl.u32 %v1877, 7
    %v1879 = vsub.s32 %v1876, %v1878
    %v1880 = vrot.slane %v1872, %v1879
    %v1882 = vunpack.c.l.s4 1934713408
    %v1883 = vunpack.c.0.s8 %v1882
    %v1884 = vlaneseq
    %v1885 = vshrl.u32 %v1884, 7
    %v1886 = vsub.s32 %v1883, %v1885
    %v1887 = vrot.slane %v1873, %v1886
    %v1888 = vcombine.low %v1832, %v1848
    %v1889 = vcombine.high %v1832, %v1848
    %v1891 = vunpack.c.l.s4 1934713408
    %v1892 = vunpack.c.0.s8 %v1891
    %v1893 = vlaneseq
    %v1894 = vshrl.u32 %v1893, 7
    %v1895 = vsub.s32 %v1892, %v1894
    %v1896 = vrot.slane %v1888, %v1895
    %v1898 = vunpack.c.l.s4 1934713408
    %v1899 = vunpack.c.0.s8 %v1898
    %v1900 = vlaneseq
    %v1901 = vshrl.u32 %v1900, 7
    %v1902 = vsub.s32 %v1899, %v1901
    %v1903 = vrot.slane %v1889, %v1902
    %v1904 = vcombine.low %v1839, %v1855
    %v1905 = vcombine.high %v1839, %v1855
    %v1907 = vunpack.c.l.s4 1934713408
    %v1908 = vunpack.c.0.s8 %v1907
    %v1909 = vlaneseq
    %v1910 = vshrl.u32 %v1909, 7
    %v1911 = vsub.s32 %v1908, %v1910
    %v1912 = vrot.slane %v1904, %v1911
    %v1914 = vunpack.c.l.s4 1934713408
    %v1915 = vunpack.c.0.s8 %v1914
    %v1916 = vlaneseq
    %v1917 = vshrl.u32 %v1916, 7
    %v1918 = vsub.s32 %v1915, %v1917
    %v1919 = vrot.slane %v1905, %v1918
    %v1920 = vcombine.low %v1864, %v1896
    %v1921 = vcombine.high %v1864, %v1896
    %v1922 = vcombine.low %v1871, %v1903
    %v1923 = vcombine.high %v1871, %v1903
    %v1924 = vcombine.low %v1880, %v1912
    %v1925 = vcombine.high %v1880, %v1912
    %v1926 = vcombine.low %v1887, %v1919
    %v1927 = vcombine.high %v1887, %v1919
    %v1928 = vcombine.low %v1781, %v1787
    %v1929 = vcombine.high %v1781, %v1787
    %v1931 = vunpack.c.l.s4 1983009808
    %v1932 = vunpack.c.0.s8 %v1931
    %v1933 = vlaneseq
    %v1934 = vshrl.u32 %v1933, 7
    %v1935 = vsub.s32 %v1932, %v1934
    %v1936 = vrot.slane %v1928, %v1935
    %v1938 = vunpack.c.l.s4 1983009808
    %v1939 = vunpack.c.0.s8 %v1938
    %v1940 = vlaneseq
    %v1941 = vshrl.u32 %v1940, 7
    %v1942 = vsub.s32 %v1939, %v1941
    %v1943 = vrot.slane %v1929, %v1942
    %v1944 = vcombine.low %v1784, %v1790
    %v1945 = vcombine.high %v1784, %v1790
    %v1947 = vunpack.c.l.s4 1983009808
    %v1948 = vunpack.c.0.s8 %v1947
    %v1949 = vlaneseq
    %v1950 = vshrl.u32 %v1949, 7
    %v1951 = vsub.s32 %v1948, %v1950
    %v1952 = vrot.slane %v1944, %v1951
    %v1954 = vunpack.c.l.s4 1983009808
    %v1955 = vunpack.c.0.s8 %v1954
    %v1956 = vlaneseq
    %v1957 = vshrl.u32 %v1956, 7
    %v1958 = vsub.s32 %v1955, %v1957
    %v1959 = vrot.slane %v1945, %v1958
    %v1960 = vcombine.low %v1936, %v1952
    %v1961 = vcombine.high %v1936, %v1952
    %v1963 = vunpack.c.l.s4 1934713408
    %v1964 = vunpack.c.0.s8 %v1963
    %v1965 = vlaneseq
    %v1966 = vshrl.u32 %v1965, 7
    %v1967 = vsub.s32 %v1964, %v1966
    %v1968 = vrot.slane %v1960, %v1967
    %v1970 = vunpack.c.l.s4 1934713408
    %v1971 = vunpack.c.0.s8 %v1970
    %v1972 = vlaneseq
    %v1973 = vshrl.u32 %v1972, 7
    %v1974 = vsub.s32 %v1971, %v1973
    %v1975 = vrot.slane %v1961, %v1974
    %v1976 = vcombine.low %v1943, %v1959
    %v1977 = vcombine.high %v1943, %v1959
    %v1979 = vunpack.c.l.s4 1934713408
    %v1980 = vunpack.c.0.s8 %v1979
    %v1981 = vlaneseq
    %v1982 = vshrl.u32 %v1981, 7
    %v1983 = vsub.s32 %v1980, %v1982
    %v1984 = vrot.slane %v1976, %v1983
    %v1986 = vunpack.c.l.s4 1934713408
    %v1987 = vunpack.c.0.s8 %v1986
    %v1988 = vlaneseq
    %v1989 = vshrl.u32 %v1988, 7
    %v1990 = vsub.s32 %v1987, %v1989
    %v1991 = vrot.slane %v1977, %v1990
    %v1992 = vcombine.high %v1968, 0.0
    %v1993 = vcombine.high %v1975, 0.0
    %v1994 = vcombine.high %v1984, 0.0
    %v1995 = vcombine.high %v1991, 0.0
    %v1996 = vcombine.low %v1920, %v1922
    %v1997 = vcombine.high %v1920, %v1922
    %v1999 = vunpack.c.l.s4 1983009808
    %v2000 = vunpack.c.0.s8 %v1999
    %v2001 = vlaneseq
    %v2002 = vshrl.u32 %v2001, 7
    %v2003 = vsub.s32 %v2000, %v2002
    %v2004 = vrot.slane %v1996, %v2003
    %v2006 = vunpack.c.l.s4 1983009808
    %v2007 = vunpack.c.0.s8 %v2006
    %v2008 = vlaneseq
    %v2009 = vshrl.u32 %v2008, 7
    %v2010 = vsub.s32 %v2007, %v2009
    %v2011 = vrot.slane %v1997, %v2010
    %v2012 = vcombine.low %v1921, %v1923
    %v2013 = vcombine.high %v1921, %v1923
    %v2015 = vunpack.c.l.s4 1983009808
    %v2016 = vunpack.c.0.s8 %v2015
    %v2017 = vlaneseq
    %v2018 = vshrl.u32 %v2017, 7
    %v2019 = vsub.s32 %v2016, %v2018
    %v2020 = vrot.slane %v2012, %v2019
    %v2022 = vunpack.c.l.s4 1983009808
    %v2023 = vunpack.c.0.s8 %v2022
    %v2024 = vlaneseq
    %v2025 = vshrl.u32 %v2024, 7
    %v2026 = vsub.s32 %v2023, %v2025
    %v2027 = vrot.slane %v2013, %v2026
    %v2028 = vcombine.low %v1924, %v1926
    %v2029 = vcombine.high %v1924, %v1926
    %v2031 = vunpack.c.l.s4 1983009808
    %v2032 = vunpack.c.0.s8 %v2031
    %v2033 = vlaneseq
    %v2034 = vshrl.u32 %v2033, 7
    %v2035 = vsub.s32 %v2032, %v2034
    %v2036 = vrot.slane %v2028, %v2035
    %v2038 = vunpack.c.l.s4 1983009808
    %v2039 = vunpack.c.0.s8 %v2038
    %v2040 = vlaneseq
    %v2041 = vshrl.u32 %v2040, 7
    %v2042 = vsub.s32 %v2039, %v2041
    %v2043 = vrot.slane %v2029, %v2042
    %v2044 = vcombine.low %v1925, %v1927
    %v2045 = vcombine.high %v1925, %v1927
    %v2047 = vunpack.c.l.s4 1983009808
    %v2048 = vunpack.c.0.s8 %v2047
    %v2049 = vlaneseq
    %v2050 = vshrl.u32 %v2049, 7
    %v2051 = vsub.s32 %v2048, %v2050
    %v2052 = vrot.slane %v2044, %v2051
    %v2054 = vunpack.c.l.s4 1983009808
    %v2055 = vunpack.c.0.s8 %v2054
    %v2056 = vlaneseq
    %v2057 = vshrl.u32 %v2056, 7
    %v2058 = vsub.s32 %v2055, %v2057
    %v2059 = vrot.slane %v2045, %v2058
    %v2060 = vcombine.low %v2004, %v2020
    %v2061 = vcombine.high %v2004, %v2020
    %v2063 = vunpack.c.l.s4 1934713408
    %v2064 = vunpack.c.0.s8 %v2063
    %v2065 = vlaneseq
    %v2066 = vshrl.u32 %v2065, 7
    %v2067 = vsub.s32 %v2064, %v2066
    %v2068 = vrot.slane %v2060, %v2067
    %v2070 = vunpack.c.l.s4 1934713408
    %v2071 = vunpack.c.0.s8 %v2070
    %v2072 = vlaneseq
    %v2073 = vshrl.u32 %v2072, 7
    %v2074 = vsub.s32 %v2071, %v2073
    %v2075 = vrot.slane %v2061, %v2074
    %v2076 = vcombine.low %v2011, %v2027
    %v2077 = vcombine.high %v2011, %v2027
    %v2079 = vunpack.c.l.s4 1934713408
    %v2080 = vunpack.c.0.s8 %v2079
    %v2081 = vlaneseq
    %v2082 = vshrl.u32 %v2081, 7
    %v2083 = vsub.s32 %v2080, %v2082
    %v2084 = vrot.slane %v2076, %v2083
    %v2086 = vunpack.c.l.s4 1934713408
    %v2087 = vunpack.c.0.s8 %v2086
    %v2088 = vlaneseq
    %v2089 = vshrl.u32 %v2088, 7
    %v2090 = vsub.s32 %v2087, %v2089
    %v2091 = vrot.slane %v2077, %v2090
    %v2092 = vcombine.low %v2036, %v2052
    %v2093 = vcombine.high %v2036, %v2052
    %v2095 = vunpack.c.l.s4 1934713408
    %v2096 = vunpack.c.0.s8 %v2095
    %v2097 = vlaneseq
    %v2098 = vshrl.u32 %v2097, 7
    %v2099 = vsub.s32 %v2096, %v2098
    %v2100 = vrot.slane %v2092, %v2099
    %v2102 = vunpack.c.l.s4 1934713408
    %v2103 = vunpack.c.0.s8 %v2102
    %v2104 = vlaneseq
    %v2105 = vshrl.u32 %v2104, 7
    %v2106 = vsub.s32 %v2103, %v2105
    %v2107 = vrot.slane %v2093, %v2106
    %v2108 = vcombine.low %v2043, %v2059
    %v2109 = vcombine.high %v2043, %v2059
    %v2111 = vunpack.c.l.s4 1934713408
    %v2112 = vunpack.c.0.s8 %v2111
    %v2113 = vlaneseq
    %v2114 = vshrl.u32 %v2113, 7
    %v2115 = vsub.s32 %v2112, %v2114
    %v2116 = vrot.slane %v2108, %v2115
    %v2118 = vunpack.c.l.s4 1934713408
    %v2119 = vunpack.c.0.s8 %v2118
    %v2120 = vlaneseq
    %v2121 = vshrl.u32 %v2120, 7
    %v2122 = vsub.s32 %v2119, %v2121
    %v2123 = vrot.slane %v2109, %v2122
    %v2124 = vcombine.low %v2068, %v2100
    %v2125 = vcombine.high %v2068, %v2100
    %v2126 = vcombine.low %v2075, %v2107
    %v2127 = vcombine.high %v2075, %v2107
    %v2128 = vcombine.low %v2084, %v2116
    %v2129 = vcombine.high %v2084, %v2116
    %v2130 = vcombine.low %v2091, %v2123
    %v2131 = vcombine.high %v2091, %v2123
    %v2132 = vcombine.low %v1968, %v1975
    %v2134 = vunpack.c.l.s4 1983009808
    %v2135 = vunpack.c.0.s8 %v2134
    %v2136 = vlaneseq
    %v2137 = vshrl.u32 %v2136, 7
    %v2138 = vsub.s32 %v2135, %v2137
    %v2139 = vrot.slane %v2132, %v2138
    %v2140 = vcombine.low %v1992, %v1993
    %v2142 = vunpack.c.l.s4 1983009808
    %v2143 = vunpack.c.0.s8 %v2142
    %v2144 = vlaneseq
    %v2145 = vshrl.u32 %v2144, 7
    %v2146 = vsub.s32 %v2143, %v2145
    %v2147 = vrot.slane %v2140, %v2146
    %v2148 = vcombine.low %v1984, %v1991
    %v2150 = vunpack.c.l.s4 1983009808
    %v2151 = vunpack.c.0.s8 %v2150
    %v2152 = vlaneseq
    %v2153 = vshrl.u32 %v2152, 7
    %v2154 = vsub.s32 %v2151, %v2153
    %v2155 = vrot.slane %v2148, %v2154
    %v2156 = vcombine.low %v1994, %v1995
    %v2158 = vunpack.c.l.s4 1983009808
    %v2159 = vunpack.c.0.s8 %v2158
    %v2160 = vlaneseq
    %v2161 = vshrl.u32 %v2160, 7
    %v2162 = vsub.s32 %v2159, %v2161
    %v2163 = vrot.slane %v2156, %v2162
    %v2164 = vcombine.low %v2139, %v2147
    %v2165 = vcombine.high %v2139, %v2147
    %v2167 = vunpack.c.l.s4 1934713408
    %v2168 = vunpack.c.0.s8 %v2167
    %v2169 = vlaneseq
    %v2170 = vshrl.u32 %v2169, 7
    %v2171 = vsub.s32 %v2168, %v2170
    %v2172 = vrot.slane %v2164, %v2171
    %v2174 = vunpack.c.l.s4 1934713408
    %v2175 = vunpack.c.0.s8 %v2174
    %v2176 = vlaneseq
    %v2177 = vshrl.u32 %v2176, 7
    %v2178 = vsub.s32 %v2175, %v2177
    %v2179 = vrot.slane %v2165, %v2178
    %v2180 = vcombine.low %v2155, %v2163
    %v2181 = vcombine.high %v2155, %v2163
    %v2183 = vunpack.c.l.s4 1934713408
    %v2184 = vunpack.c.0.s8 %v2183
    %v2185 = vlaneseq
    %v2186 = vshrl.u32 %v2185, 7
    %v2187 = vsub.s32 %v2184, %v2186
    %v2188 = vrot.slane %v2180, %v2187
    %v2190 = vunpack.c.l.s4 1934713408
    %v2191 = vunpack.c.0.s8 %v2190
    %v2192 = vlaneseq
    %v2193 = vshrl.u32 %v2192, 7
    %v2194 = vsub.s32 %v2191, %v2193
    %v2195 = vrot.slane %v2181, %v2194
    %v2196 = vcombine.low %v2172, %v2188
    %v2197 = vcombine.high %v2172, %v2188
    %v2198 = vcombine.low %v2179, %v2195
    %v2199 = vcombine.high %v2179, %v2195
    %vm2200 = vcmask 64512
    %v2202 = vsel %vm2200, %v798, 0
    %v2205 = vsel %vm2200, %v1240, 0
    %2207 = vmatprep.subr.mxu0 0.0
    %2208 = vmatpush1.xpose.msra.mxu0 %v2205
    %2209 = vmatprep.subr.mxu0 0.0
    %2210 = vmatpush1.xpose.msra.mxu0 0.0
    %2211 = vmatprep.subr.mxu0 0.0
    %2212 = vmatpush1.xpose.msra.mxu0 0.0
    %2213 = vmatprep.subr.mxu0 0.0
    %2214 = vmatpush1.xpose.msra.mxu0 0.0
    %2215 = vmatprep.subr.mxu0 0.0
    %2216 = vmatpush1.xpose.msra.mxu0 0.0
    %2217 = vmatprep.subr.mxu0 0.0
    %2218 = vmatpush1.xpose.msra.mxu0 0.0
    %2219 = vmatprep.subr.mxu0 0.0
    %2220 = vmatpush1.xpose.msra.mxu0 0.0
    %2221 = vmatprep.subr.mxu0 0.0
    %2222 = vmatpush1.xpose.msra.mxu0 0.0
    %2223 = vmatprep.subr.mxu0 0.0
    %2224 = vmatpush1.xpose.msra.mxu0 0.0
    %2225 = vmatprep.subr.mxu0 0.0
    %2226 = vmatpush1.xpose.msra.mxu0 0.0
    %2227 = vmatprep.subr.mxu0 0.0
    %2228 = vmatpush1.xpose.msra.mxu0 0.0
    %2229 = vmatprep.subr.mxu0 0.0
    %2230 = vmatpush1.xpose.msra.mxu0 0.0
    %2231 = vmatprep.subr.mxu0 0.0
    %2232 = vmatpush1.xpose.msra.mxu0 0.0
    %2233 = vmatprep.subr.mxu0 0.0
    %2234 = vmatpush1.xpose.msra.mxu0 0.0
    %2235 = vmatprep.subr.mxu0 0.0
    %2236 = vmatpush1.xpose.msra.mxu0 0.0
    %2237 = vmatprep.subr.mxu0 0.0
    %2238 = vmatpush1.xpose.msra.mxu0 0.0
    %2239 = vmatprep.subr.mxu0 0.0
    %2240 = vmatpush1.xpose.msra.mxu0 0.0
    %2241 = vmatprep.subr.mxu0 0.0
    %2242 = vmatpush1.xpose.msra.mxu0 0.0
    %2243 = vmatprep.subr.mxu0 0.0
    %2244 = vmatpush1.xpose.msra.mxu0 0.0
    %2245 = vmatprep.subr.mxu0 0.0
    %2246 = vmatpush1.xpose.msra.mxu0 0.0
    %2247 = vmatprep.subr.mxu0 0.0
    %2248 = vmatpush1.xpose.msra.mxu0 0.0
    %2249 = vmatprep.subr.mxu0 0.0
    %2250 = vmatpush1.xpose.msra.mxu0 0.0
    %2251 = vmatprep.subr.mxu0 0.0
    %2252 = vmatpush1.xpose.msra.mxu0 0.0
    %2253 = vmatprep.subr.mxu0 0.0
    %2254 = vmatpush1.xpose.msra.mxu0 0.0
    %2255 = vmatprep.subr.mxu0 0.0
    %2256 = vmatpush1.xpose.msra.mxu0 0.0
    %2257 = vmatprep.subr.mxu0 0.0
    %2258 = vmatpush1.xpose.msra.mxu0 0.0
    %2259 = vmatprep.subr.mxu0 0.0
    %2260 = vmatpush1.xpose.msra.mxu0 0.0
    %2261 = vmatprep.subr.mxu0 0.0
    %2262 = vmatpush1.xpose.msra.mxu0 0.0
    %2263 = vmatprep.subr.mxu0 0.0
    %2264 = vmatpush1.xpose.msra.mxu0 0.0
    %2265 = vmatprep.subr.mxu0 0.0
    %2266 = vmatpush1.xpose.msra.mxu0 0.0
    %2267 = vmatprep.subr.mxu0 0.0
    %2268 = vmatpush1.xpose.msra.mxu0 0.0
    %2269 = vmatprep.subr.mxu0 0.0
    %2270 = vmatpush1.xpose.msra.mxu0 0.0
    %2271 = vmatprep.mubr.f32.mxu0 0.0
    %2272 = vmatmul.mubr.f32.gmra.mrb[0].mxu0 %v2202
    %v2273 = vpop.f32.mrb[0].mxu0
    %v2274 = vadd.f32 0.0, %v2273
    %v2275 = vpop.f32.mrb[0].mxu0
    %2276 = vdwg.mxu0
    %v2278 = vsel %vm2200, %v799, 0
    %v2281 = vsel %vm2200, %v1241, 0
    %2283 = vmatprep.subr.mxu0 0.0
    %2284 = vmatpush1.xpose.msra.mxu0 %v2281
    %2285 = vmatprep.subr.mxu0 0.0
    %2286 = vmatpush1.xpose.msra.mxu0 0.0
    %2287 = vmatprep.subr.mxu0 0.0
    %2288 = vmatpush1.xpose.msra.mxu0 0.0
    %2289 = vmatprep.subr.mxu0 0.0
    %2290 = vmatpush1.xpose.msra.mxu0 0.0
    %2291 = vmatprep.subr.mxu0 0.0
    %2292 = vmatpush1.xpose.msra.mxu0 0.0
    %2293 = vmatprep.subr.mxu0 0.0
    %2294 = vmatpush1.xpose.msra.mxu0 0.0
    %2295 = vmatprep.subr.mxu0 0.0
    %2296 = vmatpush1.xpose.msra.mxu0 0.0
    %2297 = vmatprep.subr.mxu0 0.0
    %2298 = vmatpush1.xpose.msra.mxu0 0.0
    %2299 = vmatprep.subr.mxu0 0.0
    %2300 = vmatpush1.xpose.msra.mxu0 0.0
    %2301 = vmatprep.subr.mxu0 0.0
    %2302 = vmatpush1.xpose.msra.mxu0 0.0
    %2303 = vmatprep.subr.mxu0 0.0
    %2304 = vmatpush1.xpose.msra.mxu0 0.0
    %2305 = vmatprep.subr.mxu0 0.0
    %2306 = vmatpush1.xpose.msra.mxu0 0.0
    %2307 = vmatprep.subr.mxu0 0.0
    %2308 = vmatpush1.xpose.msra.mxu0 0.0
    %2309 = vmatprep.subr.mxu0 0.0
    %2310 = vmatpush1.xpose.msra.mxu0 0.0
    %2311 = vmatprep.subr.mxu0 0.0
    %2312 = vmatpush1.xpose.msra.mxu0 0.0
    %2313 = vmatprep.subr.mxu0 0.0
    %2314 = vmatpush1.xpose.msra.mxu0 0.0
    %2315 = vmatprep.subr.mxu0 0.0
    %2316 = vmatpush1.xpose.msra.mxu0 0.0
    %2317 = vmatprep.subr.mxu0 0.0
    %2318 = vmatpush1.xpose.msra.mxu0 0.0
    %2319 = vmatprep.subr.mxu0 0.0
    %2320 = vmatpush1.xpose.msra.mxu0 0.0
    %2321 = vmatprep.subr.mxu0 0.0
    %2322 = vmatpush1.xpose.msra.mxu0 0.0
    %2323 = vmatprep.subr.mxu0 0.0
    %2324 = vmatpush1.xpose.msra.mxu0 0.0
    %2325 = vmatprep.subr.mxu0 0.0
    %2326 = vmatpush1.xpose.msra.mxu0 0.0
    %2327 = vmatprep.subr.mxu0 0.0
    %2328 = vmatpush1.xpose.msra.mxu0 0.0
    %2329 = vmatprep.subr.mxu0 0.0
    %2330 = vmatpush1.xpose.msra.mxu0 0.0
    %2331 = vmatprep.subr.mxu0 0.0
    %2332 = vmatpush1.xpose.msra.mxu0 0.0
    %2333 = vmatprep.subr.mxu0 0.0
    %2334 = vmatpush1.xpose.msra.mxu0 0.0
    %2335 = vmatprep.subr.mxu0 0.0
    %2336 = vmatpush1.xpose.msra.mxu0 0.0
    %2337 = vmatprep.subr.mxu0 0.0
    %2338 = vmatpush1.xpose.msra.mxu0 0.0
    %2339 = vmatprep.subr.mxu0 0.0
    %2340 = vmatpush1.xpose.msra.mxu0 0.0
    %2341 = vmatprep.subr.mxu0 0.0
    %2342 = vmatpush1.xpose.msra.mxu0 0.0
    %2343 = vmatprep.subr.mxu0 0.0
    %2344 = vmatpush1.xpose.msra.mxu0 0.0
    %2345 = vmatprep.subr.mxu0 0.0
    %2346 = vmatpush1.xpose.msra.mxu0 0.0
    %2347 = vmatprep.mubr.f32.mxu0 0.0
    %2348 = vmatmul.mubr.f32.gmra.mrb[0].mxu0 %v2278
    %v2349 = vpop.f32.mrb[0].mxu0
    %v2350 = vadd.f32 0.0, %v2349
    %v2351 = vpop.f32.mrb[0].mxu0
    %2352 = vdwg.mxu0
    %v2354 = vsel %vm2200, %v800, 0
    %v2357 = vsel %vm2200, %v1242, 0
    %2359 = vmatprep.subr.mxu0 0.0
    %2360 = vmatpush1.xpose.msra.mxu0 %v2357
    %2361 = vmatprep.subr.mxu0 0.0
    %2362 = vmatpush1.xpose.msra.mxu0 0.0
    %2363 = vmatprep.subr.mxu0 0.0
    %2364 = vmatpush1.xpose.msra.mxu0 0.0
    %2365 = vmatprep.subr.mxu0 0.0
    %2366 = vmatpush1.xpose.msra.mxu0 0.0
    %2367 = vmatprep.subr.mxu0 0.0
    %2368 = vmatpush1.xpose.msra.mxu0 0.0
    %2369 = vmatprep.subr.mxu0 0.0
    %2370 = vmatpush1.xpose.msra.mxu0 0.0
    %2371 = vmatprep.subr.mxu0 0.0
    %2372 = vmatpush1.xpose.msra.mxu0 0.0
    %2373 = vmatprep.subr.mxu0 0.0
    %2374 = vmatpush1.xpose.msra.mxu0 0.0
    %2375 = vmatprep.subr.mxu0 0.0
    %2376 = vmatpush1.xpose.msra.mxu0 0.0
    %2377 = vmatprep.subr.mxu0 0.0
    %2378 = vmatpush1.xpose.msra.mxu0 0.0
    %2379 = vmatprep.subr.mxu0 0.0
    %2380 = vmatpush1.xpose.msra.mxu0 0.0
    %2381 = vmatprep.subr.mxu0 0.0
    %2382 = vmatpush1.xpose.msra.mxu0 0.0
    %2383 = vmatprep.subr.mxu0 0.0
    %2384 = vmatpush1.xpose.msra.mxu0 0.0
    %2385 = vmatprep.subr.mxu0 0.0
    %2386 = vmatpush1.xpose.msra.mxu0 0.0
    %2387 = vmatprep.subr.mxu0 0.0
    %2388 = vmatpush1.xpose.msra.mxu0 0.0
    %2389 = vmatprep.subr.mxu0 0.0
    %2390 = vmatpush1.xpose.msra.mxu0 0.0
    %2391 = vmatprep.subr.mxu0 0.0
    %2392 = vmatpush1.xpose.msra.mxu0 0.0
    %2393 = vmatprep.subr.mxu0 0.0
    %2394 = vmatpush1.xpose.msra.mxu0 0.0
    %2395 = vmatprep.subr.mxu0 0.0
    %2396 = vmatpush1.xpose.msra.mxu0 0.0
    %2397 = vmatprep.subr.mxu0 0.0
    %2398 = vmatpush1.xpose.msra.mxu0 0.0
    %2399 = vmatprep.subr.mxu0 0.0
    %2400 = vmatpush1.xpose.msra.mxu0 0.0
    %2401 = vmatprep.subr.mxu0 0.0
    %2402 = vmatpush1.xpose.msra.mxu0 0.0
    %2403 = vmatprep.subr.mxu0 0.0
    %2404 = vmatpush1.xpose.msra.mxu0 0.0
    %2405 = vmatprep.subr.mxu0 0.0
    %2406 = vmatpush1.xpose.msra.mxu0 0.0
    %2407 = vmatprep.subr.mxu0 0.0
    %2408 = vmatpush1.xpose.msra.mxu0 0.0
    %2409 = vmatprep.subr.mxu0 0.0
    %2410 = vmatpush1.xpose.msra.mxu0 0.0
    %2411 = vmatprep.subr.mxu0 0.0
    %2412 = vmatpush1.xpose.msra.mxu0 0.0
    %2413 = vmatprep.subr.mxu0 0.0
    %2414 = vmatpush1.xpose.msra.mxu0 0.0
    %2415 = vmatprep.subr.mxu0 0.0
    %2416 = vmatpush1.xpose.msra.mxu0 0.0
    %2417 = vmatprep.subr.mxu0 0.0
    %2418 = vmatpush1.xpose.msra.mxu0 0.0
    %2419 = vmatprep.subr.mxu0 0.0
    %2420 = vmatpush1.xpose.msra.mxu0 0.0
    %2421 = vmatprep.subr.mxu0 0.0
    %2422 = vmatpush1.xpose.msra.mxu0 0.0
    %2423 = vmatprep.mubr.f32.mxu0 0.0
    %2424 = vmatmul.mubr.f32.gmra.mrb[0].mxu0 %v2354
    %v2425 = vpop.f32.mrb[0].mxu0
    %v2426 = vadd.f32 0.0, %v2425
    %v2427 = vpop.f32.mrb[0].mxu0
    %2428 = vdwg.mxu0
    %v2430 = vsel %vm2200, %v801, 0
    %v2433 = vsel %vm2200, %v1243, 0
    %2435 = vmatprep.subr.mxu0 0.0
    %2436 = vmatpush1.xpose.msra.mxu0 %v2433
    %2437 = vmatprep.subr.mxu0 0.0
    %2438 = vmatpush1.xpose.msra.mxu0 0.0
    %2439 = vmatprep.subr.mxu0 0.0
    %2440 = vmatpush1.xpose.msra.mxu0 0.0
    %2441 = vmatprep.subr.mxu0 0.0
    %2442 = vmatpush1.xpose.msra.mxu0 0.0
    %2443 = vmatprep.subr.mxu0 0.0
    %2444 = vmatpush1.xpose.msra.mxu0 0.0
    %2445 = vmatprep.subr.mxu0 0.0
    %2446 = vmatpush1.xpose.msra.mxu0 0.0
    %2447 = vmatprep.subr.mxu0 0.0
    %2448 = vmatpush1.xpose.msra.mxu0 0.0
    %2449 = vmatprep.subr.mxu0 0.0
    %2450 = vmatpush1.xpose.msra.mxu0 0.0
    %2451 = vmatprep.subr.mxu0 0.0
    %2452 = vmatpush1.xpose.msra.mxu0 0.0
    %2453 = vmatprep.subr.mxu0 0.0
    %2454 = vmatpush1.xpose.msra.mxu0 0.0
    %2455 = vmatprep.subr.mxu0 0.0
    %2456 = vmatpush1.xpose.msra.mxu0 0.0
    %2457 = vmatprep.subr.mxu0 0.0
    %2458 = vmatpush1.xpose.msra.mxu0 0.0
    %2459 = vmatprep.subr.mxu0 0.0
    %2460 = vmatpush1.xpose.msra.mxu0 0.0
    %2461 = vmatprep.subr.mxu0 0.0
    %2462 = vmatpush1.xpose.msra.mxu0 0.0
    %2463 = vmatprep.subr.mxu0 0.0
    %2464 = vmatpush1.xpose.msra.mxu0 0.0
    %2465 = vmatprep.subr.mxu0 0.0
    %2466 = vmatpush1.xpose.msra.mxu0 0.0
    %2467 = vmatprep.subr.mxu0 0.0
    %2468 = vmatpush1.xpose.msra.mxu0 0.0
    %2469 = vmatprep.subr.mxu0 0.0
    %2470 = vmatpush1.xpose.msra.mxu0 0.0
    %2471 = vmatprep.subr.mxu0 0.0
    %2472 = vmatpush1.xpose.msra.mxu0 0.0
    %2473 = vmatprep.subr.mxu0 0.0
    %2474 = vmatpush1.xpose.msra.mxu0 0.0
    %2475 = vmatprep.subr.mxu0 0.0
    %2476 = vmatpush1.xpose.msra.mxu0 0.0
    %2477 = vmatprep.subr.mxu0 0.0
    %2478 = vmatpush1.xpose.msra.mxu0 0.0
    %2479 = vmatprep.subr.mxu0 0.0
    %2480 = vmatpush1.xpose.msra.mxu0 0.0
    %2481 = vmatprep.subr.mxu0 0.0
    %2482 = vmatpush1.xpose.msra.mxu0 0.0
    %2483 = vmatprep.subr.mxu0 0.0
    %2484 = vmatpush1.xpose.msra.mxu0 0.0
    %2485 = vmatprep.subr.mxu0 0.0
    %2486 = vmatpush1.xpose.msra.mxu0 0.0
    %2487 = vmatprep.subr.mxu0 0.0
    %2488 = vmatpush1.xpose.msra.mxu0 0.0
    %2489 = vmatprep.subr.mxu0 0.0
    %2490 = vmatpush1.xpose.msra.mxu0 0.0
    %2491 = vmatprep.subr.mxu0 0.0
    %2492 = vmatpush1.xpose.msra.mxu0 0.0
    %2493 = vmatprep.subr.mxu0 0.0
    %2494 = vmatpush1.xpose.msra.mxu0 0.0
    %2495 = vmatprep.subr.mxu0 0.0
    %2496 = vmatpush1.xpose.msra.mxu0 0.0
    %2497 = vmatprep.subr.mxu0 0.0
    %2498 = vmatpush1.xpose.msra.mxu0 0.0
    %2499 = vmatprep.mubr.f32.mxu0 0.0
    %2500 = vmatmul.mubr.f32.gmra.mrb[0].mxu0 %v2430
    %v2501 = vpop.f32.mrb[0].mxu0
    %v2502 = vadd.f32 0.0, %v2501
    %v2503 = vpop.f32.mrb[0].mxu0
    %2504 = vdwg.mxu0
    %v2506 = vsel %vm2200, %v802, 0
    %v2509 = vsel %vm2200, %v1244, 0
    %2511 = vmatprep.subr.mxu0 0.0
    %2512 = vmatpush1.xpose.msra.mxu0 %v2509
    %2513 = vmatprep.subr.mxu0 0.0
    %2514 = vmatpush1.xpose.msra.mxu0 0.0
    %2515 = vmatprep.subr.mxu0 0.0
    %2516 = vmatpush1.xpose.msra.mxu0 0.0
    %2517 = vmatprep.subr.mxu0 0.0
    %2518 = vmatpush1.xpose.msra.mxu0 0.0
    %2519 = vmatprep.subr.mxu0 0.0
    %2520 = vmatpush1.xpose.msra.mxu0 0.0
    %2521 = vmatprep.subr.mxu0 0.0
    %2522 = vmatpush1.xpose.msra.mxu0 0.0
    %2523 = vmatprep.subr.mxu0 0.0
    %2524 = vmatpush1.xpose.msra.mxu0 0.0
    %2525 = vmatprep.subr.mxu0 0.0
    %2526 = vmatpush1.xpose.msra.mxu0 0.0
    %2527 = vmatprep.subr.mxu0 0.0
    %2528 = vmatpush1.xpose.msra.mxu0 0.0
    %2529 = vmatprep.subr.mxu0 0.0
    %2530 = vmatpush1.xpose.msra.mxu0 0.0
    %2531 = vmatprep.subr.mxu0 0.0
    %2532 = vmatpush1.xpose.msra.mxu0 0.0
    %2533 = vmatprep.subr.mxu0 0.0
    %2534 = vmatpush1.xpose.msra.mxu0 0.0
    %2535 = vmatprep.subr.mxu0 0.0
    %2536 = vmatpush1.xpose.msra.mxu0 0.0
    %2537 = vmatprep.subr.mxu0 0.0
    %2538 = vmatpush1.xpose.msra.mxu0 0.0
    %2539 = vmatprep.subr.mxu0 0.0
    %2540 = vmatpush1.xpose.msra.mxu0 0.0
    %2541 = vmatprep.subr.mxu0 0.0
    %2542 = vmatpush1.xpose.msra.mxu0 0.0
    %2543 = vmatprep.subr.mxu0 0.0
    %2544 = vmatpush1.xpose.msra.mxu0 0.0
    %2545 = vmatprep.subr.mxu0 0.0
    %2546 = vmatpush1.xpose.msra.mxu0 0.0
    %2547 = vmatprep.subr.mxu0 0.0
    %2548 = vmatpush1.xpose.msra.mxu0 0.0
    %2549 = vmatprep.subr.mxu0 0.0
    %2550 = vmatpush1.xpose.msra.mxu0 0.0
    %2551 = vmatprep.subr.mxu0 0.0
    %2552 = vmatpush1.xpose.msra.mxu0 0.0
    %2553 = vmatprep.subr.mxu0 0.0
    %2554 = vmatpush1.xpose.msra.mxu0 0.0
    %2555 = vmatprep.subr.mxu0 0.0
    %2556 = vmatpush1.xpose.msra.mxu0 0.0
    %2557 = vmatprep.subr.mxu0 0.0
    %2558 = vmatpush1.xpose.msra.mxu0 0.0
    %2559 = vmatprep.subr.mxu0 0.0
    %2560 = vmatpush1.xpose.msra.mxu0 0.0
    %2561 = vmatprep.subr.mxu0 0.0
    %2562 = vmatpush1.xpose.msra.mxu0 0.0
    %2563 = vmatprep.subr.mxu0 0.0
    %2564 = vmatpush1.xpose.msra.mxu0 0.0
    %2565 = vmatprep.subr.mxu0 0.0
    %2566 = vmatpush1.xpose.msra.mxu0 0.0
    %2567 = vmatprep.subr.mxu0 0.0
    %2568 = vmatpush1.xpose.msra.mxu0 0.0
    %2569 = vmatprep.subr.mxu0 0.0
    %2570 = vmatpush1.xpose.msra.mxu0 0.0
    %2571 = vmatprep.subr.mxu0 0.0
    %2572 = vmatpush1.xpose.msra.mxu0 0.0
    %2573 = vmatprep.subr.mxu0 0.0
    %2574 = vmatpush1.xpose.msra.mxu0 0.0
    %2575 = vmatprep.mubr.f32.mxu0 0.0
    %2576 = vmatmul.mubr.f32.gmra.mrb[0].mxu0 %v2506
    %v2577 = vpop.f32.mrb[0].mxu0
    %v2578 = vadd.f32 0.0, %v2577
    %v2579 = vpop.f32.mrb[0].mxu0
    %2580 = vdwg.mxu0
    %v2582 = vsel %vm2200, %v803, 0
    %v2585 = vsel %vm2200, %v1245, 0
    %2587 = vmatprep.subr.mxu0 0.0
    %2588 = vmatpush1.xpose.msra.mxu0 %v2585
    %2589 = vmatprep.subr.mxu0 0.0
    %2590 = vmatpush1.xpose.msra.mxu0 0.0
    %2591 = vmatprep.subr.mxu0 0.0
    %2592 = vmatpush1.xpose.msra.mxu0 0.0
    %2593 = vmatprep.subr.mxu0 0.0
    %2594 = vmatpush1.xpose.msra.mxu0 0.0
    %2595 = vmatprep.subr.mxu0 0.0
    %2596 = vmatpush1.xpose.msra.mxu0 0.0
    %2597 = vmatprep.subr.mxu0 0.0
    %2598 = vmatpush1.xpose.msra.mxu0 0.0
    %2599 = vmatprep.subr.mxu0 0.0
    %2600 = vmatpush1.xpose.msra.mxu0 0.0
    %2601 = vmatprep.subr.mxu0 0.0
    %2602 = vmatpush1.xpose.msra.mxu0 0.0
    %2603 = vmatprep.subr.mxu0 0.0
    %2604 = vmatpush1.xpose.msra.mxu0 0.0
    %2605 = vmatprep.subr.mxu0 0.0
    %2606 = vmatpush1.xpose.msra.mxu0 0.0
    %2607 = vmatprep.subr.mxu0 0.0
    %2608 = vmatpush1.xpose.msra.mxu0 0.0
    %2609 = vmatprep.subr.mxu0 0.0
    %2610 = vmatpush1.xpose.msra.mxu0 0.0
    %2611 = vmatprep.subr.mxu0 0.0
    %2612 = vmatpush1.xpose.msra.mxu0 0.0
    %2613 = vmatprep.subr.mxu0 0.0
    %2614 = vmatpush1.xpose.msra.mxu0 0.0
    %2615 = vmatprep.subr.mxu0 0.0
    %2616 = vmatpush1.xpose.msra.mxu0 0.0
    %2617 = vmatprep.subr.mxu0 0.0
    %2618 = vmatpush1.xpose.msra.mxu0 0.0
    %2619 = vmatprep.subr.mxu0 0.0
    %2620 = vmatpush1.xpose.msra.mxu0 0.0
    %2621 = vmatprep.subr.mxu0 0.0
    %2622 = vmatpush1.xpose.msra.mxu0 0.0
    %2623 = vmatprep.subr.mxu0 0.0
    %2624 = vmatpush1.xpose.msra.mxu0 0.0
    %2625 = vmatprep.subr.mxu0 0.0
    %2626 = vmatpush1.xpose.msra.mxu0 0.0
    %2627 = vmatprep.subr.mxu0 0.0
    %2628 = vmatpush1.xpose.msra.mxu0 0.0
    %2629 = vmatprep.subr.mxu0 0.0
    %2630 = vmatpush1.xpose.msra.mxu0 0.0
    %2631 = vmatprep.subr.mxu0 0.0
    %2632 = vmatpush1.xpose.msra.mxu0 0.0
    %2633 = vmatprep.subr.mxu0 0.0
    %2634 = vmatpush1.xpose.msra.mxu0 0.0
    %2635 = vmatprep.subr.mxu0 0.0
    %2636 = vmatpush1.xpose.msra.mxu0 0.0
    %2637 = vmatprep.subr.mxu0 0.0
    %2638 = vmatpush1.xpose.msra.mxu0 0.0
    %2639 = vmatprep.subr.mxu0 0.0
    %2640 = vmatpush1.xpose.msra.mxu0 0.0
    %2641 = vmatprep.subr.mxu0 0.0
    %2642 = vmatpush1.xpose.msra.mxu0 0.0
    %2643 = vmatprep.subr.mxu0 0.0
    %2644 = vmatpush1.xpose.msra.mxu0 0.0
    %2645 = vmatprep.subr.mxu0 0.0
    %2646 = vmatpush1.xpose.msra.mxu0 0.0
    %2647 = vmatprep.subr.mxu0 0.0
    %2648 = vmatpush1.xpose.msra.mxu0 0.0
    %2649 = vmatprep.subr.mxu0 0.0
    %2650 = vmatpush1.xpose.msra.mxu0 0.0
    %2651 = vmatprep.mubr.f32.mxu0 0.0
    %2652 = vmatmul.mubr.f32.gmra.mrb[0].mxu0 %v2582
    %v2653 = vpop.f32.mrb[0].mxu0
    %v2654 = vadd.f32 0.0, %v2653
    %v2655 = vpop.f32.mrb[0].mxu0
    %2656 = vdwg.mxu0
    %v2658 = vsel %vm2200, %v804, 0
    %v2661 = vsel %vm2200, %v1246, 0
    %2663 = vmatprep.subr.mxu0 0.0
    %2664 = vmatpush1.xpose.msra.mxu0 %v2661
    %2665 = vmatprep.subr.mxu0 0.0
    %2666 = vmatpush1.xpose.msra.mxu0 0.0
    %2667 = vmatprep.subr.mxu0 0.0
    %2668 = vmatpush1.xpose.msra.mxu0 0.0
    %2669 = vmatprep.subr.mxu0 0.0
    %2670 = vmatpush1.xpose.msra.mxu0 0.0
    %2671 = vmatprep.subr.mxu0 0.0
    %2672 = vmatpush1.xpose.msra.mxu0 0.0
    %2673 = vmatprep.subr.mxu0 0.0
    %2674 = vmatpush1.xpose.msra.mxu0 0.0
    %2675 = vmatprep.subr.mxu0 0.0
    %2676 = vmatpush1.xpose.msra.mxu0 0.0
    %2677 = vmatprep.subr.mxu0 0.0
    %2678 = vmatpush1.xpose.msra.mxu0 0.0
    %2679 = vmatprep.subr.mxu0 0.0
    %2680 = vmatpush1.xpose.msra.mxu0 0.0
    %2681 = vmatprep.subr.mxu0 0.0
    %2682 = vmatpush1.xpose.msra.mxu0 0.0
    %2683 = vmatprep.subr.mxu0 0.0
    %2684 = vmatpush1.xpose.msra.mxu0 0.0
    %2685 = vmatprep.subr.mxu0 0.0
    %2686 = vmatpush1.xpose.msra.mxu0 0.0
    %2687 = vmatprep.subr.mxu0 0.0
    %2688 = vmatpush1.xpose.msra.mxu0 0.0
    %2689 = vmatprep.subr.mxu0 0.0
    %2690 = vmatpush1.xpose.msra.mxu0 0.0
    %2691 = vmatprep.subr.mxu0 0.0
    %2692 = vmatpush1.xpose.msra.mxu0 0.0
    %2693 = vmatprep.subr.mxu0 0.0
    %2694 = vmatpush1.xpose.msra.mxu0 0.0
    %2695 = vmatprep.subr.mxu0 0.0
    %2696 = vmatpush1.xpose.msra.mxu0 0.0
    %2697 = vmatprep.subr.mxu0 0.0
    %2698 = vmatpush1.xpose.msra.mxu0 0.0
    %2699 = vmatprep.subr.mxu0 0.0
    %2700 = vmatpush1.xpose.msra.mxu0 0.0
    %2701 = vmatprep.subr.mxu0 0.0
    %2702 = vmatpush1.xpose.msra.mxu0 0.0
    %2703 = vmatprep.subr.mxu0 0.0
    %2704 = vmatpush1.xpose.msra.mxu0 0.0
    %2705 = vmatprep.subr.mxu0 0.0
    %2706 = vmatpush1.xpose.msra.mxu0 0.0
    %2707 = vmatprep.subr.mxu0 0.0
    %2708 = vmatpush1.xpose.msra.mxu0 0.0
    %2709 = vmatprep.subr.mxu0 0.0
    %2710 = vmatpush1.xpose.msra.mxu0 0.0
    %2711 = vmatprep.subr.mxu0 0.0
    %2712 = vmatpush1.xpose.msra.mxu0 0.0
    %2713 = vmatprep.subr.mxu0 0.0
    %2714 = vmatpush1.xpose.msra.mxu0 0.0
    %2715 = vmatprep.subr.mxu0 0.0
    %2716 = vmatpush1.xpose.msra.mxu0 0.0
    %2717 = vmatprep.subr.mxu0 0.0
    %2718 = vmatpush1.xpose.msra.mxu0 0.0
    %2719 = vmatprep.subr.mxu0 0.0
    %2720 = vmatpush1.xpose.msra.mxu0 0.0
    %2721 = vmatprep.subr.mxu0 0.0
    %2722 = vmatpush1.xpose.msra.mxu0 0.0
    %2723 = vmatprep.subr.mxu0 0.0
    %2724 = vmatpush1.xpose.msra.mxu0 0.0
    %2725 = vmatprep.subr.mxu0 0.0
    %2726 = vmatpush1.xpose.msra.mxu0 0.0
    %2727 = vmatprep.mubr.f32.mxu0 0.0
    %2728 = vmatmul.mubr.f32.gmra.mrb[0].mxu0 %v2658
    %v2729 = vpop.f32.mrb[0].mxu0
    %v2730 = vadd.f32 0.0, %v2729
    %v2731 = vpop.f32.mrb[0].mxu0
    %2732 = vdwg.mxu0
    %v2734 = vsel %vm2200, %v805, 0
    %v2737 = vsel %vm2200, %v1247, 0
    %2739 = vmatprep.subr.mxu0 0.0
    %2740 = vmatpush1.xpose.msra.mxu0 %v2737
    %2741 = vmatprep.subr.mxu0 0.0
    %2742 = vmatpush1.xpose.msra.mxu0 0.0
    %2743 = vmatprep.subr.mxu0 0.0
    %2744 = vmatpush1.xpose.msra.mxu0 0.0
    %2745 = vmatprep.subr.mxu0 0.0
    %2746 = vmatpush1.xpose.msra.mxu0 0.0
    %2747 = vmatprep.subr.mxu0 0.0
    %2748 = vmatpush1.xpose.msra.mxu0 0.0
    %2749 = vmatprep.subr.mxu0 0.0
    %2750 = vmatpush1.xpose.msra.mxu0 0.0
    %2751 = vmatprep.subr.mxu0 0.0
    %2752 = vmatpush1.xpose.msra.mxu0 0.0
    %2753 = vmatprep.subr.mxu0 0.0
    %2754 = vmatpush1.xpose.msra.mxu0 0.0
    %2755 = vmatprep.subr.mxu0 0.0
    %2756 = vmatpush1.xpose.msra.mxu0 0.0
    %2757 = vmatprep.subr.mxu0 0.0
    %2758 = vmatpush1.xpose.msra.mxu0 0.0
    %2759 = vmatprep.subr.mxu0 0.0
    %2760 = vmatpush1.xpose.msra.mxu0 0.0
    %2761 = vmatprep.subr.mxu0 0.0
    %2762 = vmatpush1.xpose.msra.mxu0 0.0
    %2763 = vmatprep.subr.mxu0 0.0
    %2764 = vmatpush1.xpose.msra.mxu0 0.0
    %2765 = vmatprep.subr.mxu0 0.0
    %2766 = vmatpush1.xpose.msra.mxu0 0.0
    %2767 = vmatprep.subr.mxu0 0.0
    %2768 = vmatpush1.xpose.msra.mxu0 0.0
    %2769 = vmatprep.subr.mxu0 0.0
    %2770 = vmatpush1.xpose.msra.mxu0 0.0
    %2771 = vmatprep.subr.mxu0 0.0
    %2772 = vmatpush1.xpose.msra.mxu0 0.0
    %2773 = vmatprep.subr.mxu0 0.0
    %2774 = vmatpush1.xpose.msra.mxu0 0.0
    %2775 = vmatprep.subr.mxu0 0.0
    %2776 = vmatpush1.xpose.msra.mxu0 0.0
    %2777 = vmatprep.subr.mxu0 0.0
    %2778 = vmatpush1.xpose.msra.mxu0 0.0
    %2779 = vmatprep.subr.mxu0 0.0
    %2780 = vmatpush1.xpose.msra.mxu0 0.0
    %2781 = vmatprep.subr.mxu0 0.0
    %2782 = vmatpush1.xpose.msra.mxu0 0.0
    %2783 = vmatprep.subr.mxu0 0.0
    %2784 = vmatpush1.xpose.msra.mxu0 0.0
    %2785 = vmatprep.subr.mxu0 0.0
    %2786 = vmatpush1.xpose.msra.mxu0 0.0
    %2787 = vmatprep.subr.mxu0 0.0
    %2788 = vmatpush1.xpose.msra.mxu0 0.0
    %2789 = vmatprep.subr.mxu0 0.0
    %2790 = vmatpush1.xpose.msra.mxu0 0.0
    %2791 = vmatprep.subr.mxu0 0.0
    %2792 = vmatpush1.xpose.msra.mxu0 0.0
    %2793 = vmatprep.subr.mxu0 0.0
    %2794 = vmatpush1.xpose.msra.mxu0 0.0
    %2795 = vmatprep.subr.mxu0 0.0
    %2796 = vmatpush1.xpose.msra.mxu0 0.0
    %2797 = vmatprep.subr.mxu0 0.0
    %2798 = vmatpush1.xpose.msra.mxu0 0.0
    %2799 = vmatprep.subr.mxu0 0.0
    %2800 = vmatpush1.xpose.msra.mxu0 0.0
    %2801 = vmatprep.subr.mxu0 0.0
    %2802 = vmatpush1.xpose.msra.mxu0 0.0
    %2803 = vmatprep.mubr.f32.mxu0 0.0
    %2804 = vmatmul.mubr.f32.gmra.mrb[0].mxu0 %v2734
    %v2805 = vpop.f32.mrb[0].mxu0
    %v2806 = vadd.f32 0.0, %v2805
    %v2807 = vpop.f32.mrb[0].mxu0
    %2808 = vdwg.mxu0
    %v2810 = vsel %vm2200, %v870, 0
    %v2813 = vsel %vm2200, %v1312, 0
    %2815 = vmatprep.subr.mxu0 0.0
    %2816 = vmatpush1.xpose.msra.mxu0 %v2813
    %2817 = vmatprep.subr.mxu0 0.0
    %2818 = vmatpush1.xpose.msra.mxu0 0.0
    %2819 = vmatprep.subr.mxu0 0.0
    %2820 = vmatpush1.xpose.msra.mxu0 0.0
    %2821 = vmatprep.subr.mxu0 0.0
    %2822 = vmatpush1.xpose.msra.mxu0 0.0
    %2823 = vmatprep.subr.mxu0 0.0
    %2824 = vmatpush1.xpose.msra.mxu0 0.0
    %2825 = vmatprep.subr.mxu0 0.0
    %2826 = vmatpush1.xpose.msra.mxu0 0.0
    %2827 = vmatprep.subr.mxu0 0.0
    %2828 = vmatpush1.xpose.msra.mxu0 0.0
    %2829 = vmatprep.subr.mxu0 0.0
    %2830 = vmatpush1.xpose.msra.mxu0 0.0
    %2831 = vmatprep.subr.mxu0 0.0
    %2832 = vmatpush1.xpose.msra.mxu0 0.0
    %2833 = vmatprep.subr.mxu0 0.0
    %2834 = vmatpush1.xpose.msra.mxu0 0.0
    %2835 = vmatprep.subr.mxu0 0.0
    %2836 = vmatpush1.xpose.msra.mxu0 0.0
    %2837 = vmatprep.subr.mxu0 0.0
    %2838 = vmatpush1.xpose.msra.mxu0 0.0
    %2839 = vmatprep.subr.mxu0 0.0
    %2840 = vmatpush1.xpose.msra.mxu0 0.0
    %2841 = vmatprep.subr.mxu0 0.0
    %2842 = vmatpush1.xpose.msra.mxu0 0.0
    %2843 = vmatprep.subr.mxu0 0.0
    %2844 = vmatpush1.xpose.msra.mxu0 0.0
    %2845 = vmatprep.subr.mxu0 0.0
    %2846 = vmatpush1.xpose.msra.mxu0 0.0
    %2847 = vmatprep.subr.mxu0 0.0
    %2848 = vmatpush1.xpose.msra.mxu0 0.0
    %2849 = vmatprep.subr.mxu0 0.0
    %2850 = vmatpush1.xpose.msra.mxu0 0.0
    %2851 = vmatprep.subr.mxu0 0.0
    %2852 = vmatpush1.xpose.msra.mxu0 0.0
    %2853 = vmatprep.subr.mxu0 0.0
    %2854 = vmatpush1.xpose.msra.mxu0 0.0
    %2855 = vmatprep.subr.mxu0 0.0
    %2856 = vmatpush1.xpose.msra.mxu0 0.0
    %2857 = vmatprep.subr.mxu0 0.0
    %2858 = vmatpush1.xpose.msra.mxu0 0.0
    %2859 = vmatprep.subr.mxu0 0.0
    %2860 = vmatpush1.xpose.msra.mxu0 0.0
    %2861 = vmatprep.subr.mxu0 0.0
    %2862 = vmatpush1.xpose.msra.mxu0 0.0
    %2863 = vmatprep.subr.mxu0 0.0
    %2864 = vmatpush1.xpose.msra.mxu0 0.0
    %2865 = vmatprep.subr.mxu0 0.0
    %2866 = vmatpush1.xpose.msra.mxu0 0.0
    %2867 = vmatprep.subr.mxu0 0.0
    %2868 = vmatpush1.xpose.msra.mxu0 0.0
    %2869 = vmatprep.subr.mxu0 0.0
    %2870 = vmatpush1.xpose.msra.mxu0 0.0
    %2871 = vmatprep.subr.mxu0 0.0
    %2872 = vmatpush1.xpose.msra.mxu0 0.0
    %2873 = vmatprep.subr.mxu0 0.0
    %2874 = vmatpush1.xpose.msra.mxu0 0.0
    %2875 = vmatprep.subr.mxu0 0.0
    %2876 = vmatpush1.xpose.msra.mxu0 0.0
    %2877 = vmatprep.subr.mxu0 0.0
    %2878 = vmatpush1.xpose.msra.mxu0 0.0
    %2879 = vmatprep.mubr.f32.mxu0 0.0
    %2880 = vmatmul.mubr.f32.gmra.mrb[0].mxu0 %v2810
    %v2881 = vpop.f32.mrb[0].mxu0
    %v2882 = vadd.f32 0.0, %v2881
    %v2883 = vpop.f32.mrb[0].mxu0
    %2884 = vdwg.mxu0
    %v2886 = vsel %vm2200, %v871, 0
    %v2889 = vsel %vm2200, %v1313, 0
    %2891 = vmatprep.subr.mxu0 0.0
    %2892 = vmatpush1.xpose.msra.mxu0 %v2889
    %2893 = vmatprep.subr.mxu0 0.0
    %2894 = vmatpush1.xpose.msra.mxu0 0.0
    %2895 = vmatprep.subr.mxu0 0.0
    %2896 = vmatpush1.xpose.msra.mxu0 0.0
    %2897 = vmatprep.subr.mxu0 0.0
    %2898 = vmatpush1.xpose.msra.mxu0 0.0
    %2899 = vmatprep.subr.mxu0 0.0
    %2900 = vmatpush1.xpose.msra.mxu0 0.0
    %2901 = vmatprep.subr.mxu0 0.0
    %2902 = vmatpush1.xpose.msra.mxu0 0.0
    %2903 = vmatprep.subr.mxu0 0.0
    %2904 = vmatpush1.xpose.msra.mxu0 0.0
    %2905 = vmatprep.subr.mxu0 0.0
    %2906 = vmatpush1.xpose.msra.mxu0 0.0
    %2907 = vmatprep.subr.mxu0 0.0
    %2908 = vmatpush1.xpose.msra.mxu0 0.0
    %2909 = vmatprep.subr.mxu0 0.0
    %2910 = vmatpush1.xpose.msra.mxu0 0.0
    %2911 = vmatprep.subr.mxu0 0.0
    %2912 = vmatpush1.xpose.msra.mxu0 0.0
    %2913 = vmatprep.subr.mxu0 0.0
    %2914 = vmatpush1.xpose.msra.mxu0 0.0
    %2915 = vmatprep.subr.mxu0 0.0
    %2916 = vmatpush1.xpose.msra.mxu0 0.0
    %2917 = vmatprep.subr.mxu0 0.0
    %2918 = vmatpush1.xpose.msra.mxu0 0.0
    %2919 = vmatprep.subr.mxu0 0.0
    %2920 = vmatpush1.xpose.msra.mxu0 0.0
    %2921 = vmatprep.subr.mxu0 0.0
    %2922 = vmatpush1.xpose.msra.mxu0 0.0
    %2923 = vmatprep.subr.mxu0 0.0
    %2924 = vmatpush1.xpose.msra.mxu0 0.0
    %2925 = vmatprep.subr.mxu0 0.0
    %2926 = vmatpush1.xpose.msra.mxu0 0.0
    %2927 = vmatprep.subr.mxu0 0.0
    %2928 = vmatpush1.xpose.msra.mxu0 0.0
    %2929 = vmatprep.subr.mxu0 0.0
    %2930 = vmatpush1.xpose.msra.mxu0 0.0
    %2931 = vmatprep.subr.mxu0 0.0
    %2932 = vmatpush1.xpose.msra.mxu0 0.0
    %2933 = vmatprep.subr.mxu0 0.0
    %2934 = vmatpush1.xpose.msra.mxu0 0.0
    %2935 = vmatprep.subr.mxu0 0.0
    %2936 = vmatpush1.xpose.msra.mxu0 0.0
    %2937 = vmatprep.subr.mxu0 0.0
    %2938 = vmatpush1.xpose.msra.mxu0 0.0
    %2939 = vmatprep.subr.mxu0 0.0
    %2940 = vmatpush1.xpose.msra.mxu0 0.0
    %2941 = vmatprep.subr.mxu0 0.0
    %2942 = vmatpush1.xpose.msra.mxu0 0.0
    %2943 = vmatprep.subr.mxu0 0.0
    %2944 = vmatpush1.xpose.msra.mxu0 0.0
    %2945 = vmatprep.subr.mxu0 0.0
    %2946 = vmatpush1.xpose.msra.mxu0 0.0
    %2947 = vmatprep.subr.mxu0 0.0
    %2948 = vmatpush1.xpose.msra.mxu0 0.0
    %2949 = vmatprep.subr.mxu0 0.0
    %2950 = vmatpush1.xpose.msra.mxu0 0.0
    %2951 = vmatprep.subr.mxu0 0.0
    %2952 = vmatpush1.xpose.msra.mxu0 0.0
    %2953 = vmatprep.subr.mxu0 0.0
    %2954 = vmatpush1.xpose.msra.mxu0 0.0
    %2955 = vmatprep.mubr.f32.mxu0 0.0
    %2956 = vmatmul.mubr.f32.gmra.mrb[0].mxu0 %v2886
    %v2957 = vpop.f32.mrb[0].mxu0
    %v2958 = vadd.f32 0.0, %v2957
    %v2959 = vpop.f32.mrb[0].mxu0
    %2960 = vdwg.mxu0
    %v2962 = vsel %vm2200, %v872, 0
    %v2965 = vsel %vm2200, %v1314, 0
    %2967 = vmatprep.subr.mxu0 0.0
    %2968 = vmatpush1.xpose.msra.mxu0 %v2965
    %2969 = vmatprep.subr.mxu0 0.0
    %2970 = vmatpush1.xpose.msra.mxu0 0.0
    %2971 = vmatprep.subr.mxu0 0.0
    %2972 = vmatpush1.xpose.msra.mxu0 0.0
    %2973 = vmatprep.subr.mxu0 0.0
    %2974 = vmatpush1.xpose.msra.mxu0 0.0
    %2975 = vmatprep.subr.mxu0 0.0
    %2976 = vmatpush1.xpose.msra.mxu0 0.0
    %2977 = vmatprep.subr.mxu0 0.0
    %2978 = vmatpush1.xpose.msra.mxu0 0.0
    %2979 = vmatprep.subr.mxu0 0.0
    %2980 = vmatpush1.xpose.msra.mxu0 0.0
    %2981 = vmatprep.subr.mxu0 0.0
    %2982 = vmatpush1.xpose.msra.mxu0 0.0
    %2983 = vmatprep.subr.mxu0 0.0
    %2984 = vmatpush1.xpose.msra.mxu0 0.0
    %2985 = vmatprep.subr.mxu0 0.0
    %2986 = vmatpush1.xpose.msra.mxu0 0.0
    %2987 = vmatprep.subr.mxu0 0.0
    %2988 = vmatpush1.xpose.msra.mxu0 0.0
    %2989 = vmatprep.subr.mxu0 0.0
    %2990 = vmatpush1.xpose.msra.mxu0 0.0
    %2991 = vmatprep.subr.mxu0 0.0
    %2992 = vmatpush1.xpose.msra.mxu0 0.0
    %2993 = vmatprep.subr.mxu0 0.0
    %2994 = vmatpush1.xpose.msra.mxu0 0.0
    %2995 = vmatprep.subr.mxu0 0.0
    %2996 = vmatpush1.xpose.msra.mxu0 0.0
    %2997 = vmatprep.subr.mxu0 0.0
    %2998 = vmatpush1.xpose.msra.mxu0 0.0
    %2999 = vmatprep.subr.mxu0 0.0
    %3000 = vmatpush1.xpose.msra.mxu0 0.0
    %3001 = vmatprep.subr.mxu0 0.0
    %3002 = vmatpush1.xpose.msra.mxu0 0.0
    %3003 = vmatprep.subr.mxu0 0.0
    %3004 = vmatpush1.xpose.msra.mxu0 0.0
    %3005 = vmatprep.subr.mxu0 0.0
    %3006 = vmatpush1.xpose.msra.mxu0 0.0
    %3007 = vmatprep.subr.mxu0 0.0
    %3008 = vmatpush1.xpose.msra.mxu0 0.0
    %3009 = vmatprep.subr.mxu0 0.0
    %3010 = vmatpush1.xpose.msra.mxu0 0.0
    %3011 = vmatprep.subr.mxu0 0.0
    %3012 = vmatpush1.xpose.msra.mxu0 0.0
    %3013 = vmatprep.subr.mxu0 0.0
    %3014 = vmatpush1.xpose.msra.mxu0 0.0
    %3015 = vmatprep.subr.mxu0 0.0
    %3016 = vmatpush1.xpose.msra.mxu0 0.0
    %3017 = vmatprep.subr.mxu0 0.0
    %3018 = vmatpush1.xpose.msra.mxu0 0.0
    %3019 = vmatprep.subr.mxu0 0.0
    %3020 = vmatpush1.xpose.msra.mxu0 0.0
    %3021 = vmatprep.subr.mxu0 0.0
    %3022 = vmatpush1.xpose.msra.mxu0 0.0
    %3023 = vmatprep.subr.mxu0 0.0
    %3024 = vmatpush1.xpose.msra.mxu0 0.0
    %3025 = vmatprep.subr.mxu0 0.0
    %3026 = vmatpush1.xpose.msra.mxu0 0.0
    %3027 = vmatprep.subr.mxu0 0.0
    %3028 = vmatpush1.xpose.msra.mxu0 0.0
    %3029 = vmatprep.subr.mxu0 0.0
    %3030 = vmatpush1.xpose.msra.mxu0 0.0
    %3031 = vmatprep.mubr.f32.mxu0 0.0
    %3032 = vmatmul.mubr.f32.gmra.mrb[0].mxu0 %v2962
    %v3033 = vpop.f32.mrb[0].mxu0
    %v3034 = vadd.f32 0.0, %v3033
    %v3035 = vpop.f32.mrb[0].mxu0
    %3036 = vdwg.mxu0
    %v3038 = vsel %vm2200, %v873, 0
    %v3041 = vsel %vm2200, %v1315, 0
    %3043 = vmatprep.subr.mxu0 0.0
    %3044 = vmatpush1.xpose.msra.mxu0 %v3041
    %3045 = vmatprep.subr.mxu0 0.0
    %3046 = vmatpush1.xpose.msra.mxu0 0.0
    %3047 = vmatprep.subr.mxu0 0.0
    %3048 = vmatpush1.xpose.msra.mxu0 0.0
    %3049 = vmatprep.subr.mxu0 0.0
    %3050 = vmatpush1.xpose.msra.mxu0 0.0
    %3051 = vmatprep.subr.mxu0 0.0
    %3052 = vmatpush1.xpose.msra.mxu0 0.0
    %3053 = vmatprep.subr.mxu0 0.0
    %3054 = vmatpush1.xpose.msra.mxu0 0.0
    %3055 = vmatprep.subr.mxu0 0.0
    %3056 = vmatpush1.xpose.msra.mxu0 0.0
    %3057 = vmatprep.subr.mxu0 0.0
    %3058 = vmatpush1.xpose.msra.mxu0 0.0
    %3059 = vmatprep.subr.mxu0 0.0
    %3060 = vmatpush1.xpose.msra.mxu0 0.0
    %3061 = vmatprep.subr.mxu0 0.0
    %3062 = vmatpush1.xpose.msra.mxu0 0.0
    %3063 = vmatprep.subr.mxu0 0.0
    %3064 = vmatpush1.xpose.msra.mxu0 0.0
    %3065 = vmatprep.subr.mxu0 0.0
    %3066 = vmatpush1.xpose.msra.mxu0 0.0
    %3067 = vmatprep.subr.mxu0 0.0
    %3068 = vmatpush1.xpose.msra.mxu0 0.0
    %3069 = vmatprep.subr.mxu0 0.0
    %3070 = vmatpush1.xpose.msra.mxu0 0.0
    %3071 = vmatprep.subr.mxu0 0.0
    %3072 = vmatpush1.xpose.msra.mxu0 0.0
    %3073 = vmatprep.subr.mxu0 0.0
    %3074 = vmatpush1.xpose.msra.mxu0 0.0
    %3075 = vmatprep.subr.mxu0 0.0
    %3076 = vmatpush1.xpose.msra.mxu0 0.0
    %3077 = vmatprep.subr.mxu0 0.0
    %3078 = vmatpush1.xpose.msra.mxu0 0.0
    %3079 = vmatprep.subr.mxu0 0.0
    %3080 = vmatpush1.xpose.msra.mxu0 0.0
    %3081 = vmatprep.subr.mxu0 0.0
    %3082 = vmatpush1.xpose.msra.mxu0 0.0
    %3083 = vmatprep.subr.mxu0 0.0
    %3084 = vmatpush1.xpose.msra.mxu0 0.0
    %3085 = vmatprep.subr.mxu0 0.0
    %3086 = vmatpush1.xpose.msra.mxu0 0.0
    %3087 = vmatprep.subr.mxu0 0.0
    %3088 = vmatpush1.xpose.msra.mxu0 0.0
    %3089 = vmatprep.subr.mxu0 0.0
    %3090 = vmatpush1.xpose.msra.mxu0 0.0
    %3091 = vmatprep.subr.mxu0 0.0
    %3092 = vmatpush1.xpose.msra.mxu0 0.0
    %3093 = vmatprep.subr.mxu0 0.0
    %3094 = vmatpush1.xpose.msra.mxu0 0.0
    %3095 = vmatprep.subr.mxu0 0.0
    %3096 = vmatpush1.xpose.msra.mxu0 0.0
    %3097 = vmatprep.subr.mxu0 0.0
    %3098 = vmatpush1.xpose.msra.mxu0 0.0
    %3099 = vmatprep.subr.mxu0 0.0
    %3100 = vmatpush1.xpose.msra.mxu0 0.0
    %3101 = vmatprep.subr.mxu0 0.0
    %3102 = vmatpush1.xpose.msra.mxu0 0.0
    %3103 = vmatprep.subr.mxu0 0.0
    %3104 = vmatpush1.xpose.msra.mxu0 0.0
    %3105 = vmatprep.subr.mxu0 0.0
    %3106 = vmatpush1.xpose.msra.mxu0 0.0
    %3107 = vmatprep.mubr.f32.mxu0 0.0
    %3108 = vmatmul.mubr.f32.gmra.mrb[0].mxu0 %v3038
    %v3109 = vpop.f32.mrb[0].mxu0
    %v3110 = vadd.f32 0.0, %v3109
    %v3111 = vpop.f32.mrb[0].mxu0
    %3112 = vdwg.mxu0
    %v3114 = vsel %vm2200, %v1682, 0
    %3116 = vmatprep.subr.mxu0 0.0
    %3117 = vmatpush1.xpose.msra.mxu0 %v3114
    %3118 = vmatprep.subr.mxu0 0.0
    %3119 = vmatpush1.xpose.msra.mxu0 0.0
    %3120 = vmatprep.subr.mxu0 0.0
    %3121 = vmatpush1.xpose.msra.mxu0 0.0
    %3122 = vmatprep.subr.mxu0 0.0
    %3123 = vmatpush1.xpose.msra.mxu0 0.0
    %3124 = vmatprep.subr.mxu0 0.0
    %3125 = vmatpush1.xpose.msra.mxu0 0.0
    %3126 = vmatprep.subr.mxu0 0.0
    %3127 = vmatpush1.xpose.msra.mxu0 0.0
    %3128 = vmatprep.subr.mxu0 0.0
    %3129 = vmatpush1.xpose.msra.mxu0 0.0
    %3130 = vmatprep.subr.mxu0 0.0
    %3131 = vmatpush1.xpose.msra.mxu0 0.0
    %3132 = vmatprep.subr.mxu0 0.0
    %3133 = vmatpush1.xpose.msra.mxu0 0.0
    %3134 = vmatprep.subr.mxu0 0.0
    %3135 = vmatpush1.xpose.msra.mxu0 0.0
    %3136 = vmatprep.subr.mxu0 0.0
    %3137 = vmatpush1.xpose.msra.mxu0 0.0
    %3138 = vmatprep.subr.mxu0 0.0
    %3139 = vmatpush1.xpose.msra.mxu0 0.0
    %3140 = vmatprep.subr.mxu0 0.0
    %3141 = vmatpush1.xpose.msra.mxu0 0.0
    %3142 = vmatprep.subr.mxu0 0.0
    %3143 = vmatpush1.xpose.msra.mxu0 0.0
    %3144 = vmatprep.subr.mxu0 0.0
    %3145 = vmatpush1.xpose.msra.mxu0 0.0
    %3146 = vmatprep.subr.mxu0 0.0
    %3147 = vmatpush1.xpose.msra.mxu0 0.0
    %3148 = vmatprep.subr.mxu0 0.0
    %3149 = vmatpush1.xpose.msra.mxu0 0.0
    %3150 = vmatprep.subr.mxu0 0.0
    %3151 = vmatpush1.xpose.msra.mxu0 0.0
    %3152 = vmatprep.subr.mxu0 0.0
    %3153 = vmatpush1.xpose.msra.mxu0 0.0
    %3154 = vmatprep.subr.mxu0 0.0
    %3155 = vmatpush1.xpose.msra.mxu0 0.0
    %3156 = vmatprep.subr.mxu0 0.0
    %3157 = vmatpush1.xpose.msra.mxu0 0.0
    %3158 = vmatprep.subr.mxu0 0.0
    %3159 = vmatpush1.xpose.msra.mxu0 0.0
    %3160 = vmatprep.subr.mxu0 0.0
    %3161 = vmatpush1.xpose.msra.mxu0 0.0
    %3162 = vmatprep.subr.mxu0 0.0
    %3163 = vmatpush1.xpose.msra.mxu0 0.0
    %3164 = vmatprep.subr.mxu0 0.0
    %3165 = vmatpush1.xpose.msra.mxu0 0.0
    %3166 = vmatprep.subr.mxu0 0.0
    %3167 = vmatpush1.xpose.msra.mxu0 0.0
    %3168 = vmatprep.subr.mxu0 0.0
    %3169 = vmatpush1.xpose.msra.mxu0 0.0
    %3170 = vmatprep.subr.mxu0 0.0
    %3171 = vmatpush1.xpose.msra.mxu0 0.0
    %3172 = vmatprep.subr.mxu0 0.0
    %3173 = vmatpush1.xpose.msra.mxu0 0.0
    %3174 = vmatprep.subr.mxu0 0.0
    %3175 = vmatpush1.xpose.msra.mxu0 0.0
    %3176 = vmatprep.subr.mxu0 0.0
    %3177 = vmatpush1.xpose.msra.mxu0 0.0
    %3178 = vmatprep.subr.mxu0 0.0
    %3179 = vmatpush1.xpose.msra.mxu0 0.0
    %3180 = vmatprep.mubr.f32.mxu0 0.0
    %3181 = vmatmul.mubr.f32.gmra.mrb[0].mxu0 %v2202
    %v3182 = vpop.f32.mrb[0].mxu0
    %v3183 = vadd.f32 0.0, %v3182
    %v3184 = vpop.f32.mrb[0].mxu0
    %3185 = vdwg.mxu0
    %v3187 = vsel %vm2200, %v1683, 0
    %3189 = vmatprep.subr.mxu0 0.0
    %3190 = vmatpush1.xpose.msra.mxu0 %v3187
    %3191 = vmatprep.subr.mxu0 0.0
    %3192 = vmatpush1.xpose.msra.mxu0 0.0
    %3193 = vmatprep.subr.mxu0 0.0
    %3194 = vmatpush1.xpose.msra.mxu0 0.0
    %3195 = vmatprep.subr.mxu0 0.0
    %3196 = vmatpush1.xpose.msra.mxu0 0.0
    %3197 = vmatprep.subr.mxu0 0.0
    %3198 = vmatpush1.xpose.msra.mxu0 0.0
    %3199 = vmatprep.subr.mxu0 0.0
    %3200 = vmatpush1.xpose.msra.mxu0 0.0
    %3201 = vmatprep.subr.mxu0 0.0
    %3202 = vmatpush1.xpose.msra.mxu0 0.0
    %3203 = vmatprep.subr.mxu0 0.0
    %3204 = vmatpush1.xpose.msra.mxu0 0.0
    %3205 = vmatprep.subr.mxu0 0.0
    %3206 = vmatpush1.xpose.msra.mxu0 0.0
    %3207 = vmatprep.subr.mxu0 0.0
    %3208 = vmatpush1.xpose.msra.mxu0 0.0
    %3209 = vmatprep.subr.mxu0 0.0
    %3210 = vmatpush1.xpose.msra.mxu0 0.0
    %3211 = vmatprep.subr.mxu0 0.0
    %3212 = vmatpush1.xpose.msra.mxu0 0.0
    %3213 = vmatprep.subr.mxu0 0.0
    %3214 = vmatpush1.xpose.msra.mxu0 0.0
    %3215 = vmatprep.subr.mxu0 0.0
    %3216 = vmatpush1.xpose.msra.mxu0 0.0
    %3217 = vmatprep.subr.mxu0 0.0
    %3218 = vmatpush1.xpose.msra.mxu0 0.0
    %3219 = vmatprep.subr.mxu0 0.0
    %3220 = vmatpush1.xpose.msra.mxu0 0.0
    %3221 = vmatprep.subr.mxu0 0.0
    %3222 = vmatpush1.xpose.msra.mxu0 0.0
    %3223 = vmatprep.subr.mxu0 0.0
    %3224 = vmatpush1.xpose.msra.mxu0 0.0
    %3225 = vmatprep.subr.mxu0 0.0
    %3226 = vmatpush1.xpose.msra.mxu0 0.0
    %3227 = vmatprep.subr.mxu0 0.0
    %3228 = vmatpush1.xpose.msra.mxu0 0.0
    %3229 = vmatprep.subr.mxu0 0.0
    %3230 = vmatpush1.xpose.msra.mxu0 0.0
    %3231 = vmatprep.subr.mxu0 0.0
    %3232 = vmatpush1.xpose.msra.mxu0 0.0
    %3233 = vmatprep.subr.mxu0 0.0
    %3234 = vmatpush1.xpose.msra.mxu0 0.0
    %3235 = vmatprep.subr.mxu0 0.0
    %3236 = vmatpush1.xpose.msra.mxu0 0.0
    %3237 = vmatprep.subr.mxu0 0.0
    %3238 = vmatpush1.xpose.msra.mxu0 0.0
    %3239 = vmatprep.subr.mxu0 0.0
    %3240 = vmatpush1.xpose.msra.mxu0 0.0
    %3241 = vmatprep.subr.mxu0 0.0
    %3242 = vmatpush1.xpose.msra.mxu0 0.0
    %3243 = vmatprep.subr.mxu0 0.0
    %3244 = vmatpush1.xpose.msra.mxu0 0.0
    %3245 = vmatprep.subr.mxu0 0.0
    %3246 = vmatpush1.xpose.msra.mxu0 0.0
    %3247 = vmatprep.subr.mxu0 0.0
    %3248 = vmatpush1.xpose.msra.mxu0 0.0
    %3249 = vmatprep.subr.mxu0 0.0
    %3250 = vmatpush1.xpose.msra.mxu0 0.0
    %3251 = vmatprep.subr.mxu0 0.0
    %3252 = vmatpush1.xpose.msra.mxu0 0.0
    %3253 = vmatprep.mubr.f32.mxu0 0.0
    %3254 = vmatmul.mubr.f32.gmra.mrb[0].mxu0 %v2278
    %v3255 = vpop.f32.mrb[0].mxu0
    %v3256 = vadd.f32 0.0, %v3255
    %v3257 = vpop.f32.mrb[0].mxu0
    %3258 = vdwg.mxu0
    %v3260 = vsel %vm2200, %v1684, 0
    %3262 = vmatprep.subr.mxu0 0.0
    %3263 = vmatpush1.xpose.msra.mxu0 %v3260
    %3264 = vmatprep.subr.mxu0 0.0
    %3265 = vmatpush1.xpose.msra.mxu0 0.0
    %3266 = vmatprep.subr.mxu0 0.0
    %3267 = vmatpush1.xpose.msra.mxu0 0.0
    %3268 = vmatprep.subr.mxu0 0.0
    %3269 = vmatpush1.xpose.msra.mxu0 0.0
    %3270 = vmatprep.subr.mxu0 0.0
    %3271 = vmatpush1.xpose.msra.mxu0 0.0
    %3272 = vmatprep.subr.mxu0 0.0
    %3273 = vmatpush1.xpose.msra.mxu0 0.0
    %3274 = vmatprep.subr.mxu0 0.0
    %3275 = vmatpush1.xpose.msra.mxu0 0.0
    %3276 = vmatprep.subr.mxu0 0.0
    %3277 = vmatpush1.xpose.msra.mxu0 0.0
    %3278 = vmatprep.subr.mxu0 0.0
    %3279 = vmatpush1.xpose.msra.mxu0 0.0
    %3280 = vmatprep.subr.mxu0 0.0
    %3281 = vmatpush1.xpose.msra.mxu0 0.0
    %3282 = vmatprep.subr.mxu0 0.0
    %3283 = vmatpush1.xpose.msra.mxu0 0.0
    %3284 = vmatprep.subr.mxu0 0.0
    %3285 = vmatpush1.xpose.msra.mxu0 0.0
    %3286 = vmatprep.subr.mxu0 0.0
    %3287 = vmatpush1.xpose.msra.mxu0 0.0
    %3288 = vmatprep.subr.mxu0 0.0
    %3289 = vmatpush1.xpose.msra.mxu0 0.0
    %3290 = vmatprep.subr.mxu0 0.0
    %3291 = vmatpush1.xpose.msra.mxu0 0.0
    %3292 = vmatprep.subr.mxu0 0.0
    %3293 = vmatpush1.xpose.msra.mxu0 0.0
    %3294 = vmatprep.subr.mxu0 0.0
    %3295 = vmatpush1.xpose.msra.mxu0 0.0
    %3296 = vmatprep.subr.mxu0 0.0
    %3297 = vmatpush1.xpose.msra.mxu0 0.0
    %3298 = vmatprep.subr.mxu0 0.0
    %3299 = vmatpush1.xpose.msra.mxu0 0.0
    %3300 = vmatprep.subr.mxu0 0.0
    %3301 = vmatpush1.xpose.msra.mxu0 0.0
    %3302 = vmatprep.subr.mxu0 0.0
    %3303 = vmatpush1.xpose.msra.mxu0 0.0
    %3304 = vmatprep.subr.mxu0 0.0
    %3305 = vmatpush1.xpose.msra.mxu0 0.0
    %3306 = vmatprep.subr.mxu0 0.0
    %3307 = vmatpush1.xpose.msra.mxu0 0.0
    %3308 = vmatprep.subr.mxu0 0.0
    %3309 = vmatpush1.xpose.msra.mxu0 0.0
    %3310 = vmatprep.subr.mxu0 0.0
    %3311 = vmatpush1.xpose.msra.mxu0 0.0
    %3312 = vmatprep.subr.mxu0 0.0
    %3313 = vmatpush1.xpose.msra.mxu0 0.0
    %3314 = vmatprep.subr.mxu0 0.0
    %3315 = vmatpush1.xpose.msra.mxu0 0.0
    %3316 = vmatprep.subr.mxu0 0.0
    %3317 = vmatpush1.xpose.msra.mxu0 0.0
    %3318 = vmatprep.subr.mxu0 0.0
    %3319 = vmatpush1.xpose.msra.mxu0 0.0
    %3320 = vmatprep.subr.mxu0 0.0
    %3321 = vmatpush1.xpose.msra.mxu0 0.0
    %3322 = vmatprep.subr.mxu0 0.0
    %3323 = vmatpush1.xpose.msra.mxu0 0.0
    %3324 = vmatprep.subr.mxu0 0.0
    %3325 = vmatpush1.xpose.msra.mxu0 0.0
    %3326 = vmatprep.mubr.f32.mxu0 0.0
    %3327 = vmatmul.mubr.f32.gmra.mrb[0].mxu0 %v2354
    %v3328 = vpop.f32.mrb[0].mxu0
    %v3329 = vadd.f32 0.0, %v3328
    %v3330 = vpop.f32.mrb[0].mxu0
    %3331 = vdwg.mxu0
    %v3333 = vsel %vm2200, %v1685, 0
    %3335 = vmatprep.subr.mxu0 0.0
    %3336 = vmatpush1.xpose.msra.mxu0 %v3333
    %3337 = vmatprep.subr.mxu0 0.0
    %3338 = vmatpush1.xpose.msra.mxu0 0.0
    %3339 = vmatprep.subr.mxu0 0.0
    %3340 = vmatpush1.xpose.msra.mxu0 0.0
    %3341 = vmatprep.subr.mxu0 0.0
    %3342 = vmatpush1.xpose.msra.mxu0 0.0
    %3343 = vmatprep.subr.mxu0 0.0
    %3344 = vmatpush1.xpose.msra.mxu0 0.0
    %3345 = vmatprep.subr.mxu0 0.0
    %3346 = vmatpush1.xpose.msra.mxu0 0.0
    %3347 = vmatprep.subr.mxu0 0.0
    %3348 = vmatpush1.xpose.msra.mxu0 0.0
    %3349 = vmatprep.subr.mxu0 0.0
    %3350 = vmatpush1.xpose.msra.mxu0 0.0
    %3351 = vmatprep.subr.mxu0 0.0
    %3352 = vmatpush1.xpose.msra.mxu0 0.0
    %3353 = vmatprep.subr.mxu0 0.0
    %3354 = vmatpush1.xpose.msra.mxu0 0.0
    %3355 = vmatprep.subr.mxu0 0.0
    %3356 = vmatpush1.xpose.msra.mxu0 0.0
    %3357 = vmatprep.subr.mxu0 0.0
    %3358 = vmatpush1.xpose.msra.mxu0 0.0
    %3359 = vmatprep.subr.mxu0 0.0
    %3360 = vmatpush1.xpose.msra.mxu0 0.0
    %3361 = vmatprep.subr.mxu0 0.0
    %3362 = vmatpush1.xpose.msra.mxu0 0.0
    %3363 = vmatprep.subr.mxu0 0.0
    %3364 = vmatpush1.xpose.msra.mxu0 0.0
    %3365 = vmatprep.subr.mxu0 0.0
    %3366 = vmatpush1.xpose.msra.mxu0 0.0
    %3367 = vmatprep.subr.mxu0 0.0
    %3368 = vmatpush1.xpose.msra.mxu0 0.0
    %3369 = vmatprep.subr.mxu0 0.0
    %3370 = vmatpush1.xpose.msra.mxu0 0.0
    %3371 = vmatprep.subr.mxu0 0.0
    %3372 = vmatpush1.xpose.msra.mxu0 0.0
    %3373 = vmatprep.subr.mxu0 0.0
    %3374 = vmatpush1.xpose.msra.mxu0 0.0
    %3375 = vmatprep.subr.mxu0 0.0
    %3376 = vmatpush1.xpose.msra.mxu0 0.0
    %3377 = vmatprep.subr.mxu0 0.0
    %3378 = vmatpush1.xpose.msra.mxu0 0.0
    %3379 = vmatprep.subr.mxu0 0.0
    %3380 = vmatpush1.xpose.msra.mxu0 0.0
    %3381 = vmatprep.subr.mxu0 0.0
    %3382 = vmatpush1.xpose.msra.mxu0 0.0
    %3383 = vmatprep.subr.mxu0 0.0
    %3384 = vmatpush1.xpose.msra.mxu0 0.0
    %3385 = vmatprep.subr.mxu0 0.0
    %3386 = vmatpush1.xpose.msra.mxu0 0.0
    %3387 = vmatprep.subr.mxu0 0.0
    %3388 = vmatpush1.xpose.msra.mxu0 0.0
    %3389 = vmatprep.subr.mxu0 0.0
    %3390 = vmatpush1.xpose.msra.mxu0 0.0
    %3391 = vmatprep.subr.mxu0 0.0
    %3392 = vmatpush1.xpose.msra.mxu0 0.0
    %3393 = vmatprep.subr.mxu0 0.0
    %3394 = vmatpush1.xpose.msra.mxu0 0.0
    %3395 = vmatprep.subr.mxu0 0.0
    %3396 = vmatpush1.xpose.msra.mxu0 0.0
    %3397 = vmatprep.subr.mxu0 0.0
    %3398 = vmatpush1.xpose.msra.mxu0 0.0
    %3399 = vmatprep.mubr.f32.mxu0 0.0
    %3400 = vmatmul.mubr.f32.gmra.mrb[0].mxu0 %v2430
    %v3401 = vpop.f32.mrb[0].mxu0
    %v3402 = vadd.f32 0.0, %v3401
    %v3403 = vpop.f32.mrb[0].mxu0
    %3404 = vdwg.mxu0
    %v3406 = vsel %vm2200, %v1686, 0
    %3408 = vmatprep.subr.mxu0 0.0
    %3409 = vmatpush1.xpose.msra.mxu0 %v3406
    %3410 = vmatprep.subr.mxu0 0.0
    %3411 = vmatpush1.xpose.msra.mxu0 0.0
    %3412 = vmatprep.subr.mxu0 0.0
    %3413 = vmatpush1.xpose.msra.mxu0 0.0
    %3414 = vmatprep.subr.mxu0 0.0
    %3415 = vmatpush1.xpose.msra.mxu0 0.0
    %3416 = vmatprep.subr.mxu0 0.0
    %3417 = vmatpush1.xpose.msra.mxu0 0.0
    %3418 = vmatprep.subr.mxu0 0.0
    %3419 = vmatpush1.xpose.msra.mxu0 0.0
    %3420 = vmatprep.subr.mxu0 0.0
    %3421 = vmatpush1.xpose.msra.mxu0 0.0
    %3422 = vmatprep.subr.mxu0 0.0
    %3423 = vmatpush1.xpose.msra.mxu0 0.0
    %3424 = vmatprep.subr.mxu0 0.0
    %3425 = vmatpush1.xpose.msra.mxu0 0.0
    %3426 = vmatprep.subr.mxu0 0.0
    %3427 = vmatpush1.xpose.msra.mxu0 0.0
    %3428 = vmatprep.subr.mxu0 0.0
    %3429 = vmatpush1.xpose.msra.mxu0 0.0
    %3430 = vmatprep.subr.mxu0 0.0
    %3431 = vmatpush1.xpose.msra.mxu0 0.0
    %3432 = vmatprep.subr.mxu0 0.0
    %3433 = vmatpush1.xpose.msra.mxu0 0.0
    %3434 = vmatprep.subr.mxu0 0.0
    %3435 = vmatpush1.xpose.msra.mxu0 0.0
    %3436 = vmatprep.subr.mxu0 0.0
    %3437 = vmatpush1.xpose.msra.mxu0 0.0
    %3438 = vmatprep.subr.mxu0 0.0
    %3439 = vmatpush1.xpose.msra.mxu0 0.0
    %3440 = vmatprep.subr.mxu0 0.0
    %3441 = vmatpush1.xpose.msra.mxu0 0.0
    %3442 = vmatprep.subr.mxu0 0.0
    %3443 = vmatpush1.xpose.msra.mxu0 0.0
    %3444 = vmatprep.subr.mxu0 0.0
    %3445 = vmatpush1.xpose.msra.mxu0 0.0
    %3446 = vmatprep.subr.mxu0 0.0
    %3447 = vmatpush1.xpose.msra.mxu0 0.0
    %3448 = vmatprep.subr.mxu0 0.0
    %3449 = vmatpush1.xpose.msra.mxu0 0.0
    %3450 = vmatprep.subr.mxu0 0.0
    %3451 = vmatpush1.xpose.msra.mxu0 0.0
    %3452 = vmatprep.subr.mxu0 0.0
    %3453 = vmatpush1.xpose.msra.mxu0 0.0
    %3454 = vmatprep.subr.mxu0 0.0
    %3455 = vmatpush1.xpose.msra.mxu0 0.0
    %3456 = vmatprep.subr.mxu0 0.0
    %3457 = vmatpush1.xpose.msra.mxu0 0.0
    %3458 = vmatprep.subr.mxu0 0.0
    %3459 = vmatpush1.xpose.msra.mxu0 0.0
    %3460 = vmatprep.subr.mxu0 0.0
    %3461 = vmatpush1.xpose.msra.mxu0 0.0
    %3462 = vmatprep.subr.mxu0 0.0
    %3463 = vmatpush1.xpose.msra.mxu0 0.0
    %3464 = vmatprep.subr.mxu0 0.0
    %3465 = vmatpush1.xpose.msra.mxu0 0.0
    %3466 = vmatprep.subr.mxu0 0.0
    %3467 = vmatpush1.xpose.msra.mxu0 0.0
    %3468 = vmatprep.subr.mxu0 0.0
    %3469 = vmatpush1.xpose.msra.mxu0 0.0
    %3470 = vmatprep.subr.mxu0 0.0
    %3471 = vmatpush1.xpose.msra.mxu0 0.0
    %3472 = vmatprep.mubr.f32.mxu0 0.0
    %3473 = vmatmul.mubr.f32.gmra.mrb[0].mxu0 %v2506
    %v3474 = vpop.f32.mrb[0].mxu0
    %v3475 = vadd.f32 0.0, %v3474
    %v3476 = vpop.f32.mrb[0].mxu0
    %3477 = vdwg.mxu0
    %v3479 = vsel %vm2200, %v1687, 0
    %3481 = vmatprep.subr.mxu0 0.0
    %3482 = vmatpush1.xpose.msra.mxu0 %v3479
    %3483 = vmatprep.subr.mxu0 0.0
    %3484 = vmatpush1.xpose.msra.mxu0 0.0
    %3485 = vmatprep.subr.mxu0 0.0
    %3486 = vmatpush1.xpose.msra.mxu0 0.0
    %3487 = vmatprep.subr.mxu0 0.0
    %3488 = vmatpush1.xpose.msra.mxu0 0.0
    %3489 = vmatprep.subr.mxu0 0.0
    %3490 = vmatpush1.xpose.msra.mxu0 0.0
    %3491 = vmatprep.subr.mxu0 0.0
    %3492 = vmatpush1.xpose.msra.mxu0 0.0
    %3493 = vmatprep.subr.mxu0 0.0
    %3494 = vmatpush1.xpose.msra.mxu0 0.0
    %3495 = vmatprep.subr.mxu0 0.0
    %3496 = vmatpush1.xpose.msra.mxu0 0.0
    %3497 = vmatprep.subr.mxu0 0.0
    %3498 = vmatpush1.xpose.msra.mxu0 0.0
    %3499 = vmatprep.subr.mxu0 0.0
    %3500 = vmatpush1.xpose.msra.mxu0 0.0
    %3501 = vmatprep.subr.mxu0 0.0
    %3502 = vmatpush1.xpose.msra.mxu0 0.0
    %3503 = vmatprep.subr.mxu0 0.0
    %3504 = vmatpush1.xpose.msra.mxu0 0.0
    %3505 = vmatprep.subr.mxu0 0.0
    %3506 = vmatpush1.xpose.msra.mxu0 0.0
    %3507 = vmatprep.subr.mxu0 0.0
    %3508 = vmatpush1.xpose.msra.mxu0 0.0
    %3509 = vmatprep.subr.mxu0 0.0
    %3510 = vmatpush1.xpose.msra.mxu0 0.0
    %3511 = vmatprep.subr.mxu0 0.0
    %3512 = vmatpush1.xpose.msra.mxu0 0.0
    %3513 = vmatprep.subr.mxu0 0.0
    %3514 = vmatpush1.xpose.msra.mxu0 0.0
    %3515 = vmatprep.subr.mxu0 0.0
    %3516 = vmatpush1.xpose.msra.mxu0 0.0
    %3517 = vmatprep.subr.mxu0 0.0
    %3518 = vmatpush1.xpose.msra.mxu0 0.0
    %3519 = vmatprep.subr.mxu0 0.0
    %3520 = vmatpush1.xpose.msra.mxu0 0.0
    %3521 = vmatprep.subr.mxu0 0.0
    %3522 = vmatpush1.xpose.msra.mxu0 0.0
    %3523 = vmatprep.subr.mxu0 0.0
    %3524 = vmatpush1.xpose.msra.mxu0 0.0
    %3525 = vmatprep.subr.mxu0 0.0
    %3526 = vmatpush1.xpose.msra.mxu0 0.0
    %3527 = vmatprep.subr.mxu0 0.0
    %3528 = vmatpush1.xpose.msra.mxu0 0.0
    %3529 = vmatprep.subr.mxu0 0.0
    %3530 = vmatpush1.xpose.msra.mxu0 0.0
    %3531 = vmatprep.subr.mxu0 0.0
    %3532 = vmatpush1.xpose.msra.mxu0 0.0
    %3533 = vmatprep.subr.mxu0 0.0
    %3534 = vmatpush1.xpose.msra.mxu0 0.0
    %3535 = vmatprep.subr.mxu0 0.0
    %3536 = vmatpush1.xpose.msra.mxu0 0.0
    %3537 = vmatprep.subr.mxu0 0.0
    %3538 = vmatpush1.xpose.msra.mxu0 0.0
    %3539 = vmatprep.subr.mxu0 0.0
    %3540 = vmatpush1.xpose.msra.mxu0 0.0
    %3541 = vmatprep.subr.mxu0 0.0
    %3542 = vmatpush1.xpose.msra.mxu0 0.0
    %3543 = vmatprep.subr.mxu0 0.0
    %3544 = vmatpush1.xpose.msra.mxu0 0.0
    %3545 = vmatprep.mubr.f32.mxu0 0.0
    %3546 = vmatmul.mubr.f32.gmra.mrb[0].mxu0 %v2582
    %v3547 = vpop.f32.mrb[0].mxu0
    %v3548 = vadd.f32 0.0, %v3547
    %v3549 = vpop.f32.mrb[0].mxu0
    %3550 = vdwg.mxu0
    %v3552 = vsel %vm2200, %v1688, 0
    %3554 = vmatprep.subr.mxu0 0.0
    %3555 = vmatpush1.xpose.msra.mxu0 %v3552
    %3556 = vmatprep.subr.mxu0 0.0
    %3557 = vmatpush1.xpose.msra.mxu0 0.0
    %3558 = vmatprep.subr.mxu0 0.0
    %3559 = vmatpush1.xpose.msra.mxu0 0.0
    %3560 = vmatprep.subr.mxu0 0.0
    %3561 = vmatpush1.xpose.msra.mxu0 0.0
    %3562 = vmatprep.subr.mxu0 0.0
    %3563 = vmatpush1.xpose.msra.mxu0 0.0
    %3564 = vmatprep.subr.mxu0 0.0
    %3565 = vmatpush1.xpose.msra.mxu0 0.0
    %3566 = vmatprep.subr.mxu0 0.0
    %3567 = vmatpush1.xpose.msra.mxu0 0.0
    %3568 = vmatprep.subr.mxu0 0.0
    %3569 = vmatpush1.xpose.msra.mxu0 0.0
    %3570 = vmatprep.subr.mxu0 0.0
    %3571 = vmatpush1.xpose.msra.mxu0 0.0
    %3572 = vmatprep.subr.mxu0 0.0
    %3573 = vmatpush1.xpose.msra.mxu0 0.0
    %3574 = vmatprep.subr.mxu0 0.0
    %3575 = vmatpush1.xpose.msra.mxu0 0.0
    %3576 = vmatprep.subr.mxu0 0.0
    %3577 = vmatpush1.xpose.msra.mxu0 0.0
    %3578 = vmatprep.subr.mxu0 0.0
    %3579 = vmatpush1.xpose.msra.mxu0 0.0
    %3580 = vmatprep.subr.mxu0 0.0
    %3581 = vmatpush1.xpose.msra.mxu0 0.0
    %3582 = vmatprep.subr.mxu0 0.0
    %3583 = vmatpush1.xpose.msra.mxu0 0.0
    %3584 = vmatprep.subr.mxu0 0.0
    %3585 = vmatpush1.xpose.msra.mxu0 0.0
    %3586 = vmatprep.subr.mxu0 0.0
    %3587 = vmatpush1.xpose.msra.mxu0 0.0
    %3588 = vmatprep.subr.mxu0 0.0
    %3589 = vmatpush1.xpose.msra.mxu0 0.0
    %3590 = vmatprep.subr.mxu0 0.0
    %3591 = vmatpush1.xpose.msra.mxu0 0.0
    %3592 = vmatprep.subr.mxu0 0.0
    %3593 = vmatpush1.xpose.msra.mxu0 0.0
    %3594 = vmatprep.subr.mxu0 0.0
    %3595 = vmatpush1.xpose.msra.mxu0 0.0
    %3596 = vmatprep.subr.mxu0 0.0
    %3597 = vmatpush1.xpose.msra.mxu0 0.0
    %3598 = vmatprep.subr.mxu0 0.0
    %3599 = vmatpush1.xpose.msra.mxu0 0.0
    %3600 = vmatprep.subr.mxu0 0.0
    %3601 = vmatpush1.xpose.msra.mxu0 0.0
    %3602 = vmatprep.subr.mxu0 0.0
    %3603 = vmatpush1.xpose.msra.mxu0 0.0
    %3604 = vmatprep.subr.mxu0 0.0
    %3605 = vmatpush1.xpose.msra.mxu0 0.0
    %3606 = vmatprep.subr.mxu0 0.0
    %3607 = vmatpush1.xpose.msra.mxu0 0.0
    %3608 = vmatprep.subr.mxu0 0.0
    %3609 = vmatpush1.xpose.msra.mxu0 0.0
    %3610 = vmatprep.subr.mxu0 0.0
    %3611 = vmatpush1.xpose.msra.mxu0 0.0
    %3612 = vmatprep.subr.mxu0 0.0
    %3613 = vmatpush1.xpose.msra.mxu0 0.0
    %3614 = vmatprep.subr.mxu0 0.0
    %3615 = vmatpush1.xpose.msra.mxu0 0.0
    %3616 = vmatprep.subr.mxu0 0.0
    %3617 = vmatpush1.xpose.msra.mxu0 0.0
    %3618 = vmatprep.mubr.f32.mxu0 0.0
    %3619 = vmatmul.mubr.f32.gmra.mrb[0].mxu0 %v2658
    %v3620 = vpop.f32.mrb[0].mxu0
    %v3621 = vadd.f32 0.0, %v3620
    %v3622 = vpop.f32.mrb[0].mxu0
    %3623 = vdwg.mxu0
    %v3625 = vsel %vm2200, %v1689, 0
    %3627 = vmatprep.subr.mxu0 0.0
    %3628 = vmatpush1.xpose.msra.mxu0 %v3625
    %3629 = vmatprep.subr.mxu0 0.0
    %3630 = vmatpush1.xpose.msra.mxu0 0.0
    %3631 = vmatprep.subr.mxu0 0.0
    %3632 = vmatpush1.xpose.msra.mxu0 0.0
    %3633 = vmatprep.subr.mxu0 0.0
    %3634 = vmatpush1.xpose.msra.mxu0 0.0
    %3635 = vmatprep.subr.mxu0 0.0
    %3636 = vmatpush1.xpose.msra.mxu0 0.0
    %3637 = vmatprep.subr.mxu0 0.0
    %3638 = vmatpush1.xpose.msra.mxu0 0.0
    %3639 = vmatprep.subr.mxu0 0.0
    %3640 = vmatpush1.xpose.msra.mxu0 0.0
    %3641 = vmatprep.subr.mxu0 0.0
    %3642 = vmatpush1.xpose.msra.mxu0 0.0
    %3643 = vmatprep.subr.mxu0 0.0
    %3644 = vmatpush1.xpose.msra.mxu0 0.0
    %3645 = vmatprep.subr.mxu0 0.0
    %3646 = vmatpush1.xpose.msra.mxu0 0.0
    %3647 = vmatprep.subr.mxu0 0.0
    %3648 = vmatpush1.xpose.msra.mxu0 0.0
    %3649 = vmatprep.subr.mxu0 0.0
    %3650 = vmatpush1.xpose.msra.mxu0 0.0
    %3651 = vmatprep.subr.mxu0 0.0
    %3652 = vmatpush1.xpose.msra.mxu0 0.0
    %3653 = vmatprep.subr.mxu0 0.0
    %3654 = vmatpush1.xpose.msra.mxu0 0.0
    %3655 = vmatprep.subr.mxu0 0.0
    %3656 = vmatpush1.xpose.msra.mxu0 0.0
    %3657 = vmatprep.subr.mxu0 0.0
    %3658 = vmatpush1.xpose.msra.mxu0 0.0
    %3659 = vmatprep.subr.mxu0 0.0
    %3660 = vmatpush1.xpose.msra.mxu0 0.0
    %3661 = vmatprep.subr.mxu0 0.0
    %3662 = vmatpush1.xpose.msra.mxu0 0.0
    %3663 = vmatprep.subr.mxu0 0.0
    %3664 = vmatpush1.xpose.msra.mxu0 0.0
    %3665 = vmatprep.subr.mxu0 0.0
    %3666 = vmatpush1.xpose.msra.mxu0 0.0
    %3667 = vmatprep.subr.mxu0 0.0
    %3668 = vmatpush1.xpose.msra.mxu0 0.0
    %3669 = vmatprep.subr.mxu0 0.0
    %3670 = vmatpush1.xpose.msra.mxu0 0.0
    %3671 = vmatprep.subr.mxu0 0.0
    %3672 = vmatpush1.xpose.msra.mxu0 0.0
    %3673 = vmatprep.subr.mxu0 0.0
    %3674 = vmatpush1.xpose.msra.mxu0 0.0
    %3675 = vmatprep.subr.mxu0 0.0
    %3676 = vmatpush1.xpose.msra.mxu0 0.0
    %3677 = vmatprep.subr.mxu0 0.0
    %3678 = vmatpush1.xpose.msra.mxu0 0.0
    %3679 = vmatprep.subr.mxu0 0.0
    %3680 = vmatpush1.xpose.msra.mxu0 0.0
    %3681 = vmatprep.subr.mxu0 0.0
    %3682 = vmatpush1.xpose.msra.mxu0 0.0
    %3683 = vmatprep.subr.mxu0 0.0
    %3684 = vmatpush1.xpose.msra.mxu0 0.0
    %3685 = vmatprep.subr.mxu0 0.0
    %3686 = vmatpush1.xpose.msra.mxu0 0.0
    %3687 = vmatprep.subr.mxu0 0.0
    %3688 = vmatpush1.xpose.msra.mxu0 0.0
    %3689 = vmatprep.subr.mxu0 0.0
    %3690 = vmatpush1.xpose.msra.mxu0 0.0
    %3691 = vmatprep.mubr.f32.mxu0 0.0
    %3692 = vmatmul.mubr.f32.gmra.mrb[0].mxu0 %v2734
    %v3693 = vpop.f32.mrb[0].mxu0
    %v3694 = vadd.f32 0.0, %v3693
    %v3695 = vpop.f32.mrb[0].mxu0
    %3696 = vdwg.mxu0
    %v3698 = vsel %vm2200, %v1754, 0
    %3700 = vmatprep.subr.mxu0 0.0
    %3701 = vmatpush1.xpose.msra.mxu0 %v3698
    %3702 = vmatprep.subr.mxu0 0.0
    %3703 = vmatpush1.xpose.msra.mxu0 0.0
    %3704 = vmatprep.subr.mxu0 0.0
    %3705 = vmatpush1.xpose.msra.mxu0 0.0
    %3706 = vmatprep.subr.mxu0 0.0
    %3707 = vmatpush1.xpose.msra.mxu0 0.0
    %3708 = vmatprep.subr.mxu0 0.0
    %3709 = vmatpush1.xpose.msra.mxu0 0.0
    %3710 = vmatprep.subr.mxu0 0.0
    %3711 = vmatpush1.xpose.msra.mxu0 0.0
    %3712 = vmatprep.subr.mxu0 0.0
    %3713 = vmatpush1.xpose.msra.mxu0 0.0
    %3714 = vmatprep.subr.mxu0 0.0
    %3715 = vmatpush1.xpose.msra.mxu0 0.0
    %3716 = vmatprep.subr.mxu0 0.0
    %3717 = vmatpush1.xpose.msra.mxu0 0.0
    %3718 = vmatprep.subr.mxu0 0.0
    %3719 = vmatpush1.xpose.msra.mxu0 0.0
    %3720 = vmatprep.subr.mxu0 0.0
    %3721 = vmatpush1.xpose.msra.mxu0 0.0
    %3722 = vmatprep.subr.mxu0 0.0
    %3723 = vmatpush1.xpose.msra.mxu0 0.0
    %3724 = vmatprep.subr.mxu0 0.0
    %3725 = vmatpush1.xpose.msra.mxu0 0.0
    %3726 = vmatprep.subr.mxu0 0.0
    %3727 = vmatpush1.xpose.msra.mxu0 0.0
    %3728 = vmatprep.subr.mxu0 0.0
    %3729 = vmatpush1.xpose.msra.mxu0 0.0
    %3730 = vmatprep.subr.mxu0 0.0
    %3731 = vmatpush1.xpose.msra.mxu0 0.0
    %3732 = vmatprep.subr.mxu0 0.0
    %3733 = vmatpush1.xpose.msra.mxu0 0.0
    %3734 = vmatprep.subr.mxu0 0.0
    %3735 = vmatpush1.xpose.msra.mxu0 0.0
    %3736 = vmatprep.subr.mxu0 0.0
    %3737 = vmatpush1.xpose.msra.mxu0 0.0
    %3738 = vmatprep.subr.mxu0 0.0
    %3739 = vmatpush1.xpose.msra.mxu0 0.0
    %3740 = vmatprep.subr.mxu0 0.0
    %3741 = vmatpush1.xpose.msra.mxu0 0.0
    %3742 = vmatprep.subr.mxu0 0.0
    %3743 = vmatpush1.xpose.msra.mxu0 0.0
    %3744 = vmatprep.subr.mxu0 0.0
    %3745 = vmatpush1.xpose.msra.mxu0 0.0
    %3746 = vmatprep.subr.mxu0 0.0
    %3747 = vmatpush1.xpose.msra.mxu0 0.0
    %3748 = vmatprep.subr.mxu0 0.0
    %3749 = vmatpush1.xpose.msra.mxu0 0.0
    %3750 = vmatprep.subr.mxu0 0.0
    %3751 = vmatpush1.xpose.msra.mxu0 0.0
    %3752 = vmatprep.subr.mxu0 0.0
    %3753 = vmatpush1.xpose.msra.mxu0 0.0
    %3754 = vmatprep.subr.mxu0 0.0
    %3755 = vmatpush1.xpose.msra.mxu0 0.0
    %3756 = vmatprep.subr.mxu0 0.0
    %3757 = vmatpush1.xpose.msra.mxu0 0.0
    %3758 = vmatprep.subr.mxu0 0.0
    %3759 = vmatpush1.xpose.msra.mxu0 0.0
    %3760 = vmatprep.subr.mxu0 0.0
    %3761 = vmatpush1.xpose.msra.mxu0 0.0
    %3762 = vmatprep.subr.mxu0 0.0
    %3763 = vmatpush1.xpose.msra.mxu0 0.0
    %3764 = vmatprep.mubr.f32.mxu0 0.0
    %3765 = vmatmul.mubr.f32.gmra.mrb[0].mxu0 %v2810
    %v3766 = vpop.f32.mrb[0].mxu0
    %v3767 = vadd.f32 0.0, %v3766
    %v3768 = vpop.f32.mrb[0].mxu0
    %3769 = vdwg.mxu0
    %v3771 = vsel %vm2200, %v1755, 0
    %3773 = vmatprep.subr.mxu0 0.0
    %3774 = vmatpush1.xpose.msra.mxu0 %v3771
    %3775 = vmatprep.subr.mxu0 0.0
    %3776 = vmatpush1.xpose.msra.mxu0 0.0
    %3777 = vmatprep.subr.mxu0 0.0
    %3778 = vmatpush1.xpose.msra.mxu0 0.0
    %3779 = vmatprep.subr.mxu0 0.0
    %3780 = vmatpush1.xpose.msra.mxu0 0.0
    %3781 = vmatprep.subr.mxu0 0.0
    %3782 = vmatpush1.xpose.msra.mxu0 0.0
    %3783 = vmatprep.subr.mxu0 0.0
    %3784 = vmatpush1.xpose.msra.mxu0 0.0
    %3785 = vmatprep.subr.mxu0 0.0
    %3786 = vmatpush1.xpose.msra.mxu0 0.0
    %3787 = vmatprep.subr.mxu0 0.0
    %3788 = vmatpush1.xpose.msra.mxu0 0.0
    %3789 = vmatprep.subr.mxu0 0.0
    %3790 = vmatpush1.xpose.msra.mxu0 0.0
    %3791 = vmatprep.subr.mxu0 0.0
    %3792 = vmatpush1.xpose.msra.mxu0 0.0
    %3793 = vmatprep.subr.mxu0 0.0
    %3794 = vmatpush1.xpose.msra.mxu0 0.0
    %3795 = vmatprep.subr.mxu0 0.0
    %3796 = vmatpush1.xpose.msra.mxu0 0.0
    %3797 = vmatprep.subr.mxu0 0.0
    %3798 = vmatpush1.xpose.msra.mxu0 0.0
    %3799 = vmatprep.subr.mxu0 0.0
    %3800 = vmatpush1.xpose.msra.mxu0 0.0
    %3801 = vmatprep.subr.mxu0 0.0
    %3802 = vmatpush1.xpose.msra.mxu0 0.0
    %3803 = vmatprep.subr.mxu0 0.0
    %3804 = vmatpush1.xpose.msra.mxu0 0.0
    %3805 = vmatprep.subr.mxu0 0.0
    %3806 = vmatpush1.xpose.msra.mxu0 0.0
    %3807 = vmatprep.subr.mxu0 0.0
    %3808 = vmatpush1.xpose.msra.mxu0 0.0
    %3809 = vmatprep.subr.mxu0 0.0
    %3810 = vmatpush1.xpose.msra.mxu0 0.0
    %3811 = vmatprep.subr.mxu0 0.0
    %3812 = vmatpush1.xpose.msra.mxu0 0.0
    %3813 = vmatprep.subr.mxu0 0.0
    %3814 = vmatpush1.xpose.msra.mxu0 0.0
    %3815 = vmatprep.subr.mxu0 0.0
    %3816 = vmatpush1.xpose.msra.mxu0 0.0
    %3817 = vmatprep.subr.mxu0 0.0
    %3818 = vmatpush1.xpose.msra.mxu0 0.0
    %3819 = vmatprep.subr.mxu0 0.0
    %3820 = vmatpush1.xpose.msra.mxu0 0.0
    %3821 = vmatprep.subr.mxu0 0.0
    %3822 = vmatpush1.xpose.msra.mxu0 0.0
    %3823 = vmatprep.subr.mxu0 0.0
    %3824 = vmatpush1.xpose.msra.mxu0 0.0
    %3825 = vmatprep.subr.mxu0 0.0
    %3826 = vmatpush1.xpose.msra.mxu0 0.0
    %3827 = vmatprep.subr.mxu0 0.0
    %3828 = vmatpush1.xpose.msra.mxu0 0.0
    %3829 = vmatprep.subr.mxu0 0.0
    %3830 = vmatpush1.xpose.msra.mxu0 0.0
    %3831 = vmatprep.subr.mxu0 0.0
    %3832 = vmatpush1.xpose.msra.mxu0 0.0
    %3833 = vmatprep.subr.mxu0 0.0
    %3834 = vmatpush1.xpose.msra.mxu0 0.0
    %3835 = vmatprep.subr.mxu0 0.0
    %3836 = vmatpush1.xpose.msra.mxu0 0.0
    %3837 = vmatprep.mubr.f32.mxu0 0.0
    %3838 = vmatmul.mubr.f32.gmra.mrb[0].mxu0 %v2886
    %v3839 = vpop.f32.mrb[0].mxu0
    %v3840 = vadd.f32 0.0, %v3839
    %v3841 = vpop.f32.mrb[0].mxu0
    %3842 = vdwg.mxu0
    %v3844 = vsel %vm2200, %v1756, 0
    %3846 = vmatprep.subr.mxu0 0.0
    %3847 = vmatpush1.xpose.msra.mxu0 %v3844
    %3848 = vmatprep.subr.mxu0 0.0
    %3849 = vmatpush1.xpose.msra.mxu0 0.0
    %3850 = vmatprep.subr.mxu0 0.0
    %3851 = vmatpush1.xpose.msra.mxu0 0.0
    %3852 = vmatprep.subr.mxu0 0.0
    %3853 = vmatpush1.xpose.msra.mxu0 0.0
    %3854 = vmatprep.subr.mxu0 0.0
    %3855 = vmatpush1.xpose.msra.mxu0 0.0
    %3856 = vmatprep.subr.mxu0 0.0
    %3857 = vmatpush1.xpose.msra.mxu0 0.0
    %3858 = vmatprep.subr.mxu0 0.0
    %3859 = vmatpush1.xpose.msra.mxu0 0.0
    %3860 = vmatprep.subr.mxu0 0.0
    %3861 = vmatpush1.xpose.msra.mxu0 0.0
    %3862 = vmatprep.subr.mxu0 0.0
    %3863 = vmatpush1.xpose.msra.mxu0 0.0
    %3864 = vmatprep.subr.mxu0 0.0
    %3865 = vmatpush1.xpose.msra.mxu0 0.0
    %3866 = vmatprep.subr.mxu0 0.0
    %3867 = vmatpush1.xpose.msra.mxu0 0.0
    %3868 = vmatprep.subr.mxu0 0.0
    %3869 = vmatpush1.xpose.msra.mxu0 0.0
    %3870 = vmatprep.subr.mxu0 0.0
    %3871 = vmatpush1.xpose.msra.mxu0 0.0
    %3872 = vmatprep.subr.mxu0 0.0
    %3873 = vmatpush1.xpose.msra.mxu0 0.0
    %3874 = vmatprep.subr.mxu0 0.0
    %3875 = vmatpush1.xpose.msra.mxu0 0.0
    %3876 = vmatprep.subr.mxu0 0.0
    %3877 = vmatpush1.xpose.msra.mxu0 0.0
    %3878 = vmatprep.subr.mxu0 0.0
    %3879 = vmatpush1.xpose.msra.mxu0 0.0
    %3880 = vmatprep.subr.mxu0 0.0
    %3881 = vmatpush1.xpose.msra.mxu0 0.0
    %3882 = vmatprep.subr.mxu0 0.0
    %3883 = vmatpush1.xpose.msra.mxu0 0.0
    %3884 = vmatprep.subr.mxu0 0.0
    %3885 = vmatpush1.xpose.msra.mxu0 0.0
    %3886 = vmatprep.subr.mxu0 0.0
    %3887 = vmatpush1.xpose.msra.mxu0 0.0
    %3888 = vmatprep.subr.mxu0 0.0
    %3889 = vmatpush1.xpose.msra.mxu0 0.0
    %3890 = vmatprep.subr.mxu0 0.0
    %3891 = vmatpush1.xpose.msra.mxu0 0.0
    %3892 = vmatprep.subr.mxu0 0.0
    %3893 = vmatpush1.xpose.msra.mxu0 0.0
    %3894 = vmatprep.subr.mxu0 0.0
    %3895 = vmatpush1.xpose.msra.mxu0 0.0
    %3896 = vmatprep.subr.mxu0 0.0
    %3897 = vmatpush1.xpose.msra.mxu0 0.0
    %3898 = vmatprep.subr.mxu0 0.0
    %3899 = vmatpush1.xpose.msra.mxu0 0.0
    %3900 = vmatprep.subr.mxu0 0.0
    %3901 = vmatpush1.xpose.msra.mxu0 0.0
    %3902 = vmatprep.subr.mxu0 0.0
    %3903 = vmatpush1.xpose.msra.mxu0 0.0
    %3904 = vmatprep.subr.mxu0 0.0
    %3905 = vmatpush1.xpose.msra.mxu0 0.0
    %3906 = vmatprep.subr.mxu0 0.0
    %3907 = vmatpush1.xpose.msra.mxu0 0.0
    %3908 = vmatprep.subr.mxu0 0.0
    %3909 = vmatpush1.xpose.msra.mxu0 0.0
    %3910 = vmatprep.mubr.f32.mxu0 0.0
    %3911 = vmatmul.mubr.f32.gmra.mrb[0].mxu0 %v2962
    %v3912 = vpop.f32.mrb[0].mxu0
    %v3913 = vadd.f32 0.0, %v3912
    %v3914 = vpop.f32.mrb[0].mxu0
    %3915 = vdwg.mxu0
    %v3917 = vsel %vm2200, %v1757, 0
    %3919 = vmatprep.subr.mxu0 0.0
    %3920 = vmatpush1.xpose.msra.mxu0 %v3917
    %3921 = vmatprep.subr.mxu0 0.0
    %3922 = vmatpush1.xpose.msra.mxu0 0.0
    %3923 = vmatprep.subr.mxu0 0.0
    %3924 = vmatpush1.xpose.msra.mxu0 0.0
    %3925 = vmatprep.subr.mxu0 0.0
    %3926 = vmatpush1.xpose.msra.mxu0 0.0
    %3927 = vmatprep.subr.mxu0 0.0
    %3928 = vmatpush1.xpose.msra.mxu0 0.0
    %3929 = vmatprep.subr.mxu0 0.0
    %3930 = vmatpush1.xpose.msra.mxu0 0.0
    %3931 = vmatprep.subr.mxu0 0.0
    %3932 = vmatpush1.xpose.msra.mxu0 0.0
    %3933 = vmatprep.subr.mxu0 0.0
    %3934 = vmatpush1.xpose.msra.mxu0 0.0
    %3935 = vmatprep.subr.mxu0 0.0
    %3936 = vmatpush1.xpose.msra.mxu0 0.0
    %3937 = vmatprep.subr.mxu0 0.0
    %3938 = vmatpush1.xpose.msra.mxu0 0.0
    %3939 = vmatprep.subr.mxu0 0.0
    %3940 = vmatpush1.xpose.msra.mxu0 0.0
    %3941 = vmatprep.subr.mxu0 0.0
    %3942 = vmatpush1.xpose.msra.mxu0 0.0
    %3943 = vmatprep.subr.mxu0 0.0
    %3944 = vmatpush1.xpose.msra.mxu0 0.0
    %3945 = vmatprep.subr.mxu0 0.0
    %3946 = vmatpush1.xpose.msra.mxu0 0.0
    %3947 = vmatprep.subr.mxu0 0.0
    %3948 = vmatpush1.xpose.msra.mxu0 0.0
    %3949 = vmatprep.subr.mxu0 0.0
    %3950 = vmatpush1.xpose.msra.mxu0 0.0
    %3951 = vmatprep.subr.mxu0 0.0
    %3952 = vmatpush1.xpose.msra.mxu0 0.0
    %3953 = vmatprep.subr.mxu0 0.0
    %3954 = vmatpush1.xpose.msra.mxu0 0.0
    %3955 = vmatprep.subr.mxu0 0.0
    %3956 = vmatpush1.xpose.msra.mxu0 0.0
    %3957 = vmatprep.subr.mxu0 0.0
    %3958 = vmatpush1.xpose.msra.mxu0 0.0
    %3959 = vmatprep.subr.mxu0 0.0
    %3960 = vmatpush1.xpose.msra.mxu0 0.0
    %3961 = vmatprep.subr.mxu0 0.0
    %3962 = vmatpush1.xpose.msra.mxu0 0.0
    %3963 = vmatprep.subr.mxu0 0.0
    %3964 = vmatpush1.xpose.msra.mxu0 0.0
    %3965 = vmatprep.subr.mxu0 0.0
    %3966 = vmatpush1.xpose.msra.mxu0 0.0
    %3967 = vmatprep.subr.mxu0 0.0
    %3968 = vmatpush1.xpose.msra.mxu0 0.0
    %3969 = vmatprep.subr.mxu0 0.0
    %3970 = vmatpush1.xpose.msra.mxu0 0.0
    %3971 = vmatprep.subr.mxu0 0.0
    %3972 = vmatpush1.xpose.msra.mxu0 0.0
    %3973 = vmatprep.subr.mxu0 0.0
    %3974 = vmatpush1.xpose.msra.mxu0 0.0
    %3975 = vmatprep.subr.mxu0 0.0
    %3976 = vmatpush1.xpose.msra.mxu0 0.0
    %3977 = vmatprep.subr.mxu0 0.0
    %3978 = vmatpush1.xpose.msra.mxu0 0.0
    %3979 = vmatprep.subr.mxu0 0.0
    %3980 = vmatpush1.xpose.msra.mxu0 0.0
    %3981 = vmatprep.subr.mxu0 0.0
    %3982 = vmatpush1.xpose.msra.mxu0 0.0
    %3983 = vmatprep.mubr.f32.mxu0 0.0
    %3984 = vmatmul.mubr.f32.gmra.mrb[0].mxu0 %v3038
    %v3985 = vpop.f32.mrb[0].mxu0
    %v3986 = vadd.f32 0.0, %v3985
    %v3987 = vpop.f32.mrb[0].mxu0
    %3988 = vdwg.mxu0
    %v3989 = vsel %vm2200, %v3183, -inf
    %v3990 = vsel %vm2200, %v3475, -inf
    %v3991 = vmax.f32 %v3989, %v3990
    %v3992 = vsel %vm2200, %v3767, -inf
    %v3993 = vmax.f32 %v3991, %v3992
    %v3994 = vsel %vm2200, %v3256, -inf
    %v3995 = vsel %vm2200, %v3548, -inf
    %v3996 = vmax.f32 %v3994, %v3995
    %v3997 = vsel %vm2200, %v3840, -inf
    %v3998 = vmax.f32 %v3996, %v3997
    %v3999 = vsel %vm2200, %v3329, -inf
    %v4000 = vsel %vm2200, %v3621, -inf
    %v4001 = vmax.f32 %v3999, %v4000
    %v4002 = vsel %vm2200, %v3913, -inf
    %v4003 = vmax.f32 %v4001, %v4002
    %v4004 = vsel %vm2200, %v3402, -inf
    %v4005 = vsel %vm2200, %v3694, -inf
    %v4006 = vmax.f32 %v4004, %v4005
    %v4007 = vsel %vm2200, %v3986, -inf
    %v4008 = vmax.f32 %v4006, %v4007
    %v4009 = vsub.f32 %v3183, %v3993
    %v4010 = vsub.f32 %v3256, %v3998
    %v4011 = vsub.f32 %v3329, %v4003
    %v4012 = vsub.f32 %v3402, %v4008
    %v4013 = vsub.f32 %v3475, %v3993
    %v4014 = vsub.f32 %v3548, %v3998
    %v4015 = vsub.f32 %v3621, %v4003
    %v4016 = vsub.f32 %v3694, %v4008
    %v4017 = vsub.f32 %v3767, %v3993
    %v4018 = vsub.f32 %v3840, %v3998
    %v4019 = vsub.f32 %v3913, %v4003
    %v4020 = vsub.f32 %v3986, %v4008
    %v4021 = vmul.f32 %v4009, 1.442695
    %v4022 = vpow.pop %v4021
    %v4023 = vmul.f32 %v4010, 1.442695
    %v4024 = vpow.pop %v4023
    %v4025 = vmul.f32 %v4011, 1.442695
    %v4026 = vpow.pop %v4025
    %v4027 = vmul.f32 %v4012, 1.442695
    %v4028 = vpow.pop %v4027
    %v4029 = vmul.f32 %v4013, 1.442695
    %v4030 = vpow.pop %v4029
    %v4031 = vmul.f32 %v4014, 1.442695
    %v4032 = vpow.pop %v4031
    %v4033 = vmul.f32 %v4015, 1.442695
    %v4034 = vpow.pop %v4033
    %v4035 = vmul.f32 %v4016, 1.442695
    %v4036 = vpow.pop %v4035
    %v4037 = vmul.f32 %v4017, 1.442695
    %v4038 = vpow.pop %v4037
    %v4039 = vmul.f32 %v4018, 1.442695
    %v4040 = vpow.pop %v4039
    %v4041 = vmul.f32 %v4019, 1.442695
    %v4042 = vpow.pop %v4041
    %v4043 = vmul.f32 %v4020, 1.442695
    %v4044 = vpow.pop %v4043
    %v4045 = vsel %vm2200, %v4022, 0.0
    %v4046 = vsel %vm2200, %v4030, 0.0
    %v4047 = vadd.f32 %v4045, %v4046
    %v4048 = vsel %vm2200, %v4038, 0.0
    %v4049 = vadd.f32 %v4047, %v4048
    %v4050 = vsel %vm2200, %v4024, 0.0
    %v4051 = vsel %vm2200, %v4032, 0.0
    %v4052 = vadd.f32 %v4050, %v4051
    %v4053 = vsel %vm2200, %v4040, 0.0
    %v4054 = vadd.f32 %v4052, %v4053
    %v4055 = vsel %vm2200, %v4026, 0.0
    %v4056 = vsel %vm2200, %v4034, 0.0
    %v4057 = vadd.f32 %v4055, %v4056
    %v4058 = vsel %vm2200, %v4042, 0.0
    %v4059 = vadd.f32 %v4057, %v4058
    %v4060 = vsel %vm2200, %v4028, 0.0
    %v4061 = vsel %vm2200, %v4036, 0.0
    %v4062 = vadd.f32 %v4060, %v4061
    %v4063 = vsel %vm2200, %v4044, 0.0
    %v4064 = vadd.f32 %v4062, %v4063
    %v4065 = vrcp.pop %v4049
    %v4066 = vrcp.pop %v4054
    %v4067 = vrcp.pop %v4059
    %v4068 = vrcp.pop %v4064
    %v4069 = vmul.f32 %v4022, %v4065
    %v4070 = vmul.f32 %v4024, %v4066
    %v4071 = vmul.f32 %v4026, %v4067
    %v4072 = vmul.f32 %v4028, %v4068
    %v4073 = vmul.f32 %v4030, %v4065
    %v4074 = vmul.f32 %v4032, %v4066
    %v4075 = vmul.f32 %v4034, %v4067
    %v4076 = vmul.f32 %v4036, %v4068
    %v4077 = vmul.f32 %v4038, %v4065
    %v4078 = vmul.f32 %v4040, %v4066
    %v4079 = vmul.f32 %v4042, %v4067
    %v4080 = vmul.f32 %v4044, %v4068
    %v4081 = vsub.f32 %v2274, %v2578
    %v4082 = vsub.f32 %v2350, %v2654
    %v4083 = vsub.f32 %v2426, %v2730
    %v4084 = vsub.f32 %v2502, %v2806
    %v4085 = vand.u32 2147483647, %v4081
    %v4086 = vand.u32 2147483647, %v4082
    %v4087 = vand.u32 2147483647, %v4083
    %v4088 = vand.u32 2147483647, %v4084
    %v4089 = vsub.f32 %v2274, %v2882
    %v4090 = vsub.f32 %v2350, %v2958
    %v4091 = vsub.f32 %v2426, %v3034
    %v4092 = vsub.f32 %v2502, %v3110
    %v4093 = vand.u32 2147483647, %v4089
    %v4094 = vand.u32 2147483647, %v4090
    %v4095 = vand.u32 2147483647, %v4091
    %v4096 = vand.u32 2147483647, %v4092
    %v4097 = vadd.f32 %v4085, %v4093
    %v4098 = vadd.f32 %v4086, %v4094
    %v4099 = vadd.f32 %v4087, %v4095
    %v4100 = vadd.f32 %v4088, %v4096
    %v4101 = vsub.f32 %v2578, %v2882
    %v4102 = vsub.f32 %v2654, %v2958
    %v4103 = vsub.f32 %v2730, %v3034
    %v4104 = vsub.f32 %v2806, %v3110
    %v4105 = vand.u32 2147483647, %v4101
    %v4106 = vand.u32 2147483647, %v4102
    %v4107 = vand.u32 2147483647, %v4103
    %v4108 = vand.u32 2147483647, %v4104
    %v4109 = vadd.f32 %v4097, %v4105
    %v4110 = vadd.f32 %v4098, %v4106
    %v4111 = vadd.f32 %v4099, %v4107
    %v4112 = vadd.f32 %v4100, %v4108
    %v4113 = vsub.f32 0.0, %v4109
    %v4114 = vsub.f32 0.0, %v4110
    %v4115 = vsub.f32 0.0, %v4111
    %v4116 = vsub.f32 0.0, %v4112
    %v4117 = vmul.f32 %v4113, 0.33333334
    %v4118 = vmul.f32 %v4114, 0.33333334
    %v4119 = vmul.f32 %v4115, 0.33333334
    %v4120 = vmul.f32 %v4116, 0.33333334
    %v4121 = vsel %vm2200, %v4117, -inf
    %4122 = vmax.xlane.f32.xlu0 %v4121
    %v4123 = vpop.xlane.xlu0 %4122
    %v4124 = vsel %vm2200, %v4118, -inf
    %4125 = vmax.xlane.f32.xlu0 %v4124
    %v4126 = vpop.xlane.xlu0 %4125
    %v4127 = vsel %vm2200, %v4119, -inf
    %4128 = vmax.xlane.f32.xlu0 %v4127
    %v4129 = vpop.xlane.xlu0 %4128
    %v4130 = vsel %vm2200, %v4120, -inf
    %4131 = vmax.xlane.f32.xlu0 %v4130
    %v4132 = vpop.xlane.xlu0 %4131
    %v4133 = vsub.f32 %v4117, %v4123
    %v4134 = vsub.f32 %v4118, %v4126
    %v4135 = vsub.f32 %v4119, %v4129
    %v4136 = vsub.f32 %v4120, %v4132
    %v4137 = vmul.f32 %v4133, 1.442695
    %v4138 = vpow.pop %v4137
    %v4139 = vmul.f32 %v4134, 1.442695
    %v4140 = vpow.pop %v4139
    %v4141 = vmul.f32 %v4135, 1.442695
    %v4142 = vpow.pop %v4141
    %v4143 = vmul.f32 %v4136, 1.442695
    %v4144 = vpow.pop %v4143
    %v4145 = vsel %vm2200, %v4138, 0.0
    %4146 = vadd.xlane.f32.xlu0 %v4145
    %v4147 = vpop.xlane.xlu0 %4146
    %v4148 = vsel %vm2200, %v4140, 0.0
    %4149 = vadd.xlane.f32.xlu0 %v4148
    %v4150 = vpop.xlane.xlu0 %4149
    %v4151 = vsel %vm2200, %v4142, 0.0
    %4152 = vadd.xlane.f32.xlu0 %v4151
    %v4153 = vpop.xlane.xlu0 %4152
    %v4154 = vsel %vm2200, %v4144, 0.0
    %4155 = vadd.xlane.f32.xlu0 %v4154
    %v4156 = vpop.xlane.xlu0 %4155
    %v4157 = vrcp.pop %v4147
    %v4158 = vrcp.pop %v4150
    %v4159 = vrcp.pop %v4153
    %v4160 = vrcp.pop %v4156
    %v4161 = vmul.f32 %v4138, %v4157
    %v4162 = vmul.f32 %v4140, %v4158
    %v4163 = vmul.f32 %v4142, %v4159
    %v4164 = vmul.f32 %v4144, %v4160
    %v4165 = vsel %vm2200, %v2274, -inf
    %4166 = vmax.xlane.f32.xlu0 %v4165
    %v4167 = vpop.xlane.xlu0 %4166
    %v4168 = vsel %vm2200, %v2350, -inf
    %4169 = vmax.xlane.f32.xlu0 %v4168
    %v4170 = vpop.xlane.xlu0 %4169
    %v4171 = vsel %vm2200, %v2426, -inf
    %4172 = vmax.xlane.f32.xlu0 %v4171
    %v4173 = vpop.xlane.xlu0 %4172
    %v4174 = vsel %vm2200, %v2502, -inf
    %4175 = vmax.xlane.f32.xlu0 %v4174
    %v4176 = vpop.xlane.xlu0 %4175
    %v4177 = vsel %vm2200, %v2578, -inf
    %4178 = vmax.xlane.f32.xlu0 %v4177
    %v4179 = vpop.xlane.xlu0 %4178
    %v4180 = vsel %vm2200, %v2654, -inf
    %4181 = vmax.xlane.f32.xlu0 %v4180
    %v4182 = vpop.xlane.xlu0 %4181
    %v4183 = vsel %vm2200, %v2730, -inf
    %4184 = vmax.xlane.f32.xlu0 %v4183
    %v4185 = vpop.xlane.xlu0 %4184
    %v4186 = vsel %vm2200, %v2806, -inf
    %4187 = vmax.xlane.f32.xlu0 %v4186
    %v4188 = vpop.xlane.xlu0 %4187
    %v4189 = vsel %vm2200, %v2882, -inf
    %4190 = vmax.xlane.f32.xlu0 %v4189
    %v4191 = vpop.xlane.xlu0 %4190
    %v4192 = vsel %vm2200, %v2958, -inf
    %4193 = vmax.xlane.f32.xlu0 %v4192
    %v4194 = vpop.xlane.xlu0 %4193
    %v4195 = vsel %vm2200, %v3034, -inf
    %4196 = vmax.xlane.f32.xlu0 %v4195
    %v4197 = vpop.xlane.xlu0 %4196
    %v4198 = vsel %vm2200, %v3110, -inf
    %4199 = vmax.xlane.f32.xlu0 %v4198
    %v4200 = vpop.xlane.xlu0 %4199
    %v4201 = vsub.f32 %v2274, %v4167
    %v4202 = vsub.f32 %v2350, %v4170
    %v4203 = vsub.f32 %v2426, %v4173
    %v4204 = vsub.f32 %v2502, %v4176
    %v4205 = vsub.f32 %v2578, %v4179
    %v4206 = vsub.f32 %v2654, %v4182
    %v4207 = vsub.f32 %v2730, %v4185
    %v4208 = vsub.f32 %v2806, %v4188
    %v4209 = vsub.f32 %v2882, %v4191
    %v4210 = vsub.f32 %v2958, %v4194
    %v4211 = vsub.f32 %v3034, %v4197
    %v4212 = vsub.f32 %v3110, %v4200
    %v4213 = vmul.f32 %v4201, 1.442695
    %v4214 = vpow.pop %v4213
    %v4215 = vmul.f32 %v4202, 1.442695
    %v4216 = vpow.pop %v4215
    %v4217 = vmul.f32 %v4203, 1.442695
    %v4218 = vpow.pop %v4217
    %v4219 = vmul.f32 %v4204, 1.442695
    %v4220 = vpow.pop %v4219
    %v4221 = vmul.f32 %v4205, 1.442695
    %v4222 = vpow.pop %v4221
    %v4223 = vmul.f32 %v4206, 1.442695
    %v4224 = vpow.pop %v4223
    %v4225 = vmul.f32 %v4207, 1.442695
    %v4226 = vpow.pop %v4225
    %v4227 = vmul.f32 %v4208, 1.442695
    %v4228 = vpow.pop %v4227
    %v4229 = vmul.f32 %v4209, 1.442695
    %v4230 = vpow.pop %v4229
    %v4231 = vmul.f32 %v4210, 1.442695
    %v4232 = vpow.pop %v4231
    %v4233 = vmul.f32 %v4211, 1.442695
    %v4234 = vpow.pop %v4233
    %v4235 = vmul.f32 %v4212, 1.442695
    %v4236 = vpow.pop %v4235
    %v4237 = vsel %vm2200, %v4214, 0.0
    %4238 = vadd.xlane.f32.xlu0 %v4237
    %v4239 = vpop.xlane.xlu0 %4238
    %v4240 = vsel %vm2200, %v4216, 0.0
    %4241 = vadd.xlane.f32.xlu0 %v4240
    %v4242 = vpop.xlane.xlu0 %4241
    %v4243 = vsel %vm2200, %v4218, 0.0
    %4244 = vadd.xlane.f32.xlu0 %v4243
    %v4245 = vpop.xlane.xlu0 %4244
    %v4246 = vsel %vm2200, %v4220, 0.0
    %4247 = vadd.xlane.f32.xlu0 %v4246
    %v4248 = vpop.xlane.xlu0 %4247
    %v4249 = vsel %vm2200, %v4222, 0.0
    %4250 = vadd.xlane.f32.xlu0 %v4249
    %v4251 = vpop.xlane.xlu0 %4250
    %v4252 = vsel %vm2200, %v4224, 0.0
    %4253 = vadd.xlane.f32.xlu0 %v4252
    %v4254 = vpop.xlane.xlu0 %4253
    %v4255 = vsel %vm2200, %v4226, 0.0
    %4256 = vadd.xlane.f32.xlu0 %v4255
    %v4257 = vpop.xlane.xlu0 %4256
    %v4258 = vsel %vm2200, %v4228, 0.0
    %4259 = vadd.xlane.f32.xlu0 %v4258
    %v4260 = vpop.xlane.xlu0 %4259
    %v4261 = vsel %vm2200, %v4230, 0.0
    %4262 = vadd.xlane.f32.xlu0 %v4261
    %v4263 = vpop.xlane.xlu0 %4262
    %v4264 = vsel %vm2200, %v4232, 0.0
    %4265 = vadd.xlane.f32.xlu0 %v4264
    %v4266 = vpop.xlane.xlu0 %4265
    %v4267 = vsel %vm2200, %v4234, 0.0
    %4268 = vadd.xlane.f32.xlu0 %v4267
    %v4269 = vpop.xlane.xlu0 %4268
    %v4270 = vsel %vm2200, %v4236, 0.0
    %4271 = vadd.xlane.f32.xlu0 %v4270
    %v4272 = vpop.xlane.xlu0 %4271
    %v4273 = vrcp.pop %v4239
    %v4274 = vrcp.pop %v4242
    %v4275 = vrcp.pop %v4245
    %v4276 = vrcp.pop %v4248
    %v4277 = vrcp.pop %v4251
    %v4278 = vrcp.pop %v4254
    %v4279 = vrcp.pop %v4257
    %v4280 = vrcp.pop %v4260
    %v4281 = vrcp.pop %v4263
    %v4282 = vrcp.pop %v4266
    %v4283 = vrcp.pop %v4269
    %v4284 = vrcp.pop %v4272
    %v4285 = vmul.f32 %v4214, %v4273
    %v4286 = vmul.f32 %v4216, %v4274
    %v4287 = vmul.f32 %v4218, %v4275
    %v4288 = vmul.f32 %v4220, %v4276
    %v4289 = vmul.f32 %v4222, %v4277
    %v4290 = vmul.f32 %v4224, %v4278
    %v4291 = vmul.f32 %v4226, %v4279
    %v4292 = vmul.f32 %v4228, %v4280
    %v4293 = vmul.f32 %v4230, %v4281
    %v4294 = vmul.f32 %v4232, %v4282
    %v4295 = vmul.f32 %v4234, %v4283
    %v4296 = vmul.f32 %v4236, %v4284
    %v4297 = vmul.f32 %v4285, %v4069
    %v4298 = vmul.f32 %v4286, %v4070
    %v4299 = vmul.f32 %v4287, %v4071
    %v4300 = vmul.f32 %v4288, %v4072
    %v4301 = vmul.f32 %v4289, %v4073
    %v4302 = vmul.f32 %v4290, %v4074
    %v4303 = vmul.f32 %v4291, %v4075
    %v4304 = vmul.f32 %v4292, %v4076
    %v4305 = vmul.f32 %v4293, %v4077
    %v4306 = vmul.f32 %v4294, %v4078
    %v4307 = vmul.f32 %v4295, %v4079
    %v4308 = vmul.f32 %v4296, %v4080
    %v4309 = vsel %vm2200, %v4297, 0.0
    %v4310 = vsel %vm2200, %v4301, 0.0
    %v4311 = vadd.f32 %v4309, %v4310
    %v4312 = vsel %vm2200, %v4305, 0.0
    %v4313 = vadd.f32 %v4311, %v4312
    %v4314 = vsel %vm2200, %v4298, 0.0
    %v4315 = vsel %vm2200, %v4302, 0.0
    %v4316 = vadd.f32 %v4314, %v4315
    %v4317 = vsel %vm2200, %v4306, 0.0
    %v4318 = vadd.f32 %v4316, %v4317
    %v4319 = vsel %vm2200, %v4299, 0.0
    %v4320 = vsel %vm2200, %v4303, 0.0
    %v4321 = vadd.f32 %v4319, %v4320
    %v4322 = vsel %vm2200, %v4307, 0.0
    %v4323 = vadd.f32 %v4321, %v4322
    %v4324 = vsel %vm2200, %v4300, 0.0
    %v4325 = vsel %vm2200, %v4304, 0.0
    %v4326 = vadd.f32 %v4324, %v4325
    %v4327 = vsel %vm2200, %v4308, 0.0
    %v4328 = vadd.f32 %v4326, %v4327
    %v4329 = vmul.f32 %v4313, %v4161
    %v4330 = vmul.f32 %v4318, %v4162
    %v4331 = vmul.f32 %v4323, %v4163
    %v4332 = vmul.f32 %v4328, %v4164
    %v4333 = vsel %vm2200, %v4329, -inf
    %4334 = vmax.xlane.f32.xlu0 %v4333
    %v4335 = vpop.xlane.xlu0 %4334
    %v4336 = vsel %vm2200, %v4330, -inf
    %4337 = vmax.xlane.f32.xlu0 %v4336
    %v4338 = vpop.xlane.xlu0 %4337
    %v4339 = vsel %vm2200, %v4331, -inf
    %4340 = vmax.xlane.f32.xlu0 %v4339
    %v4341 = vpop.xlane.xlu0 %4340
    %v4342 = vsel %vm2200, %v4332, -inf
    %4343 = vmax.xlane.f32.xlu0 %v4342
    %v4344 = vpop.xlane.xlu0 %4343
    %v4345 = vsub.f32 %v4329, %v4335
    %v4346 = vsub.f32 %v4330, %v4338
    %v4347 = vsub.f32 %v4331, %v4341
    %v4348 = vsub.f32 %v4332, %v4344
    %v4349 = vmul.f32 %v4345, 1.442695
    %v4350 = vpow.pop %v4349
    %v4351 = vmul.f32 %v4346, 1.442695
    %v4352 = vpow.pop %v4351
    %v4353 = vmul.f32 %v4347, 1.442695
    %v4354 = vpow.pop %v4353
    %v4355 = vmul.f32 %v4348, 1.442695
    %v4356 = vpow.pop %v4355
    %v4357 = vsel %vm2200, %v4350, 0.0
    %4358 = vadd.xlane.f32.xlu0 %v4357
    %v4359 = vpop.xlane.xlu0 %4358
    %v4360 = vsel %vm2200, %v4352, 0.0
    %4361 = vadd.xlane.f32.xlu0 %v4360
    %v4362 = vpop.xlane.xlu0 %4361
    %v4363 = vsel %vm2200, %v4354, 0.0
    %4364 = vadd.xlane.f32.xlu0 %v4363
    %v4365 = vpop.xlane.xlu0 %4364
    %v4366 = vsel %vm2200, %v4356, 0.0
    %4367 = vadd.xlane.f32.xlu0 %v4366
    %v4368 = vpop.xlane.xlu0 %4367
    %v4369 = vrcp.pop %v4359
    %v4370 = vrcp.pop %v4362
    %v4371 = vrcp.pop %v4365
    %v4372 = vrcp.pop %v4368
    %v4373 = vmul.f32 %v4350, %v4369
    %v4374 = vmul.f32 %v4352, %v4370
    %v4375 = vmul.f32 %v4354, %v4371
    %v4376 = vmul.f32 %v4356, %v4372
    %v4377 = vadd.f32 %v4073, %v4077
    %v4378 = vadd.f32 %v4074, %v4078
    %v4379 = vadd.f32 %v4075, %v4079
    %v4380 = vadd.f32 %v4076, %v4080
    %v4381 = vsel %vm2200, %v4377, 0.0
    %v4382 = vsel %vm2200, %v4378, 0.0
    %v4383 = vadd.f32 %v4381, %v4382
    %v4384 = vsel %vm2200, %v4379, 0.0
    %v4385 = vadd.f32 %v4383, %v4384
    %v4386 = vsel %vm2200, %v4380, 0.0
    %v4387 = vadd.f32 %v4385, %v4386
    %v4388 = vsel %vm2200, %v4387, 0.0
    %4389 = vadd.xlane.f32.xlu0 %v4388
    %v4390 = vpop.xlane.xlu0 %4389
    %v4391 = vrot.slane %v4390, 4
    %v4392 = vadd.f32 %v4390, %v4391
    %v4393 = vrot.slane %v4392, 2
    %v4394 = vadd.f32 %v4392, %v4393
    %v4395 = vrot.slane %v4394, 1
    %v4396 = vadd.f32 %v4394, %v4395
    %v4397 = vmul.f32 %v4396, 0.00390625
    %vm4398 = vcmask 0
    %4399 = vst.msk [vmem:[#allocation3] sm:$0x1] %vm4398, %v4397
    %v4401 = vsel %vm2200, %v4373, 0
    %4403 = vmatprep.subr.mxu0 0.0
    %4404 = vmatpush1.msra.mxu0 %v2124
    %4405 = vmatprep.subr.mxu0 0.0
    %4406 = vmatpush1.msra.mxu0 0.0
    %4407 = vmatprep.subr.mxu0 0.0
    %4408 = vmatpush1.msra.mxu0 0.0
    %4409 = vmatprep.subr.mxu0 0.0
    %4410 = vmatpush1.msra.mxu0 0.0
    %4411 = vmatprep.subr.mxu0 0.0
    %4412 = vmatpush1.msra.mxu0 0.0
    %4413 = vmatprep.subr.mxu0 0.0
    %4414 = vmatpush1.msra.mxu0 0.0
    %4415 = vmatprep.subr.mxu0 0.0
    %4416 = vmatpush1.msra.mxu0 0.0
    %4417 = vmatprep.subr.mxu0 0.0
    %4418 = vmatpush1.msra.mxu0 0.0
    %4419 = vmatprep.subr.mxu0 0.0
    %4420 = vmatpush1.msra.mxu0 0.0
    %4421 = vmatprep.subr.mxu0 0.0
    %4422 = vmatpush1.msra.mxu0 0.0
    %4423 = vmatprep.subr.mxu0 0.0
    %4424 = vmatpush1.msra.mxu0 0.0
    %4425 = vmatprep.subr.mxu0 0.0
    %4426 = vmatpush1.msra.mxu0 0.0
    %4427 = vmatprep.subr.mxu0 0.0
    %4428 = vmatpush1.msra.mxu0 0.0
    %4429 = vmatprep.subr.mxu0 0.0
    %4430 = vmatpush1.msra.mxu0 0.0
    %4431 = vmatprep.subr.mxu0 0.0
    %4432 = vmatpush1.msra.mxu0 0.0
    %4433 = vmatprep.subr.mxu0 0.0
    %4434 = vmatpush1.msra.mxu0 0.0
    %4435 = vmatprep.subr.mxu0 0.0
    %4436 = vmatpush1.msra.mxu0 0.0
    %4437 = vmatprep.subr.mxu0 0.0
    %4438 = vmatpush1.msra.mxu0 0.0
    %4439 = vmatprep.subr.mxu0 0.0
    %4440 = vmatpush1.msra.mxu0 0.0
    %4441 = vmatprep.subr.mxu0 0.0
    %4442 = vmatpush1.msra.mxu0 0.0
    %4443 = vmatprep.subr.mxu0 0.0
    %4444 = vmatpush1.msra.mxu0 0.0
    %4445 = vmatprep.subr.mxu0 0.0
    %4446 = vmatpush1.msra.mxu0 0.0
    %4447 = vmatprep.subr.mxu0 0.0
    %4448 = vmatpush1.msra.mxu0 0.0
    %4449 = vmatprep.subr.mxu0 0.0
    %4450 = vmatpush1.msra.mxu0 0.0
    %4451 = vmatprep.subr.mxu0 0.0
    %4452 = vmatpush1.msra.mxu0 0.0
    %4453 = vmatprep.subr.mxu0 0.0
    %4454 = vmatpush1.msra.mxu0 0.0
    %4455 = vmatprep.subr.mxu0 0.0
    %4456 = vmatpush1.msra.mxu0 0.0
    %4457 = vmatprep.subr.mxu0 0.0
    %4458 = vmatpush1.msra.mxu0 0.0
    %4459 = vmatprep.subr.mxu0 0.0
    %4460 = vmatpush1.msra.mxu0 0.0
    %4461 = vmatprep.subr.mxu0 0.0
    %4462 = vmatpush1.msra.mxu0 0.0
    %4463 = vmatprep.subr.mxu0 0.0
    %4464 = vmatpush1.msra.mxu0 0.0
    %4465 = vmatprep.subr.mxu0 0.0
    %4466 = vmatpush1.msra.mxu0 0.0
    %4467 = vmatprep.mubr.f32.mxu0 0.0
    %4468 = vmatmul.mubr.f32.gmra.mrb[0].mxu0 %v4401
    %v4469 = vpop.f32.mrb[0].mxu0
    %v4470 = vadd.f32 0.0, %v4469
    %v4471 = vpop.f32.mrb[0].mxu0
    %4472 = vdwg.mxu0
    %v4474 = vsel %vm2200, %v4374, 0
    %4476 = vmatprep.subr.mxu0 0.0
    %4477 = vmatpush1.msra.mxu0 %v2125
    %4478 = vmatprep.subr.mxu0 0.0
    %4479 = vmatpush1.msra.mxu0 0.0
    %4480 = vmatprep.subr.mxu0 0.0
    %4481 = vmatpush1.msra.mxu0 0.0
    %4482 = vmatprep.subr.mxu0 0.0
    %4483 = vmatpush1.msra.mxu0 0.0
    %4484 = vmatprep.subr.mxu0 0.0
    %4485 = vmatpush1.msra.mxu0 0.0
    %4486 = vmatprep.subr.mxu0 0.0
    %4487 = vmatpush1.msra.mxu0 0.0
    %4488 = vmatprep.subr.mxu0 0.0
    %4489 = vmatpush1.msra.mxu0 0.0
    %4490 = vmatprep.subr.mxu0 0.0
    %4491 = vmatpush1.msra.mxu0 0.0
    %4492 = vmatprep.subr.mxu0 0.0
    %4493 = vmatpush1.msra.mxu0 0.0
    %4494 = vmatprep.subr.mxu0 0.0
    %4495 = vmatpush1.msra.mxu0 0.0
    %4496 = vmatprep.subr.mxu0 0.0
    %4497 = vmatpush1.msra.mxu0 0.0
    %4498 = vmatprep.subr.mxu0 0.0
    %4499 = vmatpush1.msra.mxu0 0.0
    %4500 = vmatprep.subr.mxu0 0.0
    %4501 = vmatpush1.msra.mxu0 0.0
    %4502 = vmatprep.subr.mxu0 0.0
    %4503 = vmatpush1.msra.mxu0 0.0
    %4504 = vmatprep.subr.mxu0 0.0
    %4505 = vmatpush1.msra.mxu0 0.0
    %4506 = vmatprep.subr.mxu0 0.0
    %4507 = vmatpush1.msra.mxu0 0.0
    %4508 = vmatprep.subr.mxu0 0.0
    %4509 = vmatpush1.msra.mxu0 0.0
    %4510 = vmatprep.subr.mxu0 0.0
    %4511 = vmatpush1.msra.mxu0 0.0
    %4512 = vmatprep.subr.mxu0 0.0
    %4513 = vmatpush1.msra.mxu0 0.0
    %4514 = vmatprep.subr.mxu0 0.0
    %4515 = vmatpush1.msra.mxu0 0.0
    %4516 = vmatprep.subr.mxu0 0.0
    %4517 = vmatpush1.msra.mxu0 0.0
    %4518 = vmatprep.subr.mxu0 0.0
    %4519 = vmatpush1.msra.mxu0 0.0
    %4520 = vmatprep.subr.mxu0 0.0
    %4521 = vmatpush1.msra.mxu0 0.0
    %4522 = vmatprep.subr.mxu0 0.0
    %4523 = vmatpush1.msra.mxu0 0.0
    %4524 = vmatprep.subr.mxu0 0.0
    %4525 = vmatpush1.msra.mxu0 0.0
    %4526 = vmatprep.subr.mxu0 0.0
    %4527 = vmatpush1.msra.mxu0 0.0
    %4528 = vmatprep.subr.mxu0 0.0
    %4529 = vmatpush1.msra.mxu0 0.0
    %4530 = vmatprep.subr.mxu0 0.0
    %4531 = vmatpush1.msra.mxu0 0.0
    %4532 = vmatprep.subr.mxu0 0.0
    %4533 = vmatpush1.msra.mxu0 0.0
    %4534 = vmatprep.subr.mxu0 0.0
    %4535 = vmatpush1.msra.mxu0 0.0
    %4536 = vmatprep.subr.mxu0 0.0
    %4537 = vmatpush1.msra.mxu0 0.0
    %4538 = vmatprep.subr.mxu0 0.0
    %4539 = vmatpush1.msra.mxu0 0.0
    %4540 = vmatprep.mubr.f32.mxu0 0.0
    %4541 = vmatmul.mubr.f32.gmra.mrb[0].mxu0 %v4474
    %v4542 = vpop.f32.mrb[0].mxu0
    %v4543 = vadd.f32 0.0, %v4542
    %v4544 = vpop.f32.mrb[0].mxu0
    %4545 = vdwg.mxu0
    %v4547 = vsel %vm2200, %v4375, 0
    %4549 = vmatprep.subr.mxu0 0.0
    %4550 = vmatpush1.msra.mxu0 %v2126
    %4551 = vmatprep.subr.mxu0 0.0
    %4552 = vmatpush1.msra.mxu0 0.0
    %4553 = vmatprep.subr.mxu0 0.0
    %4554 = vmatpush1.msra.mxu0 0.0
    %4555 = vmatprep.subr.mxu0 0.0
    %4556 = vmatpush1.msra.mxu0 0.0
    %4557 = vmatprep.subr.mxu0 0.0
    %4558 = vmatpush1.msra.mxu0 0.0
    %4559 = vmatprep.subr.mxu0 0.0
    %4560 = vmatpush1.msra.mxu0 0.0
    %4561 = vmatprep.subr.mxu0 0.0
    %4562 = vmatpush1.msra.mxu0 0.0
    %4563 = vmatprep.subr.mxu0 0.0
    %4564 = vmatpush1.msra.mxu0 0.0
    %4565 = vmatprep.subr.mxu0 0.0
    %4566 = vmatpush1.msra.mxu0 0.0
    %4567 = vmatprep.subr.mxu0 0.0
    %4568 = vmatpush1.msra.mxu0 0.0
    %4569 = vmatprep.subr.mxu0 0.0
    %4570 = vmatpush1.msra.mxu0 0.0
    %4571 = vmatprep.subr.mxu0 0.0
    %4572 = vmatpush1.msra.mxu0 0.0
    %4573 = vmatprep.subr.mxu0 0.0
    %4574 = vmatpush1.msra.mxu0 0.0
    %4575 = vmatprep.subr.mxu0 0.0
    %4576 = vmatpush1.msra.mxu0 0.0
    %4577 = vmatprep.subr.mxu0 0.0
    %4578 = vmatpush1.msra.mxu0 0.0
    %4579 = vmatprep.subr.mxu0 0.0
    %4580 = vmatpush1.msra.mxu0 0.0
    %4581 = vmatprep.subr.mxu0 0.0
    %4582 = vmatpush1.msra.mxu0 0.0
    %4583 = vmatprep.subr.mxu0 0.0
    %4584 = vmatpush1.msra.mxu0 0.0
    %4585 = vmatprep.subr.mxu0 0.0
    %4586 = vmatpush1.msra.mxu0 0.0
    %4587 = vmatprep.subr.mxu0 0.0
    %4588 = vmatpush1.msra.mxu0 0.0
    %4589 = vmatprep.subr.mxu0 0.0
    %4590 = vmatpush1.msra.mxu0 0.0
    %4591 = vmatprep.subr.mxu0 0.0
    %4592 = vmatpush1.msra.mxu0 0.0
    %4593 = vmatprep.subr.mxu0 0.0
    %4594 = vmatpush1.msra.mxu0 0.0
    %4595 = vmatprep.subr.mxu0 0.0
    %4596 = vmatpush1.msra.mxu0 0.0
    %4597 = vmatprep.subr.mxu0 0.0
    %4598 = vmatpush1.msra.mxu0 0.0
    %4599 = vmatprep.subr.mxu0 0.0
    %4600 = vmatpush1.msra.mxu0 0.0
    %4601 = vmatprep.subr.mxu0 0.0
    %4602 = vmatpush1.msra.mxu0 0.0
    %4603 = vmatprep.subr.mxu0 0.0
    %4604 = vmatpush1.msra.mxu0 0.0
    %4605 = vmatprep.subr.mxu0 0.0
    %4606 = vmatpush1.msra.mxu0 0.0
    %4607 = vmatprep.subr.mxu0 0.0
    %4608 = vmatpush1.msra.mxu0 0.0
    %4609 = vmatprep.subr.mxu0 0.0
    %4610 = vmatpush1.msra.mxu0 0.0
    %4611 = vmatprep.subr.mxu0 0.0
    %4612 = vmatpush1.msra.mxu0 0.0
    %4613 = vmatprep.mubr.f32.mxu0 0.0
    %4614 = vmatmul.mubr.f32.gmra.mrb[0].mxu0 %v4547
    %v4615 = vpop.f32.mrb[0].mxu0
    %v4616 = vadd.f32 0.0, %v4615
    %v4617 = vpop.f32.mrb[0].mxu0
    %4618 = vdwg.mxu0
    %v4620 = vsel %vm2200, %v4376, 0
    %4622 = vmatprep.subr.mxu0 0.0
    %4623 = vmatpush1.msra.mxu0 %v2127
    %4624 = vmatprep.subr.mxu0 0.0
    %4625 = vmatpush1.msra.mxu0 0.0
    %4626 = vmatprep.subr.mxu0 0.0
    %4627 = vmatpush1.msra.mxu0 0.0
    %4628 = vmatprep.subr.mxu0 0.0
    %4629 = vmatpush1.msra.mxu0 0.0
    %4630 = vmatprep.subr.mxu0 0.0
    %4631 = vmatpush1.msra.mxu0 0.0
    %4632 = vmatprep.subr.mxu0 0.0
    %4633 = vmatpush1.msra.mxu0 0.0
    %4634 = vmatprep.subr.mxu0 0.0
    %4635 = vmatpush1.msra.mxu0 0.0
    %4636 = vmatprep.subr.mxu0 0.0
    %4637 = vmatpush1.msra.mxu0 0.0
    %4638 = vmatprep.subr.mxu0 0.0
    %4639 = vmatpush1.msra.mxu0 0.0
    %4640 = vmatprep.subr.mxu0 0.0
    %4641 = vmatpush1.msra.mxu0 0.0
    %4642 = vmatprep.subr.mxu0 0.0
    %4643 = vmatpush1.msra.mxu0 0.0
    %4644 = vmatprep.subr.mxu0 0.0
    %4645 = vmatpush1.msra.mxu0 0.0
    %4646 = vmatprep.subr.mxu0 0.0
    %4647 = vmatpush1.msra.mxu0 0.0
    %4648 = vmatprep.subr.mxu0 0.0
    %4649 = vmatpush1.msra.mxu0 0.0
    %4650 = vmatprep.subr.mxu0 0.0
    %4651 = vmatpush1.msra.mxu0 0.0
    %4652 = vmatprep.subr.mxu0 0.0
    %4653 = vmatpush1.msra.mxu0 0.0
    %4654 = vmatprep.subr.mxu0 0.0
    %4655 = vmatpush1.msra.mxu0 0.0
    %4656 = vmatprep.subr.mxu0 0.0
    %4657 = vmatpush1.msra.mxu0 0.0
    %4658 = vmatprep.subr.mxu0 0.0
    %4659 = vmatpush1.msra.mxu0 0.0
    %4660 = vmatprep.subr.mxu0 0.0
    %4661 = vmatpush1.msra.mxu0 0.0
    %4662 = vmatprep.subr.mxu0 0.0
    %4663 = vmatpush1.msra.mxu0 0.0
    %4664 = vmatprep.subr.mxu0 0.0
    %4665 = vmatpush1.msra.mxu0 0.0
    %4666 = vmatprep.subr.mxu0 0.0
    %4667 = vmatpush1.msra.mxu0 0.0
    %4668 = vmatprep.subr.mxu0 0.0
    %4669 = vmatpush1.msra.mxu0 0.0
    %4670 = vmatprep.subr.mxu0 0.0
    %4671 = vmatpush1.msra.mxu0 0.0
    %4672 = vmatprep.subr.mxu0 0.0
    %4673 = vmatpush1.msra.mxu0 0.0
    %4674 = vmatprep.subr.mxu0 0.0
    %4675 = vmatpush1.msra.mxu0 0.0
    %4676 = vmatprep.subr.mxu0 0.0
    %4677 = vmatpush1.msra.mxu0 0.0
    %4678 = vmatprep.subr.mxu0 0.0
    %4679 = vmatpush1.msra.mxu0 0.0
    %4680 = vmatprep.subr.mxu0 0.0
    %4681 = vmatpush1.msra.mxu0 0.0
    %4682 = vmatprep.subr.mxu0 0.0
    %4683 = vmatpush1.msra.mxu0 0.0
    %4684 = vmatprep.subr.mxu0 0.0
    %4685 = vmatpush1.msra.mxu0 0.0
    %4686 = vmatprep.mubr.f32.mxu0 0.0
    %4687 = vmatmul.mubr.f32.gmra.mrb[0].mxu0 %v4620
    %v4688 = vpop.f32.mrb[0].mxu0
    %v4689 = vadd.f32 0.0, %v4688
    %v4690 = vpop.f32.mrb[0].mxu0
    %4691 = vdwg.mxu0
    %4692 = vmatprep.subr.mxu0 0.0
    %4693 = vmatpush1.msra.mxu0 %v2128
    %4694 = vmatprep.subr.mxu0 0.0
    %4695 = vmatpush1.msra.mxu0 0.0
    %4696 = vmatprep.subr.mxu0 0.0
    %4697 = vmatpush1.msra.mxu0 0.0
    %4698 = vmatprep.subr.mxu0 0.0
    %4699 = vmatpush1.msra.mxu0 0.0
    %4700 = vmatprep.subr.mxu0 0.0
    %4701 = vmatpush1.msra.mxu0 0.0
    %4702 = vmatprep.subr.mxu0 0.0
    %4703 = vmatpush1.msra.mxu0 0.0
    %4704 = vmatprep.subr.mxu0 0.0
    %4705 = vmatpush1.msra.mxu0 0.0
    %4706 = vmatprep.subr.mxu0 0.0
    %4707 = vmatpush1.msra.mxu0 0.0
    %4708 = vmatprep.subr.mxu0 0.0
    %4709 = vmatpush1.msra.mxu0 0.0
    %4710 = vmatprep.subr.mxu0 0.0
    %4711 = vmatpush1.msra.mxu0 0.0
    %4712 = vmatprep.subr.mxu0 0.0
    %4713 = vmatpush1.msra.mxu0 0.0
    %4714 = vmatprep.subr.mxu0 0.0
    %4715 = vmatpush1.msra.mxu0 0.0
    %4716 = vmatprep.subr.mxu0 0.0
    %4717 = vmatpush1.msra.mxu0 0.0
    %4718 = vmatprep.subr.mxu0 0.0
    %4719 = vmatpush1.msra.mxu0 0.0
    %4720 = vmatprep.subr.mxu0 0.0
    %4721 = vmatpush1.msra.mxu0 0.0
    %4722 = vmatprep.subr.mxu0 0.0
    %4723 = vmatpush1.msra.mxu0 0.0
    %4724 = vmatprep.subr.mxu0 0.0
    %4725 = vmatpush1.msra.mxu0 0.0
    %4726 = vmatprep.subr.mxu0 0.0
    %4727 = vmatpush1.msra.mxu0 0.0
    %4728 = vmatprep.subr.mxu0 0.0
    %4729 = vmatpush1.msra.mxu0 0.0
    %4730 = vmatprep.subr.mxu0 0.0
    %4731 = vmatpush1.msra.mxu0 0.0
    %4732 = vmatprep.subr.mxu0 0.0
    %4733 = vmatpush1.msra.mxu0 0.0
    %4734 = vmatprep.subr.mxu0 0.0
    %4735 = vmatpush1.msra.mxu0 0.0
    %4736 = vmatprep.subr.mxu0 0.0
    %4737 = vmatpush1.msra.mxu0 0.0
    %4738 = vmatprep.subr.mxu0 0.0
    %4739 = vmatpush1.msra.mxu0 0.0
    %4740 = vmatprep.subr.mxu0 0.0
    %4741 = vmatpush1.msra.mxu0 0.0
    %4742 = vmatprep.subr.mxu0 0.0
    %4743 = vmatpush1.msra.mxu0 0.0
    %4744 = vmatprep.subr.mxu0 0.0
    %4745 = vmatpush1.msra.mxu0 0.0
    %4746 = vmatprep.subr.mxu0 0.0
    %4747 = vmatpush1.msra.mxu0 0.0
    %4748 = vmatprep.subr.mxu0 0.0
    %4749 = vmatpush1.msra.mxu0 0.0
    %4750 = vmatprep.subr.mxu0 0.0
    %4751 = vmatpush1.msra.mxu0 0.0
    %4752 = vmatprep.subr.mxu0 0.0
    %4753 = vmatpush1.msra.mxu0 0.0
    %4754 = vmatprep.subr.mxu0 0.0
    %4755 = vmatpush1.msra.mxu0 0.0
    %4756 = vmatprep.mubr.f32.mxu0 0.0
    %4757 = vmatmul.mubr.f32.gmra.mrb[0].mxu0 %v4401
    %v4758 = vpop.f32.mrb[0].mxu0
    %v4759 = vadd.f32 0.0, %v4758
    %v4760 = vpop.f32.mrb[0].mxu0
    %4761 = vdwg.mxu0
    %4762 = vmatprep.subr.mxu0 0.0
    %4763 = vmatpush1.msra.mxu0 %v2129
    %4764 = vmatprep.subr.mxu0 0.0
    %4765 = vmatpush1.msra.mxu0 0.0
    %4766 = vmatprep.subr.mxu0 0.0
    %4767 = vmatpush1.msra.mxu0 0.0
    %4768 = vmatprep.subr.mxu0 0.0
    %4769 = vmatpush1.msra.mxu0 0.0
    %4770 = vmatprep.subr.mxu0 0.0
    %4771 = vmatpush1.msra.mxu0 0.0
    %4772 = vmatprep.subr.mxu0 0.0
    %4773 = vmatpush1.msra.mxu0 0.0
    %4774 = vmatprep.subr.mxu0 0.0
    %4775 = vmatpush1.msra.mxu0 0.0
    %4776 = vmatprep.subr.mxu0 0.0
    %4777 = vmatpush1.msra.mxu0 0.0
    %4778 = vmatprep.subr.mxu0 0.0
    %4779 = vmatpush1.msra.mxu0 0.0
    %4780 = vmatprep.subr.mxu0 0.0
    %4781 = vmatpush1.msra.mxu0 0.0
    %4782 = vmatprep.subr.mxu0 0.0
    %4783 = vmatpush1.msra.mxu0 0.0
    %4784 = vmatprep.subr.mxu0 0.0
    %4785 = vmatpush1.msra.mxu0 0.0
    %4786 = vmatprep.subr.mxu0 0.0
    %4787 = vmatpush1.msra.mxu0 0.0
    %4788 = vmatprep.subr.mxu0 0.0
    %4789 = vmatpush1.msra.mxu0 0.0
    %4790 = vmatprep.subr.mxu0 0.0
    %4791 = vmatpush1.msra.mxu0 0.0
    %4792 = vmatprep.subr.mxu0 0.0
    %4793 = vmatpush1.msra.mxu0 0.0
    %4794 = vmatprep.subr.mxu0 0.0
    %4795 = vmatpush1.msra.mxu0 0.0
    %4796 = vmatprep.subr.mxu0 0.0
    %4797 = vmatpush1.msra.mxu0 0.0
    %4798 = vmatprep.subr.mxu0 0.0
    %4799 = vmatpush1.msra.mxu0 0.0
    %4800 = vmatprep.subr.mxu0 0.0
    %4801 = vmatpush1.msra.mxu0 0.0
    %4802 = vmatprep.subr.mxu0 0.0
    %4803 = vmatpush1.msra.mxu0 0.0
    %4804 = vmatprep.subr.mxu0 0.0
    %4805 = vmatpush1.msra.mxu0 0.0
    %4806 = vmatprep.subr.mxu0 0.0
    %4807 = vmatpush1.msra.mxu0 0.0
    %4808 = vmatprep.subr.mxu0 0.0
    %4809 = vmatpush1.msra.mxu0 0.0
    %4810 = vmatprep.subr.mxu0 0.0
    %4811 = vmatpush1.msra.mxu0 0.0
    %4812 = vmatprep.subr.mxu0 0.0
    %4813 = vmatpush1.msra.mxu0 0.0
    %4814 = vmatprep.subr.mxu0 0.0
    %4815 = vmatpush1.msra.mxu0 0.0
    %4816 = vmatprep.subr.mxu0 0.0
    %4817 = vmatpush1.msra.mxu0 0.0
    %4818 = vmatprep.subr.mxu0 0.0
    %4819 = vmatpush1.msra.mxu0 0.0
    %4820 = vmatprep.subr.mxu0 0.0
    %4821 = vmatpush1.msra.mxu0 0.0
    %4822 = vmatprep.subr.mxu0 0.0
    %4823 = vmatpush1.msra.mxu0 0.0
    %4824 = vmatprep.subr.mxu0 0.0
    %4825 = vmatpush1.msra.mxu0 0.0
    %4826 = vmatprep.mubr.f32.mxu0 0.0
    %4827 = vmatmul.mubr.f32.gmra.mrb[0].mxu0 %v4474
    %v4828 = vpop.f32.mrb[0].mxu0
    %v4829 = vadd.f32 0.0, %v4828
    %v4830 = vpop.f32.mrb[0].mxu0
    %4831 = vdwg.mxu0
    %4832 = vmatprep.subr.mxu0 0.0
    %4833 = vmatpush1.msra.mxu0 %v2130
    %4834 = vmatprep.subr.mxu0 0.0
    %4835 = vmatpush1.msra.mxu0 0.0
    %4836 = vmatprep.subr.mxu0 0.0
    %4837 = vmatpush1.msra.mxu0 0.0
    %4838 = vmatprep.subr.mxu0 0.0
    %4839 = vmatpush1.msra.mxu0 0.0
    %4840 = vmatprep.subr.mxu0 0.0
    %4841 = vmatpush1.msra.mxu0 0.0
    %4842 = vmatprep.subr.mxu0 0.0
    %4843 = vmatpush1.msra.mxu0 0.0
    %4844 = vmatprep.subr.mxu0 0.0
    %4845 = vmatpush1.msra.mxu0 0.0
    %4846 = vmatprep.subr.mxu0 0.0
    %4847 = vmatpush1.msra.mxu0 0.0
    %4848 = vmatprep.subr.mxu0 0.0
    %4849 = vmatpush1.msra.mxu0 0.0
    %4850 = vmatprep.subr.mxu0 0.0
    %4851 = vmatpush1.msra.mxu0 0.0
    %4852 = vmatprep.subr.mxu0 0.0
    %4853 = vmatpush1.msra.mxu0 0.0
    %4854 = vmatprep.subr.mxu0 0.0
    %4855 = vmatpush1.msra.mxu0 0.0
    %4856 = vmatprep.subr.mxu0 0.0
    %4857 = vmatpush1.msra.mxu0 0.0
    %4858 = vmatprep.subr.mxu0 0.0
    %4859 = vmatpush1.msra.mxu0 0.0
    %4860 = vmatprep.subr.mxu0 0.0
    %4861 = vmatpush1.msra.mxu0 0.0
    %4862 = vmatprep.subr.mxu0 0.0
    %4863 = vmatpush1.msra.mxu0 0.0
    %4864 = vmatprep.subr.mxu0 0.0
    %4865 = vmatpush1.msra.mxu0 0.0
    %4866 = vmatprep.subr.mxu0 0.0
    %4867 = vmatpush1.msra.mxu0 0.0
    %4868 = vmatprep.subr.mxu0 0.0
    %4869 = vmatpush1.msra.mxu0 0.0
    %4870 = vmatprep.subr.mxu0 0.0
    %4871 = vmatpush1.msra.mxu0 0.0
    %4872 = vmatprep.subr.mxu0 0.0
    %4873 = vmatpush1.msra.mxu0 0.0
    %4874 = vmatprep.subr.mxu0 0.0
    %4875 = vmatpush1.msra.mxu0 0.0
    %4876 = vmatprep.subr.mxu0 0.0
    %4877 = vmatpush1.msra.mxu0 0.0
    %4878 = vmatprep.subr.mxu0 0.0
    %4879 = vmatpush1.msra.mxu0 0.0
    %4880 = vmatprep.subr.mxu0 0.0
    %4881 = vmatpush1.msra.mxu0 0.0
    %4882 = vmatprep.subr.mxu0 0.0
    %4883 = vmatpush1.msra.mxu0 0.0
    %4884 = vmatprep.subr.mxu0 0.0
    %4885 = vmatpush1.msra.mxu0 0.0
    %4886 = vmatprep.subr.mxu0 0.0
    %4887 = vmatpush1.msra.mxu0 0.0
    %4888 = vmatprep.subr.mxu0 0.0
    %4889 = vmatpush1.msra.mxu0 0.0
    %4890 = vmatprep.subr.mxu0 0.0
    %4891 = vmatpush1.msra.mxu0 0.0
    %4892 = vmatprep.subr.mxu0 0.0
    %4893 = vmatpush1.msra.mxu0 0.0
    %4894 = vmatprep.subr.mxu0 0.0
    %4895 = vmatpush1.msra.mxu0 0.0
    %4896 = vmatprep.mubr.f32.mxu0 0.0
    %4897 = vmatmul.mubr.f32.gmra.mrb[0].mxu0 %v4547
    %v4898 = vpop.f32.mrb[0].mxu0
    %v4899 = vadd.f32 0.0, %v4898
    %v4900 = vpop.f32.mrb[0].mxu0
    %4901 = vdwg.mxu0
    %4902 = vmatprep.subr.mxu0 0.0
    %4903 = vmatpush1.msra.mxu0 %v2131
    %4904 = vmatprep.subr.mxu0 0.0
    %4905 = vmatpush1.msra.mxu0 0.0
    %4906 = vmatprep.subr.mxu0 0.0
    %4907 = vmatpush1.msra.mxu0 0.0
    %4908 = vmatprep.subr.mxu0 0.0
    %4909 = vmatpush1.msra.mxu0 0.0
    %4910 = vmatprep.subr.mxu0 0.0
    %4911 = vmatpush1.msra.mxu0 0.0
    %4912 = vmatprep.subr.mxu0 0.0
    %4913 = vmatpush1.msra.mxu0 0.0
    %4914 = vmatprep.subr.mxu0 0.0
    %4915 = vmatpush1.msra.mxu0 0.0
    %4916 = vmatprep.subr.mxu0 0.0
    %4917 = vmatpush1.msra.mxu0 0.0
    %4918 = vmatprep.subr.mxu0 0.0
    %4919 = vmatpush1.msra.mxu0 0.0
    %4920 = vmatprep.subr.mxu0 0.0
    %4921 = vmatpush1.msra.mxu0 0.0
    %4922 = vmatprep.subr.mxu0 0.0
    %4923 = vmatpush1.msra.mxu0 0.0
    %4924 = vmatprep.subr.mxu0 0.0
    %4925 = vmatpush1.msra.mxu0 0.0
    %4926 = vmatprep.subr.mxu0 0.0
    %4927 = vmatpush1.msra.mxu0 0.0
    %4928 = vmatprep.subr.mxu0 0.0
    %4929 = vmatpush1.msra.mxu0 0.0
    %4930 = vmatprep.subr.mxu0 0.0
    %4931 = vmatpush1.msra.mxu0 0.0
    %4932 = vmatprep.subr.mxu0 0.0
    %4933 = vmatpush1.msra.mxu0 0.0
    %4934 = vmatprep.subr.mxu0 0.0
    %4935 = vmatpush1.msra.mxu0 0.0
    %4936 = vmatprep.subr.mxu0 0.0
    %4937 = vmatpush1.msra.mxu0 0.0
    %4938 = vmatprep.subr.mxu0 0.0
    %4939 = vmatpush1.msra.mxu0 0.0
    %4940 = vmatprep.subr.mxu0 0.0
    %4941 = vmatpush1.msra.mxu0 0.0
    %4942 = vmatprep.subr.mxu0 0.0
    %4943 = vmatpush1.msra.mxu0 0.0
    %4944 = vmatprep.subr.mxu0 0.0
    %4945 = vmatpush1.msra.mxu0 0.0
    %4946 = vmatprep.subr.mxu0 0.0
    %4947 = vmatpush1.msra.mxu0 0.0
    %4948 = vmatprep.subr.mxu0 0.0
    %4949 = vmatpush1.msra.mxu0 0.0
    %4950 = vmatprep.subr.mxu0 0.0
    %4951 = vmatpush1.msra.mxu0 0.0
    %4952 = vmatprep.subr.mxu0 0.0
    %4953 = vmatpush1.msra.mxu0 0.0
    %4954 = vmatprep.subr.mxu0 0.0
    %4955 = vmatpush1.msra.mxu0 0.0
    %4956 = vmatprep.subr.mxu0 0.0
    %4957 = vmatpush1.msra.mxu0 0.0
    %4958 = vmatprep.subr.mxu0 0.0
    %4959 = vmatpush1.msra.mxu0 0.0
    %4960 = vmatprep.subr.mxu0 0.0
    %4961 = vmatpush1.msra.mxu0 0.0
    %4962 = vmatprep.subr.mxu0 0.0
    %4963 = vmatpush1.msra.mxu0 0.0
    %4964 = vmatprep.subr.mxu0 0.0
    %4965 = vmatpush1.msra.mxu0 0.0
    %4966 = vmatprep.mubr.f32.mxu0 0.0
    %4967 = vmatmul.mubr.f32.gmra.mrb[0].mxu0 %v4620
    %v4968 = vpop.f32.mrb[0].mxu0
    %v4969 = vadd.f32 0.0, %v4968
    %v4970 = vpop.f32.mrb[0].mxu0
    %4971 = vdwg.mxu0
    %4972 = vmatprep.subr.mxu0 0.0
    %4973 = vmatpush1.msra.mxu0 %v2196
    %4974 = vmatprep.subr.mxu0 0.0
    %4975 = vmatpush1.msra.mxu0 0.0
    %4976 = vmatprep.subr.mxu0 0.0
    %4977 = vmatpush1.msra.mxu0 0.0
    %4978 = vmatprep.subr.mxu0 0.0
    %4979 = vmatpush1.msra.mxu0 0.0
    %4980 = vmatprep.subr.mxu0 0.0
    %4981 = vmatpush1.msra.mxu0 0.0
    %4982 = vmatprep.subr.mxu0 0.0
    %4983 = vmatpush1.msra.mxu0 0.0
    %4984 = vmatprep.subr.mxu0 0.0
    %4985 = vmatpush1.msra.mxu0 0.0
    %4986 = vmatprep.subr.mxu0 0.0
    %4987 = vmatpush1.msra.mxu0 0.0
    %4988 = vmatprep.subr.mxu0 0.0
    %4989 = vmatpush1.msra.mxu0 0.0
    %4990 = vmatprep.subr.mxu0 0.0
    %4991 = vmatpush1.msra.mxu0 0.0
    %4992 = vmatprep.subr.mxu0 0.0
    %4993 = vmatpush1.msra.mxu0 0.0
    %4994 = vmatprep.subr.mxu0 0.0
    %4995 = vmatpush1.msra.mxu0 0.0
    %4996 = vmatprep.subr.mxu0 0.0
    %4997 = vmatpush1.msra.mxu0 0.0
    %4998 = vmatprep.subr.mxu0 0.0
    %4999 = vmatpush1.msra.mxu0 0.0
    %5000 = vmatprep.subr.mxu0 0.0
    %5001 = vmatpush1.msra.mxu0 0.0
    %5002 = vmatprep.subr.mxu0 0.0
    %5003 = vmatpush1.msra.mxu0 0.0
    %5004 = vmatprep.subr.mxu0 0.0
    %5005 = vmatpush1.msra.mxu0 0.0
    %5006 = vmatprep.subr.mxu0 0.0
    %5007 = vmatpush1.msra.mxu0 0.0
    %5008 = vmatprep.subr.mxu0 0.0
    %5009 = vmatpush1.msra.mxu0 0.0
    %5010 = vmatprep.subr.mxu0 0.0
    %5011 = vmatpush1.msra.mxu0 0.0
    %5012 = vmatprep.subr.mxu0 0.0
    %5013 = vmatpush1.msra.mxu0 0.0
    %5014 = vmatprep.subr.mxu0 0.0
    %5015 = vmatpush1.msra.mxu0 0.0
    %5016 = vmatprep.subr.mxu0 0.0
    %5017 = vmatpush1.msra.mxu0 0.0
    %5018 = vmatprep.subr.mxu0 0.0
    %5019 = vmatpush1.msra.mxu0 0.0
    %5020 = vmatprep.subr.mxu0 0.0
    %5021 = vmatpush1.msra.mxu0 0.0
    %5022 = vmatprep.subr.mxu0 0.0
    %5023 = vmatpush1.msra.mxu0 0.0
    %5024 = vmatprep.subr.mxu0 0.0
    %5025 = vmatpush1.msra.mxu0 0.0
    %5026 = vmatprep.subr.mxu0 0.0
    %5027 = vmatpush1.msra.mxu0 0.0
    %5028 = vmatprep.subr.mxu0 0.0
    %5029 = vmatpush1.msra.mxu0 0.0
    %5030 = vmatprep.subr.mxu0 0.0
    %5031 = vmatpush1.msra.mxu0 0.0
    %5032 = vmatprep.subr.mxu0 0.0
    %5033 = vmatpush1.msra.mxu0 0.0
    %5034 = vmatprep.subr.mxu0 0.0
    %5035 = vmatpush1.msra.mxu0 0.0
    %5036 = vmatprep.mubr.f32.mxu0 0.0
    %5037 = vmatmul.mubr.f32.gmra.mrb[0].mxu0 %v4401
    %v5038 = vpop.f32.mrb[0].mxu0
    %v5039 = vadd.f32 0.0, %v5038
    %v5040 = vpop.f32.mrb[0].mxu0
    %5041 = vdwg.mxu0
    %5042 = vmatprep.subr.mxu0 0.0
    %5043 = vmatpush1.msra.mxu0 %v2197
    %5044 = vmatprep.subr.mxu0 0.0
    %5045 = vmatpush1.msra.mxu0 0.0
    %5046 = vmatprep.subr.mxu0 0.0
    %5047 = vmatpush1.msra.mxu0 0.0
    %5048 = vmatprep.subr.mxu0 0.0
    %5049 = vmatpush1.msra.mxu0 0.0
    %5050 = vmatprep.subr.mxu0 0.0
    %5051 = vmatpush1.msra.mxu0 0.0
    %5052 = vmatprep.subr.mxu0 0.0
    %5053 = vmatpush1.msra.mxu0 0.0
    %5054 = vmatprep.subr.mxu0 0.0
    %5055 = vmatpush1.msra.mxu0 0.0
    %5056 = vmatprep.subr.mxu0 0.0
    %5057 = vmatpush1.msra.mxu0 0.0
    %5058 = vmatprep.subr.mxu0 0.0
    %5059 = vmatpush1.msra.mxu0 0.0
    %5060 = vmatprep.subr.mxu0 0.0
    %5061 = vmatpush1.msra.mxu0 0.0
    %5062 = vmatprep.subr.mxu0 0.0
    %5063 = vmatpush1.msra.mxu0 0.0
    %5064 = vmatprep.subr.mxu0 0.0
    %5065 = vmatpush1.msra.mxu0 0.0
    %5066 = vmatprep.subr.mxu0 0.0
    %5067 = vmatpush1.msra.mxu0 0.0
    %5068 = vmatprep.subr.mxu0 0.0
    %5069 = vmatpush1.msra.mxu0 0.0
    %5070 = vmatprep.subr.mxu0 0.0
    %5071 = vmatpush1.msra.mxu0 0.0
    %5072 = vmatprep.subr.mxu0 0.0
    %5073 = vmatpush1.msra.mxu0 0.0
    %5074 = vmatprep.subr.mxu0 0.0
    %5075 = vmatpush1.msra.mxu0 0.0
    %5076 = vmatprep.subr.mxu0 0.0
    %5077 = vmatpush1.msra.mxu0 0.0
    %5078 = vmatprep.subr.mxu0 0.0
    %5079 = vmatpush1.msra.mxu0 0.0
    %5080 = vmatprep.subr.mxu0 0.0
    %5081 = vmatpush1.msra.mxu0 0.0
    %5082 = vmatprep.subr.mxu0 0.0
    %5083 = vmatpush1.msra.mxu0 0.0
    %5084 = vmatprep.subr.mxu0 0.0
    %5085 = vmatpush1.msra.mxu0 0.0
    %5086 = vmatprep.subr.mxu0 0.0
    %5087 = vmatpush1.msra.mxu0 0.0
    %5088 = vmatprep.subr.mxu0 0.0
    %5089 = vmatpush1.msra.mxu0 0.0
    %5090 = vmatprep.subr.mxu0 0.0
    %5091 = vmatpush1.msra.mxu0 0.0
    %5092 = vmatprep.subr.mxu0 0.0
    %5093 = vmatpush1.msra.mxu0 0.0
    %5094 = vmatprep.subr.mxu0 0.0
    %5095 = vmatpush1.msra.mxu0 0.0
    %5096 = vmatprep.subr.mxu0 0.0
    %5097 = vmatpush1.msra.mxu0 0.0
    %5098 = vmatprep.subr.mxu0 0.0
    %5099 = vmatpush1.msra.mxu0 0.0
    %5100 = vmatprep.subr.mxu0 0.0
    %5101 = vmatpush1.msra.mxu0 0.0
    %5102 = vmatprep.subr.mxu0 0.0
    %5103 = vmatpush1.msra.mxu0 0.0
    %5104 = vmatprep.subr.mxu0 0.0
    %5105 = vmatpush1.msra.mxu0 0.0
    %5106 = vmatprep.mubr.f32.mxu0 0.0
    %5107 = vmatmul.mubr.f32.gmra.mrb[0].mxu0 %v4474
    %v5108 = vpop.f32.mrb[0].mxu0
    %v5109 = vadd.f32 0.0, %v5108
    %v5110 = vpop.f32.mrb[0].mxu0
    %5111 = vdwg.mxu0
    %5112 = vmatprep.subr.mxu0 0.0
    %5113 = vmatpush1.msra.mxu0 %v2198
    %5114 = vmatprep.subr.mxu0 0.0
    %5115 = vmatpush1.msra.mxu0 0.0
    %5116 = vmatprep.subr.mxu0 0.0
    %5117 = vmatpush1.msra.mxu0 0.0
    %5118 = vmatprep.subr.mxu0 0.0
    %5119 = vmatpush1.msra.mxu0 0.0
    %5120 = vmatprep.subr.mxu0 0.0
    %5121 = vmatpush1.msra.mxu0 0.0
    %5122 = vmatprep.subr.mxu0 0.0
    %5123 = vmatpush1.msra.mxu0 0.0
    %5124 = vmatprep.subr.mxu0 0.0
    %5125 = vmatpush1.msra.mxu0 0.0
    %5126 = vmatprep.subr.mxu0 0.0
    %5127 = vmatpush1.msra.mxu0 0.0
    %5128 = vmatprep.subr.mxu0 0.0
    %5129 = vmatpush1.msra.mxu0 0.0
    %5130 = vmatprep.subr.mxu0 0.0
    %5131 = vmatpush1.msra.mxu0 0.0
    %5132 = vmatprep.subr.mxu0 0.0
    %5133 = vmatpush1.msra.mxu0 0.0
    %5134 = vmatprep.subr.mxu0 0.0
    %5135 = vmatpush1.msra.mxu0 0.0
    %5136 = vmatprep.subr.mxu0 0.0
    %5137 = vmatpush1.msra.mxu0 0.0
    %5138 = vmatprep.subr.mxu0 0.0
    %5139 = vmatpush1.msra.mxu0 0.0
    %5140 = vmatprep.subr.mxu0 0.0
    %5141 = vmatpush1.msra.mxu0 0.0
    %5142 = vmatprep.subr.mxu0 0.0
    %5143 = vmatpush1.msra.mxu0 0.0
    %5144 = vmatprep.subr.mxu0 0.0
    %5145 = vmatpush1.msra.mxu0 0.0
    %5146 = vmatprep.subr.mxu0 0.0
    %5147 = vmatpush1.msra.mxu0 0.0
    %5148 = vmatprep.subr.mxu0 0.0
    %5149 = vmatpush1.msra.mxu0 0.0
    %5150 = vmatprep.subr.mxu0 0.0
    %5151 = vmatpush1.msra.mxu0 0.0
    %5152 = vmatprep.subr.mxu0 0.0
    %5153 = vmatpush1.msra.mxu0 0.0
    %5154 = vmatprep.subr.mxu0 0.0
    %5155 = vmatpush1.msra.mxu0 0.0
    %5156 = vmatprep.subr.mxu0 0.0
    %5157 = vmatpush1.msra.mxu0 0.0
    %5158 = vmatprep.subr.mxu0 0.0
    %5159 = vmatpush1.msra.mxu0 0.0
    %5160 = vmatprep.subr.mxu0 0.0
    %5161 = vmatpush1.msra.mxu0 0.0
    %5162 = vmatprep.subr.mxu0 0.0
    %5163 = vmatpush1.msra.mxu0 0.0
    %5164 = vmatprep.subr.mxu0 0.0
    %5165 = vmatpush1.msra.mxu0 0.0
    %5166 = vmatprep.subr.mxu0 0.0
    %5167 = vmatpush1.msra.mxu0 0.0
    %5168 = vmatprep.subr.mxu0 0.0
    %5169 = vmatpush1.msra.mxu0 0.0
    %5170 = vmatprep.subr.mxu0 0.0
    %5171 = vmatpush1.msra.mxu0 0.0
    %5172 = vmatprep.subr.mxu0 0.0
    %5173 = vmatpush1.msra.mxu0 0.0
    %5174 = vmatprep.subr.mxu0 0.0
    %5175 = vmatpush1.msra.mxu0 0.0
    %5176 = vmatprep.mubr.f32.mxu0 0.0
    %5177 = vmatmul.mubr.f32.gmra.mrb[0].mxu0 %v4547
    %v5178 = vpop.f32.mrb[0].mxu0
    %v5179 = vadd.f32 0.0, %v5178
    %v5180 = vpop.f32.mrb[0].mxu0
    %5181 = vdwg.mxu0
    %5182 = vmatprep.subr.mxu0 0.0
    %5183 = vmatpush1.msra.mxu0 %v2199
    %5184 = vmatprep.subr.mxu0 0.0
    %5185 = vmatpush1.msra.mxu0 0.0
    %5186 = vmatprep.subr.mxu0 0.0
    %5187 = vmatpush1.msra.mxu0 0.0
    %5188 = vmatprep.subr.mxu0 0.0
    %5189 = vmatpush1.msra.mxu0 0.0
    %5190 = vmatprep.subr.mxu0 0.0
    %5191 = vmatpush1.msra.mxu0 0.0
    %5192 = vmatprep.subr.mxu0 0.0
    %5193 = vmatpush1.msra.mxu0 0.0
    %5194 = vmatprep.subr.mxu0 0.0
    %5195 = vmatpush1.msra.mxu0 0.0
    %5196 = vmatprep.subr.mxu0 0.0
    %5197 = vmatpush1.msra.mxu0 0.0
    %5198 = vmatprep.subr.mxu0 0.0
    %5199 = vmatpush1.msra.mxu0 0.0
    %5200 = vmatprep.subr.mxu0 0.0
    %5201 = vmatpush1.msra.mxu0 0.0
    %5202 = vmatprep.subr.mxu0 0.0
    %5203 = vmatpush1.msra.mxu0 0.0
    %5204 = vmatprep.subr.mxu0 0.0
    %5205 = vmatpush1.msra.mxu0 0.0
    %5206 = vmatprep.subr.mxu0 0.0
    %5207 = vmatpush1.msra.mxu0 0.0
    %5208 = vmatprep.subr.mxu0 0.0
    %5209 = vmatpush1.msra.mxu0 0.0
    %5210 = vmatprep.subr.mxu0 0.0
    %5211 = vmatpush1.msra.mxu0 0.0
    %5212 = vmatprep.subr.mxu0 0.0
    %5213 = vmatpush1.msra.mxu0 0.0
    %5214 = vmatprep.subr.mxu0 0.0
    %5215 = vmatpush1.msra.mxu0 0.0
    %5216 = vmatprep.subr.mxu0 0.0
    %5217 = vmatpush1.msra.mxu0 0.0
    %5218 = vmatprep.subr.mxu0 0.0
    %5219 = vmatpush1.msra.mxu0 0.0
    %5220 = vmatprep.subr.mxu0 0.0
    %5221 = vmatpush1.msra.mxu0 0.0
    %5222 = vmatprep.subr.mxu0 0.0
    %5223 = vmatpush1.msra.mxu0 0.0
    %5224 = vmatprep.subr.mxu0 0.0
    %5225 = vmatpush1.msra.mxu0 0.0
    %5226 = vmatprep.subr.mxu0 0.0
    %5227 = vmatpush1.msra.mxu0 0.0
    %5228 = vmatprep.subr.mxu0 0.0
    %5229 = vmatpush1.msra.mxu0 0.0
    %5230 = vmatprep.subr.mxu0 0.0
    %5231 = vmatpush1.msra.mxu0 0.0
    %5232 = vmatprep.subr.mxu0 0.0
    %5233 = vmatpush1.msra.mxu0 0.0
    %5234 = vmatprep.subr.mxu0 0.0
    %5235 = vmatpush1.msra.mxu0 0.0
    %5236 = vmatprep.subr.mxu0 0.0
    %5237 = vmatpush1.msra.mxu0 0.0
    %5238 = vmatprep.subr.mxu0 0.0
    %5239 = vmatpush1.msra.mxu0 0.0
    %5240 = vmatprep.subr.mxu0 0.0
    %5241 = vmatpush1.msra.mxu0 0.0
    %5242 = vmatprep.subr.mxu0 0.0
    %5243 = vmatpush1.msra.mxu0 0.0
    %5244 = vmatprep.subr.mxu0 0.0
    %5245 = vmatpush1.msra.mxu0 0.0
    %5246 = vmatprep.mubr.f32.mxu0 0.0
    %5247 = vmatmul.mubr.f32.gmra.mrb[0].mxu0 %v4620
    %v5248 = vpop.f32.mrb[0].mxu0
    %v5249 = vadd.f32 0.0, %v5248
    %v5250 = vpop.f32.mrb[0].mxu0
    %5251 = vdwg.mxu0
    %v5252 = vcombine.low %v4470, %v4616
    %v5253 = vcombine.high %v4470, %v4616
    %v5255 = vunpack.c.l.s4 1983009808
    %v5256 = vunpack.c.0.s8 %v5255
    %v5257 = vlaneseq
    %v5258 = vshrl.u32 %v5257, 7
    %v5259 = vsub.s32 %v5256, %v5258
    %v5260 = vrot.slane %v5252, %v5259
    %v5262 = vunpack.c.l.s4 1983009808
    %v5263 = vunpack.c.0.s8 %v5262
    %v5264 = vlaneseq
    %v5265 = vshrl.u32 %v5264, 7
    %v5266 = vsub.s32 %v5263, %v5265
    %v5267 = vrot.slane %v5253, %v5266
    %v5268 = vcombine.low %v4543, %v4689
    %v5269 = vcombine.high %v4543, %v4689
    %v5271 = vunpack.c.l.s4 1983009808
    %v5272 = vunpack.c.0.s8 %v5271
    %v5273 = vlaneseq
    %v5274 = vshrl.u32 %v5273, 7
    %v5275 = vsub.s32 %v5272, %v5274
    %v5276 = vrot.slane %v5268, %v5275
    %v5278 = vunpack.c.l.s4 1983009808
    %v5279 = vunpack.c.0.s8 %v5278
    %v5280 = vlaneseq
    %v5281 = vshrl.u32 %v5280, 7
    %v5282 = vsub.s32 %v5279, %v5281
    %v5283 = vrot.slane %v5269, %v5282
    %v5284 = vcombine.low %v4759, %v4899
    %v5285 = vcombine.high %v4759, %v4899
    %v5287 = vunpack.c.l.s4 1983009808
    %v5288 = vunpack.c.0.s8 %v5287
    %v5289 = vlaneseq
    %v5290 = vshrl.u32 %v5289, 7
    %v5291 = vsub.s32 %v5288, %v5290
    %v5292 = vrot.slane %v5284, %v5291
    %v5294 = vunpack.c.l.s4 1983009808
    %v5295 = vunpack.c.0.s8 %v5294
    %v5296 = vlaneseq
    %v5297 = vshrl.u32 %v5296, 7
    %v5298 = vsub.s32 %v5295, %v5297
    %v5299 = vrot.slane %v5285, %v5298
    %v5300 = vcombine.low %v4829, %v4969
    %v5301 = vcombine.high %v4829, %v4969
    %v5303 = vunpack.c.l.s4 1983009808
    %v5304 = vunpack.c.0.s8 %v5303
    %v5305 = vlaneseq
    %v5306 = vshrl.u32 %v5305, 7
    %v5307 = vsub.s32 %v5304, %v5306
    %v5308 = vrot.slane %v5300, %v5307
    %v5310 = vunpack.c.l.s4 1983009808
    %v5311 = vunpack.c.0.s8 %v5310
    %v5312 = vlaneseq
    %v5313 = vshrl.u32 %v5312, 7
    %v5314 = vsub.s32 %v5311, %v5313
    %v5315 = vrot.slane %v5301, %v5314
    %v5316 = vcombine.low %v5260, %v5276
    %v5317 = vcombine.high %v5260, %v5276
    %v5319 = vunpack.c.l.s4 1934713408
    %v5320 = vunpack.c.0.s8 %v5319
    %v5321 = vlaneseq
    %v5322 = vshrl.u32 %v5321, 7
    %v5323 = vsub.s32 %v5320, %v5322
    %v5324 = vrot.slane %v5316, %v5323
    %v5326 = vunpack.c.l.s4 1934713408
    %v5327 = vunpack.c.0.s8 %v5326
    %v5328 = vlaneseq
    %v5329 = vshrl.u32 %v5328, 7
    %v5330 = vsub.s32 %v5327, %v5329
    %v5331 = vrot.slane %v5317, %v5330
    %v5332 = vcombine.low %v5267, %v5283
    %v5333 = vcombine.high %v5267, %v5283
    %v5335 = vunpack.c.l.s4 1934713408
    %v5336 = vunpack.c.0.s8 %v5335
    %v5337 = vlaneseq
    %v5338 = vshrl.u32 %v5337, 7
    %v5339 = vsub.s32 %v5336, %v5338
    %v5340 = vrot.slane %v5332, %v5339
    %v5342 = vunpack.c.l.s4 1934713408
    %v5343 = vunpack.c.0.s8 %v5342
    %v5344 = vlaneseq
    %v5345 = vshrl.u32 %v5344, 7
    %v5346 = vsub.s32 %v5343, %v5345
    %v5347 = vrot.slane %v5333, %v5346
    %v5348 = vcombine.low %v5292, %v5308
    %v5349 = vcombine.high %v5292, %v5308
    %v5351 = vunpack.c.l.s4 1934713408
    %v5352 = vunpack.c.0.s8 %v5351
    %v5353 = vlaneseq
    %v5354 = vshrl.u32 %v5353, 7
    %v5355 = vsub.s32 %v5352, %v5354
    %v5356 = vrot.slane %v5348, %v5355
    %v5358 = vunpack.c.l.s4 1934713408
    %v5359 = vunpack.c.0.s8 %v5358
    %v5360 = vlaneseq
    %v5361 = vshrl.u32 %v5360, 7
    %v5362 = vsub.s32 %v5359, %v5361
    %v5363 = vrot.slane %v5349, %v5362
    %v5364 = vcombine.low %v5299, %v5315
    %v5365 = vcombine.high %v5299, %v5315
    %v5367 = vunpack.c.l.s4 1934713408
    %v5368 = vunpack.c.0.s8 %v5367
    %v5369 = vlaneseq
    %v5370 = vshrl.u32 %v5369, 7
    %v5371 = vsub.s32 %v5368, %v5370
    %v5372 = vrot.slane %v5364, %v5371
    %v5374 = vunpack.c.l.s4 1934713408
    %v5375 = vunpack.c.0.s8 %v5374
    %v5376 = vlaneseq
    %v5377 = vshrl.u32 %v5376, 7
    %v5378 = vsub.s32 %v5375, %v5377
    %v5379 = vrot.slane %v5365, %v5378
    %v5380 = vcombine.low %v5324, %v5356
    %v5381 = vcombine.high %v5324, %v5356
    %v5382 = vcombine.low %v5331, %v5363
    %v5383 = vcombine.high %v5331, %v5363
    %v5384 = vcombine.low %v5340, %v5372
    %v5385 = vcombine.high %v5340, %v5372
    %v5386 = vcombine.low %v5347, %v5379
    %v5387 = vcombine.high %v5347, %v5379
    %v5388 = vcombine.low %v5039, %v5179
    %v5389 = vcombine.high %v5039, %v5179
    %v5391 = vunpack.c.l.s4 1983009808
    %v5392 = vunpack.c.0.s8 %v5391
    %v5393 = vlaneseq
    %v5394 = vshrl.u32 %v5393, 7
    %v5395 = vsub.s32 %v5392, %v5394
    %v5396 = vrot.slane %v5388, %v5395
    %v5398 = vunpack.c.l.s4 1983009808
    %v5399 = vunpack.c.0.s8 %v5398
    %v5400 = vlaneseq
    %v5401 = vshrl.u32 %v5400, 7
    %v5402 = vsub.s32 %v5399, %v5401
    %v5403 = vrot.slane %v5389, %v5402
    %v5404 = vcombine.low %v5109, %v5249
    %v5405 = vcombine.high %v5109, %v5249
    %v5407 = vunpack.c.l.s4 1983009808
    %v5408 = vunpack.c.0.s8 %v5407
    %v5409 = vlaneseq
    %v5410 = vshrl.u32 %v5409, 7
    %v5411 = vsub.s32 %v5408, %v5410
    %v5412 = vrot.slane %v5404, %v5411
    %v5414 = vunpack.c.l.s4 1983009808
    %v5415 = vunpack.c.0.s8 %v5414
    %v5416 = vlaneseq
    %v5417 = vshrl.u32 %v5416, 7
    %v5418 = vsub.s32 %v5415, %v5417
    %v5419 = vrot.slane %v5405, %v5418
    %v5420 = vcombine.low %v5396, %v5412
    %v5421 = vcombine.high %v5396, %v5412
    %v5423 = vunpack.c.l.s4 1934713408
    %v5424 = vunpack.c.0.s8 %v5423
    %v5425 = vlaneseq
    %v5426 = vshrl.u32 %v5425, 7
    %v5427 = vsub.s32 %v5424, %v5426
    %v5428 = vrot.slane %v5420, %v5427
    %v5430 = vunpack.c.l.s4 1934713408
    %v5431 = vunpack.c.0.s8 %v5430
    %v5432 = vlaneseq
    %v5433 = vshrl.u32 %v5432, 7
    %v5434 = vsub.s32 %v5431, %v5433
    %v5435 = vrot.slane %v5421, %v5434
    %v5436 = vcombine.low %v5403, %v5419
    %v5437 = vcombine.high %v5403, %v5419
    %v5439 = vunpack.c.l.s4 1934713408
    %v5440 = vunpack.c.0.s8 %v5439
    %v5441 = vlaneseq
    %v5442 = vshrl.u32 %v5441, 7
    %v5443 = vsub.s32 %v5440, %v5442
    %v5444 = vrot.slane %v5436, %v5443
    %v5446 = vunpack.c.l.s4 1934713408
    %v5447 = vunpack.c.0.s8 %v5446
    %v5448 = vlaneseq
    %v5449 = vshrl.u32 %v5448, 7
    %v5450 = vsub.s32 %v5447, %v5449
    %v5451 = vrot.slane %v5437, %v5450
    %v5452 = vcombine.high %v5428, 0.0
    %v5453 = vcombine.high %v5435, 0.0
    %v5454 = vcombine.high %v5444, 0.0
    %v5455 = vcombine.high %v5451, 0.0
    %v5456 = vcombine.low %v5380, %v5382
    %v5457 = vcombine.high %v5380, %v5382
    %v5459 = vunpack.c.l.s4 1983009808
    %v5460 = vunpack.c.0.s8 %v5459
    %v5461 = vlaneseq
    %v5462 = vshrl.u32 %v5461, 7
    %v5463 = vsub.s32 %v5460, %v5462
    %v5464 = vrot.slane %v5456, %v5463
    %v5466 = vunpack.c.l.s4 1983009808
    %v5467 = vunpack.c.0.s8 %v5466
    %v5468 = vlaneseq
    %v5469 = vshrl.u32 %v5468, 7
    %v5470 = vsub.s32 %v5467, %v5469
    %v5471 = vrot.slane %v5457, %v5470
    %v5472 = vcombine.low %v5381, %v5383
    %v5473 = vcombine.high %v5381, %v5383
    %v5475 = vunpack.c.l.s4 1983009808
    %v5476 = vunpack.c.0.s8 %v5475
    %v5477 = vlaneseq
    %v5478 = vshrl.u32 %v5477, 7
    %v5479 = vsub.s32 %v5476, %v5478
    %v5480 = vrot.slane %v5472, %v5479
    %v5482 = vunpack.c.l.s4 1983009808
    %v5483 = vunpack.c.0.s8 %v5482
    %v5484 = vlaneseq
    %v5485 = vshrl.u32 %v5484, 7
    %v5486 = vsub.s32 %v5483, %v5485
    %v5487 = vrot.slane %v5473, %v5486
    %v5488 = vcombine.low %v5384, %v5386
    %v5489 = vcombine.high %v5384, %v5386
    %v5491 = vunpack.c.l.s4 1983009808
    %v5492 = vunpack.c.0.s8 %v5491
    %v5493 = vlaneseq
    %v5494 = vshrl.u32 %v5493, 7
    %v5495 = vsub.s32 %v5492, %v5494
    %v5496 = vrot.slane %v5488, %v5495
    %v5498 = vunpack.c.l.s4 1983009808
    %v5499 = vunpack.c.0.s8 %v5498
    %v5500 = vlaneseq
    %v5501 = vshrl.u32 %v5500, 7
    %v5502 = vsub.s32 %v5499, %v5501
    %v5503 = vrot.slane %v5489, %v5502
    %v5504 = vcombine.low %v5385, %v5387
    %v5505 = vcombine.high %v5385, %v5387
    %v5507 = vunpack.c.l.s4 1983009808
    %v5508 = vunpack.c.0.s8 %v5507
    %v5509 = vlaneseq
    %v5510 = vshrl.u32 %v5509, 7
    %v5511 = vsub.s32 %v5508, %v5510
    %v5512 = vrot.slane %v5504, %v5511
    %v5514 = vunpack.c.l.s4 1983009808
    %v5515 = vunpack.c.0.s8 %v5514
    %v5516 = vlaneseq
    %v5517 = vshrl.u32 %v5516, 7
    %v5518 = vsub.s32 %v5515, %v5517
    %v5519 = vrot.slane %v5505, %v5518
    %v5520 = vcombine.low %v5464, %v5480
    %v5521 = vcombine.high %v5464, %v5480
    %v5523 = vunpack.c.l.s4 1934713408
    %v5524 = vunpack.c.0.s8 %v5523
    %v5525 = vlaneseq
    %v5526 = vshrl.u32 %v5525, 7
    %v5527 = vsub.s32 %v5524, %v5526
    %v5528 = vrot.slane %v5520, %v5527
    %v5530 = vunpack.c.l.s4 1934713408
    %v5531 = vunpack.c.0.s8 %v5530
    %v5532 = vlaneseq
    %v5533 = vshrl.u32 %v5532, 7
    %v5534 = vsub.s32 %v5531, %v5533
    %v5535 = vrot.slane %v5521, %v5534
    %v5536 = vcombine.low %v5471, %v5487
    %v5537 = vcombine.high %v5471, %v5487
    %v5539 = vunpack.c.l.s4 1934713408
    %v5540 = vunpack.c.0.s8 %v5539
    %v5541 = vlaneseq
    %v5542 = vshrl.u32 %v5541, 7
    %v5543 = vsub.s32 %v5540, %v5542
    %v5544 = vrot.slane %v5536, %v5543
    %v5546 = vunpack.c.l.s4 1934713408
    %v5547 = vunpack.c.0.s8 %v5546
    %v5548 = vlaneseq
    %v5549 = vshrl.u32 %v5548, 7
    %v5550 = vsub.s32 %v5547, %v5549
    %v5551 = vrot.slane %v5537, %v5550
    %v5552 = vcombine.low %v5496, %v5512
    %v5553 = vcombine.high %v5496, %v5512
    %v5555 = vunpack.c.l.s4 1934713408
    %v5556 = vunpack.c.0.s8 %v5555
    %v5557 = vlaneseq
    %v5558 = vshrl.u32 %v5557, 7
    %v5559 = vsub.s32 %v5556, %v5558
    %v5560 = vrot.slane %v5552, %v5559
    %v5562 = vunpack.c.l.s4 1934713408
    %v5563 = vunpack.c.0.s8 %v5562
    %v5564 = vlaneseq
    %v5565 = vshrl.u32 %v5564, 7
    %v5566 = vsub.s32 %v5563, %v5565
    %v5567 = vrot.slane %v5553, %v5566
    %v5568 = vcombine.low %v5503, %v5519
    %v5569 = vcombine.high %v5503, %v5519
    %v5571 = vunpack.c.l.s4 1934713408
    %v5572 = vunpack.c.0.s8 %v5571
    %v5573 = vlaneseq
    %v5574 = vshrl.u32 %v5573, 7
    %v5575 = vsub.s32 %v5572, %v5574
    %v5576 = vrot.slane %v5568, %v5575
    %v5578 = vunpack.c.l.s4 1934713408
    %v5579 = vunpack.c.0.s8 %v5578
    %v5580 = vlaneseq
    %v5581 = vshrl.u32 %v5580, 7
    %v5582 = vsub.s32 %v5579, %v5581
    %v5583 = vrot.slane %v5569, %v5582
    %v5584 = vcombine.low %v5528, %v5560
    %v5585 = vcombine.high %v5528, %v5560
    %v5586 = vcombine.low %v5535, %v5567
    %v5587 = vcombine.high %v5535, %v5567
    %v5588 = vcombine.low %v5544, %v5576
    %v5589 = vcombine.high %v5544, %v5576
    %v5590 = vcombine.low %v5551, %v5583
    %v5591 = vcombine.high %v5551, %v5583
    %v5592 = vcombine.low %v5428, %v5435
    %v5594 = vunpack.c.l.s4 1983009808
    %v5595 = vunpack.c.0.s8 %v5594
    %v5596 = vlaneseq
    %v5597 = vshrl.u32 %v5596, 7
    %v5598 = vsub.s32 %v5595, %v5597
    %v5599 = vrot.slane %v5592, %v5598
    %v5600 = vcombine.low %v5452, %v5453
    %v5602 = vunpack.c.l.s4 1983009808
    %v5603 = vunpack.c.0.s8 %v5602
    %v5604 = vlaneseq
    %v5605 = vshrl.u32 %v5604, 7
    %v5606 = vsub.s32 %v5603, %v5605
    %v5607 = vrot.slane %v5600, %v5606
    %v5608 = vcombine.low %v5444, %v5451
    %v5610 = vunpack.c.l.s4 1983009808
    %v5611 = vunpack.c.0.s8 %v5610
    %v5612 = vlaneseq
    %v5613 = vshrl.u32 %v5612, 7
    %v5614 = vsub.s32 %v5611, %v5613
    %v5615 = vrot.slane %v5608, %v5614
    %v5616 = vcombine.low %v5454, %v5455
    %v5618 = vunpack.c.l.s4 1983009808
    %v5619 = vunpack.c.0.s8 %v5618
    %v5620 = vlaneseq
    %v5621 = vshrl.u32 %v5620, 7
    %v5622 = vsub.s32 %v5619, %v5621
    %v5623 = vrot.slane %v5616, %v5622
    %v5624 = vcombine.low %v5599, %v5607
    %v5625 = vcombine.high %v5599, %v5607
    %v5627 = vunpack.c.l.s4 1934713408
    %v5628 = vunpack.c.0.s8 %v5627
    %v5629 = vlaneseq
    %v5630 = vshrl.u32 %v5629, 7
    %v5631 = vsub.s32 %v5628, %v5630
    %v5632 = vrot.slane %v5624, %v5631
    %v5634 = vunpack.c.l.s4 1934713408
    %v5635 = vunpack.c.0.s8 %v5634
    %v5636 = vlaneseq
    %v5637 = vshrl.u32 %v5636, 7
    %v5638 = vsub.s32 %v5635, %v5637
    %v5639 = vrot.slane %v5625, %v5638
    %v5640 = vcombine.low %v5615, %v5623
    %v5641 = vcombine.high %v5615, %v5623
    %v5643 = vunpack.c.l.s4 1934713408
    %v5644 = vunpack.c.0.s8 %v5643
    %v5645 = vlaneseq
    %v5646 = vshrl.u32 %v5645, 7
    %v5647 = vsub.s32 %v5644, %v5646
    %v5648 = vrot.slane %v5640, %v5647
    %v5650 = vunpack.c.l.s4 1934713408
    %v5651 = vunpack.c.0.s8 %v5650
    %v5652 = vlaneseq
    %v5653 = vshrl.u32 %v5652, 7
    %v5654 = vsub.s32 %v5651, %v5653
    %v5655 = vrot.slane %v5641, %v5654
    %v5656 = vcombine.low %v5632, %v5648
    %v5657 = vcombine.high %v5632, %v5648
    %v5658 = vcombine.low %v5639, %v5655
    %v5659 = vcombine.high %v5639, %v5655
    %5661 = vrot.lane.b32.xlu0 %v5585, 8
    %v5662 = vpop.permute.xlu0 %5661
    %5665 = vrot.lane.b32.xlu0 %v5586, 16
    %v5666 = vpop.permute.xlu0 %5665
    %5669 = vrot.lane.b32.xlu0 %v5587, 24
    %v5670 = vpop.permute.xlu0 %5669
    %5673 = vrot.lane.b32.xlu0 %v5588, 32
    %v5674 = vpop.permute.xlu0 %5673
    %5677 = vrot.lane.b32.xlu0 %v5589, 40
    %v5678 = vpop.permute.xlu0 %5677
    %5681 = vrot.lane.b32.xlu0 %v5590, 48
    %v5682 = vpop.permute.xlu0 %5681
    %5685 = vrot.lane.b32.xlu0 %v5591, 56
    %v5686 = vpop.permute.xlu0 %5685
    %5689 = vrot.lane.b32.xlu0 %v5656, 64
    %v5690 = vpop.permute.xlu0 %5689
    %5693 = vrot.lane.b32.xlu0 %v5657, 72
    %v5694 = vpop.permute.xlu0 %5693
    %5697 = vrot.lane.b32.xlu0 %v5658, 80
    %v5698 = vpop.permute.xlu0 %5697
    %5701 = vrot.lane.b32.xlu0 %v5659, 88
    %v5702 = vpop.permute.xlu0 %5701
    %v5704 = vsel %vm2200, %v5584, %v5662
    %vm5705 = vcmask 130048
    %v5706 = vsel %vm5705, %v5704, %v5666
    %vm5707 = vcmask 195584
    %v5708 = vsel %vm5707, %v5706, %v5670
    %vm5709 = vcmask 261120
    %v5710 = vsel %vm5709, %v5708, %v5674
    %vm5711 = vcmask 326656
    %v5712 = vsel %vm5711, %v5710, %v5678
    %vm5713 = vcmask 392192
    %v5714 = vsel %vm5713, %v5712, %v5682
    %vm5715 = vcmask 457728
    %v5716 = vsel %vm5715, %v5714, %v5686
    %vm5717 = vcmask 523264
    %v5718 = vsel %vm5717, %v5716, %v5690
    %vm5719 = vcmask 588800
    %v5720 = vsel %vm5719, %v5718, %v5694
    %vm5721 = vcmask 654336
    %v5722 = vsel %vm5721, %v5720, %v5698
    %vm5723 = vcmask 719872
    %v5724 = vsel %vm5723, %v5722, %v5702
    %s5725 = sld [smem:[#allocation2]]
    %v5726 = vld [vmem:[%s11] sm:$0xff]
    %v5727 = vld [vmem:[%s11 + $0x8] sm:$0xff]
    %v5728 = vld [vmem:[%s11 + $0x10] sm:$0xff]
    %v5729 = vld [vmem:[%s11 + $0x18] sm:$0xff]
    %v5730 = vld [vmem:[%s11 + $0x20] sm:$0xff]
    %v5731 = vld [vmem:[%s11 + $0x28] sm:$0xff]
    %v5732 = vld [vmem:[%s11 + $0x30] sm:$0xff]
    %v5733 = vld [vmem:[%s11 + $0x38] sm:$0xff]
    %v5734 = vld [vmem:[%s11 + $0x40] sm:$0xff]
    %v5735 = vld [vmem:[%s11 + $0x48] sm:$0xff]
    %v5736 = vld [vmem:[%s11 + $0x50] sm:$0xff]
    %v5737 = vld [vmem:[%s11 + $0x58] sm:$0xff]
    %v5738 = vpack.c.bf16 %v5724, %v5724
    %v5739 = vpack.c.bf16 %v5727, %v5726
    %v5740 = vpack.c.bf16 %v5729, %v5728
    %v5741 = vpack.c.bf16 %v5731, %v5730
    %v5742 = vpack.c.bf16 %v5733, %v5732
    %v5743 = vpack.c.bf16 %v5735, %v5734
    %v5744 = vpack.c.bf16 %v5737, %v5736
    %v5745 = vld [vmem:[%s12] sm:$0x1]
    %v5747 = vlaneseq
    %v5748 = vshrl.u32 %v5747, 7
    %v5749 = vsub.s32 0, %v5748
    %v5750 = vrot.slane %v5745, %v5749
    %v5753 = vsel %vm76, %v5738, 0
    %5755 = vmatprep.subr.bf16.mxu0 0
    %5756 = vmatpush1.bf16.msra.mxu0 %v5739
    %5757 = vmatprep.subr.bf16.mxu0 0
    %5758 = vmatpush1.bf16.msra.mxu0 %v5740
    %5759 = vmatprep.subr.bf16.mxu0 0
    %5760 = vmatpush1.bf16.msra.mxu0 %v5741
    %5761 = vmatprep.subr.bf16.mxu0 0
    %5762 = vmatpush1.bf16.msra.mxu0 %v5742
    %5763 = vmatprep.subr.bf16.mxu0 0
    %5764 = vmatpush1.bf16.msra.mxu0 %v5743
    %5765 = vmatprep.subr.bf16.mxu0 0
    %5766 = vmatpush1.bf16.msra.mxu0 %v5744
    %5767 = vmatprep.subr.bf16.mxu0 0
    %5768 = vmatpush1.bf16.msra.mxu0 0
    %5769 = vmatprep.subr.bf16.mxu0 0
    %5770 = vmatpush1.bf16.msra.mxu0 0
    %5771 = vmatprep.subr.bf16.mxu0 0
    %5772 = vmatpush1.bf16.msra.mxu0 0
    %5773 = vmatprep.subr.bf16.mxu0 0
    %5774 = vmatpush1.bf16.msra.mxu0 0
    %5775 = vmatprep.subr.bf16.mxu0 0
    %5776 = vmatpush1.bf16.msra.mxu0 0
    %5777 = vmatprep.subr.bf16.mxu0 0
    %5778 = vmatpush1.bf16.msra.mxu0 0
    %5779 = vmatprep.subr.bf16.mxu0 0
    %5780 = vmatpush1.bf16.msra.mxu0 0
    %5781 = vmatprep.subr.bf16.mxu0 0
    %5782 = vmatpush1.bf16.msra.mxu0 0
    %5783 = vmatprep.subr.bf16.mxu0 0
    %5784 = vmatpush1.bf16.msra.mxu0 0
    %5785 = vmatprep.subr.bf16.mxu0 0
    %5786 = vmatpush1.bf16.msra.mxu0 0
    %5787 = vmatprep.mubr.bf16.mxu0 0
    %5788 = vmatmul.mubr.bf16.gmra.mrb[0].mxu0 %v5753
    %v5789 = vpop.f32.mrb[0].mxu0
    %v5790 = vadd.f32 %v5750, %v5789
    %v5791 = vpop.f32.mrb[0].mxu0
    %v5792 = vpop.f32.mrb[0].mxu0
    %v5793 = vpop.f32.mrb[0].mxu0
    %5794 = vdwg.mxu0
    %v5795 = vstv %s5725
    %v5796 = vmul.f32 %v5790, %v5795
    %s5797 = ssub.f32 1.0, %s5725
    %v5798 = vstv %s5797
    %v5799 = vmul.f32 %v49, %v5798
    %v5800 = vadd.f32 %v5796, %v5799
    %5801 = vst.msk [vmem:[%s13] sm:$0xff] %vm76, %v5800
    // Predicated region
    $region54: #{hgt_layer_forward.1} parent=1 // pred_check
      _
    $region55: #{hgt_layer_forward.1} parent=1 // pred_check_branch
      %5803 = sbr.rel (0) target = $region57
    $region56: #{hgt_layer_forward.1} parent=1 // pred_region
      _
    $region57: #{hgt_layer_forward.1} parent=1 // pred_fallthru
      _
    // Predicated region
    $region58: #{hgt_layer_forward.1} parent=1 // pred_check
      _
    $region59: #{hgt_layer_forward.1} parent=1 // pred_check_branch
      %5805 = sbr.rel (0) target = $region61
    $region60: #{hgt_layer_forward.1} parent=1 // pred_region
      %s5807 = ssub.s32 16, 16
      %5808 = vsyncadd [#allocation4], %s5807
      %s5810 = sshll.u32 [#allocation3], 4
      %s5811 = int_to_ptr.vmem [resolvable:$true] %s5810
      %5813 = dma.vmem_to_hbm [thread:$0]  %s5811, 16, %s14, [#allocation4]
    $region61: #{hgt_layer_forward.1} parent=1 // pred_fallthru
      _
    // Predicated region
    $region62: #{hgt_layer_forward.1} parent=1 // pred_check
      _
    $region63: #{hgt_layer_forward.1} parent=1 // pred_check_branch
      %5815 = sbr.rel (0) target = $region65
    $region64: #{hgt_layer_forward.1} parent=1 // pred_region
      _
    $region65: #{hgt_layer_forward.1} parent=1 // pred_fallthru
      _
    // Predicated region
    $region66: #{hgt_layer_forward.1} parent=1 // pred_check
      _
    $region67: #{hgt_layer_forward.1} parent=1 // pred_check_branch
      %5817 = sbr.rel (0) target = $region69
    $region68: #{hgt_layer_forward.1} parent=1 // pred_region
      %5818 = dma.done [#allocation4], 16
    $region69: #{hgt_layer_forward.1} parent=1 // pred_fallthru
      _
    %5819 = vsyncpa [#allocation4], 1

</llo_original>
